<compile_context>
chip_gen: v7x
topology: tpu7x:2x2x1
jax: 0.10.0
libtpu: 0.0.40
codegen_flags: <defaults>
</compile_context>

<pallas_src>
import jax
import jax.numpy as jnp
from jax.experimental import pallas as pl
from jax.experimental.pallas import tpu as pltpu

INPUT_SIZE = 64 * 64        # 4096
HIDDEN_SIZE = 500
NUM_CLASSES = 10

HIDDEN_PAD = 512            # 500 -> 512: 4 clean 128-lane groups, sane MXU N/K
CLASSES_PAD = 128           # 10 -> 128: lane-dense (unmasked) output stores
MAX_TILE_B = 512            # batch tile (amortizes per-grid-step overhead)


def _round_up(n, m):
    return ((n + m - 1) // m) * m


def _resident_spec(block_shape, index_map):
    """BlockSpec for a grid-invariant operand: single-buffered if supported."""
    try:
        return pl.BlockSpec(block_shape, index_map, pipeline_mode=pl.Buffered(1))
    except Exception:  # older jax without pipeline_mode -- fall back gracefully
        return pl.BlockSpec(block_shape, index_map)


def ffnet_kernel(x_ref, w1_ref, b1_ref, w2_ref, b2_ref, o_ref):
    # fc1: bf16 operands on the MXU, f32 accumulation.
    # astype is a no-op when x is already streamed in bf16.
    x = x_ref[...].astype(jnp.bfloat16)
    h = jnp.dot(x, w1_ref[...], preferred_element_type=jnp.float32)
    # bias + ReLU in f32 on the VPU (v5e VPU has no bf16).
    h = jnp.maximum(h + b1_ref[...], 0.0)
    # fc2: bf16 operands, f32 accumulation.
    out = jnp.dot(h.astype(jnp.bfloat16), w2_ref[...],
                  preferred_element_type=jnp.float32)
    o_ref[...] = (out + b2_ref[...]).astype(o_ref.dtype)


def prepare_params(w1, b1, w2, b2):
    """One-time pad + bf16 cast. Call ONCE at init, not per forward."""
    w1_p = jnp.pad(w1, ((0, 0), (0, HIDDEN_PAD - HIDDEN_SIZE))).astype(jnp.bfloat16)
    b1_p = jnp.pad(b1, ((0, 0), (0, HIDDEN_PAD - HIDDEN_SIZE))).astype(jnp.float32)
    w2_p = jnp.pad(w2, ((0, HIDDEN_PAD - HIDDEN_SIZE),
                        (0, CLASSES_PAD - NUM_CLASSES))).astype(jnp.bfloat16)
    b2_p = jnp.pad(b2, ((0, 0), (0, CLASSES_PAD - NUM_CLASSES))).astype(jnp.float32)
    return w1_p, b1_p, w2_p, b2_p


@jax.jit
def ffnet_forward(x, w1_p, b1_p, w2_p, b2_p):
    # torch: x = x.reshape(-1, 64*64)
    x2d = x.reshape(-1, INPUT_SIZE)
    B = x2d.shape[0]

    # Batch tile: 512 for throughput, shrunk for tiny batches (B static under jit),
    # so B=2 pads only to 8 rows instead of 512.
    tile_b = min(MAX_TILE_B, _round_up(B, 8))
    B_pad = tile_b * pl.cdiv(B, tile_b)
    if B_pad != B:
        x2d = jnp.pad(x2d, ((0, B_pad - B), (0, 0)))

    grid = (B_pad // tile_b,)

    flops = 2 * B_pad * INPUT_SIZE * HIDDEN_PAD + 2 * B_pad * HIDDEN_PAD * CLASSES_PAD
    bytes_accessed = (B_pad * INPUT_SIZE * x2d.dtype.itemsize   # x stream (bf16 if producer emits bf16)
                      + w1_p.size * 2 + w2_p.size * 2           # resident bf16 weights
                      + b1_p.size * 4 + b2_p.size * 4           # f32 biases
                      + B_pad * CLASSES_PAD * 4)                # f32 output

    out_p = pl.pallas_call(
        ffnet_kernel,
        out_shape=jax.ShapeDtypeStruct((B_pad, CLASSES_PAD), jnp.float32),
        grid=grid,
        in_specs=[
            # x tile: pipelined (double-buffered) across the batch grid.
            pl.BlockSpec((tile_b, INPUT_SIZE), lambda i: (i, 0)),
            # Grid-invariant weights/biases: fetched once, single-buffered.
            _resident_spec((INPUT_SIZE, HIDDEN_PAD), lambda i: (0, 0)),   # w1
            _resident_spec((1, HIDDEN_PAD), lambda i: (0, 0)),            # b1
            _resident_spec((HIDDEN_PAD, CLASSES_PAD), lambda i: (0, 0)),  # w2
            _resident_spec((1, CLASSES_PAD), lambda i: (0, 0)),           # b2
        ],
        out_specs=pl.BlockSpec((tile_b, CLASSES_PAD), lambda i: (i, 0)),
        compiler_params=pltpu.CompilerParams(
            # TODO(synk): on v7x, consider pltpu.CORE_PARALLEL on this axis (or a
            # pl.core_map split) to guarantee the batch grid shards across both TCs.
            dimension_semantics=("parallel",),
            vmem_limit_bytes=48 * 1024 * 1024,
        ),
        cost_estimate=pl.CostEstimate(
            flops=flops, transcendentals=0, bytes_accessed=bytes_accessed),
    )(x2d, w1_p, b1_p, w2_p, b2_p)

    # Slice padded batch rows and padded class lanes back to the real output.
    return out_p[:B, :NUM_CLASSES]


def init_params(key):
    # Deterministic synthetic init mirroring nn.Linear shapes
    # (torch stores W as (out, in); we store the transpose for direct x @ W use).
    k1, k2, k3, k4 = jax.random.split(key, 4)
    bound1 = 1.0 / jnp.sqrt(INPUT_SIZE)
    bound2 = 1.0 / jnp.sqrt(HIDDEN_SIZE)
    w1 = jax.random.uniform(k1, (INPUT_SIZE, HIDDEN_SIZE), jnp.float32, -bound1, bound1)
    b1 = jax.random.uniform(k2, (1, HIDDEN_SIZE), jnp.float32, -bound1, bound1)
    w2 = jax.random.uniform(k3, (HIDDEN_SIZE, NUM_CLASSES), jnp.float32, -bound2, bound2)
    b2 = jax.random.uniform(k4, (1, NUM_CLASSES), jnp.float32, -bound2, bound2)
    return w1, b1, w2, b2


if __name__ == "__main__":
    key = jax.random.PRNGKey(0)
    kx, kp = jax.random.split(key)

    # Small example input: batch=2 images of 64x64, emitted directly in bf16 by
    # the producer (halves the x DMA; no extra wrapper cast pass).
    x = jax.random.normal(kx, (2, 64, 64), jnp.bfloat16)

    w1, b1, w2, b2 = init_params(kp)
    # One-time weight prep (pad + bf16 cast) hoisted out of the forward pass.
    w1_p, b1_p, w2_p, b2_p = prepare_params(w1, b1, w2, b2)
    w1_p, b1_p, w2_p, b2_p = jax.block_until_ready((w1_p, b1_p, w2_p, b2_p))

    out = ffnet_forward(x, w1_p, b1_p, w2_p, b2_p)
    jax.block_until_ready(out)

    # Cross-check against a plain f32 JAX reference (kernel uses bf16 MXU
    # operands + bf16 x with f32 accumulation -> allow bf16-level tolerance;
    # this is an intentional accuracy/throughput tradeoff, not a bug).
    x2d = x.reshape(-1, INPUT_SIZE).astype(jnp.float32)
    ref = jnp.maximum(x2d @ w1 + b1, 0.0) @ w2 + b2
    assert out.shape == (2, NUM_CLASSES)
    assert jnp.allclose(out, ref, atol=5e-2, rtol=5e-2)

    print("KERNEL_OK")
</pallas_src>

<mosaic_0001>
module attributes {stable_mosaic.version = 11 : i64} {
  func.func @ffnet_kernel(%arg0: i32, %arg1: memref<8x4096xbf16, #tpu.memory_space<vmem>>, %arg2: memref<4096x512xbf16, #tpu.memory_space<vmem>>, %arg3: memref<1x512xf32, #tpu.memory_space<vmem>>, %arg4: memref<512x128xbf16, #tpu.memory_space<vmem>>, %arg5: memref<1x128xf32, #tpu.memory_space<vmem>>, %arg6: memref<8x128xf32, #tpu.memory_space<vmem>>) attributes {dimension_semantics = [#tpu.dimension_semantics<parallel>], iteration_bounds = array<i64: 1>, scalar_prefetch = 0 : i64, scratch_operands = 0 : i64, tpu.core_type = #tpu.core_type<tc>, window_params = [{transform_indices = @transform_0, window_bounds = array<i64: 8, 4096>}, {pipeline_mode = #tpu.pipeline_mode<synchronous>, transform_indices = @transform_1, window_bounds = array<i64: 4096, 512>}, {pipeline_mode = #tpu.pipeline_mode<synchronous>, transform_indices = @transform_2, window_bounds = array<i64: 1, 512>}, {pipeline_mode = #tpu.pipeline_mode<synchronous>, transform_indices = @transform_3, window_bounds = array<i64: 512, 128>}, {pipeline_mode = #tpu.pipeline_mode<synchronous>, transform_indices = @transform_4, window_bounds = array<i64: 1, 128>}, {transform_indices = @transform_5, window_bounds = array<i64: 8, 128>}]} {
    %c0 = arith.constant 0 : index
    %c0_0 = arith.constant 0 : index
    %0 = vector.load %arg1[%c0, %c0_0] : memref<8x4096xbf16, #tpu.memory_space<vmem>>, vector<8x4096xbf16>
    %c0_1 = arith.constant 0 : index
    %c0_2 = arith.constant 0 : index
    %1 = vector.load %arg2[%c0_1, %c0_2] : memref<4096x512xbf16, #tpu.memory_space<vmem>>, vector<4096x512xbf16>
    %cst = arith.constant dense<0.000000e+00> : vector<8x512xf32>
    %2 = tpu.matmul %0, %1, %cst {dimension_numbers = #tpu.dot_dimension_numbers<[1], [0], [0], [1], [0, 0, 1, 1], [], []>} : vector<8x4096xbf16>, vector<4096x512xbf16>, vector<8x512xf32> -> vector<8x512xf32>
    %c0_3 = arith.constant 0 : index
    %c0_4 = arith.constant 0 : index
    %3 = vector.load %arg3[%c0_3, %c0_4] : memref<1x512xf32, #tpu.memory_space<vmem>>, vector<1x512xf32>
    %4 = vector.broadcast %3 : vector<1x512xf32> to vector<8x512xf32>
    %5 = arith.addf %2, %4 : vector<8x512xf32>
    %cst_5 = arith.constant 0.000000e+00 : f32
    %6 = vector.broadcast %cst_5 : f32 to vector<8x512xf32>
    %7 = arith.maximumf %5, %6 : vector<8x512xf32>
    %8 = arith.truncf %7 : vector<8x512xf32> to vector<8x512xbf16>
    %c0_6 = arith.constant 0 : index
    %c0_7 = arith.constant 0 : index
    %9 = vector.load %arg4[%c0_6, %c0_7] : memref<512x128xbf16, #tpu.memory_space<vmem>>, vector<512x128xbf16>
    %cst_8 = arith.constant dense<0.000000e+00> : vector<8x128xf32>
    %10 = tpu.matmul %8, %9, %cst_8 {dimension_numbers = #tpu.dot_dimension_numbers<[1], [0], [0], [1], [0, 0, 1, 1], [], []>} : vector<8x512xbf16>, vector<512x128xbf16>, vector<8x128xf32> -> vector<8x128xf32>
    %c0_9 = arith.constant 0 : index
    %c0_10 = arith.constant 0 : index
    %11 = vector.load %arg5[%c0_9, %c0_10] : memref<1x128xf32, #tpu.memory_space<vmem>>, vector<1x128xf32>
    %12 = vector.broadcast %11 : vector<1x128xf32> to vector<8x128xf32>
    %13 = arith.addf %10, %12 : vector<8x128xf32>
    %c0_11 = arith.constant 0 : index
    %c0_12 = arith.constant 0 : index
    %14 = vector.load %arg6[%c0_11, %c0_12] : memref<8x128xf32, #tpu.memory_space<vmem>>, vector<8x128xf32>
    tpu.vector_store %arg6[%c0_11, %c0_12], %13 {strides = array<i32>} : memref<8x128xf32, #tpu.memory_space<vmem>>, vector<8x128xf32>,
    return
  }
  func.func @transform_0(%arg0: i32) -> (i32, i32) {
    %c0_i32 = arith.constant 0 : i32
    %c0_i32_0 = arith.constant 0 : i32
    return %arg0, %c0_i32 : i32, i32
  }
  func.func @transform_1(%arg0: i32) -> (i32, i32) {
    %c0_i32 = arith.constant 0 : i32
    %c0_i32_0 = arith.constant 0 : i32
    %c0_i32_1 = arith.constant 0 : i32
    return %c0_i32, %c0_i32_0 : i32, i32
  }
  func.func @transform_2(%arg0: i32) -> (i32, i32) {
    %c0_i32 = arith.constant 0 : i32
    %c0_i32_0 = arith.constant 0 : i32
    %c0_i32_1 = arith.constant 0 : i32
    return %c0_i32, %c0_i32_0 : i32, i32
  }
  func.func @transform_3(%arg0: i32) -> (i32, i32) {
    %c0_i32 = arith.constant 0 : i32
    %c0_i32_0 = arith.constant 0 : i32
    %c0_i32_1 = arith.constant 0 : i32
    return %c0_i32, %c0_i32_0 : i32, i32
  }
  func.func @transform_4(%arg0: i32) -> (i32, i32) {
    %c0_i32 = arith.constant 0 : i32
    %c0_i32_0 = arith.constant 0 : i32
    %c0_i32_1 = arith.constant 0 : i32
    return %c0_i32, %c0_i32_0 : i32, i32
  }
  func.func @transform_5(%arg0: i32) -> (i32, i32) {
    %c0_i32 = arith.constant 0 : i32
    %c0_i32_0 = arith.constant 0 : i32
    return %arg0, %c0_i32 : i32, i32
  }
}

</mosaic_0001>

<llo_original>
// kernel: ffnet_forward.1
$region0: #{ffnet_forward.1}
  #allocation0 [shape = 'u32[]', space=smem, size = 0x4, offset = 0x4, fixed_abs, tag = 'smem constant byte address 0x4 - core index']
  #allocation1 [shape = 'u32[144,128]{1,0:T(1,128)}', space=vmem, size = 0x12000, scoped, tag = 'internal scratch']
  %s0 = inlined_call_operand.vmem [shape: bf16[8,4096], index: 0, kind: input, shape index: {}]
  %s1 = inlined_call_operand.hbm [shape: bf16[4096,512], index: 1, kind: input, shape index: {}]
  %s2 = inlined_call_operand.hbm [shape: f32[1,512], index: 2, kind: input, shape index: {}]
  %s3 = inlined_call_operand.hbm [shape: bf16[512,128], index: 3, kind: input, shape index: {}]
  %s4 = inlined_call_operand.hbm [shape: f32[1,128], index: 4, kind: input, shape index: {}]
  %s5 = inlined_call_operand.vmem [shape: f32[8,128], index: 5, kind: output, shape index: {}]
  %s6 = sld [smem:[#allocation0]]
  $region46: #{ffnet_forward.1} parent=0
    _
  %s8 = ssub.s32 1, %s6
  %s9 = scalar_select 0, %s8, %s6
  $region1: #{ffnet_forward.1} parent=0
    #allocation2 [shape = 'u8[4194304]{0}', space=vmem, size = 0x400000, scoped, tag = 'input window, operand 1, single buffered']
    #allocation3 [shape = 's32[1]{0}', space=sflag, size = 0x4, scoped, tag = 'scoped memory for ffnet_forward.1']
    #allocation4 [shape = 'u8[2048]{0}', space=vmem, size = 0x800, scoped, tag = 'input window, operand 2, single buffered']
    #allocation5 [shape = 's32[1]{0}', space=sflag, size = 0x4, scoped, tag = 'scoped memory for ffnet_forward.1']
    #allocation6 [shape = 'u8[131072]{0}', space=vmem, size = 0x20000, scoped, tag = 'input window, operand 3, single buffered']
    #allocation7 [shape = 'u8[512]{0}', space=vmem, size = 0x400, scoped, tag = 'input window, operand 4, single buffered']
    #allocation8 [shape = 's32[1]{0}', space=sflag, size = 0x4, scoped, tag = 'scoped memory for ffnet_forward.1']
    %10 = vsyncpa [#allocation3], 0
    %11 = vsyncpa [#allocation5], 0
    %12 = vsyncpa [#allocation8], 0
    // Predicated region
    $region2: #{ffnet_forward.1} parent=1 // pred_check
      _
    $region3: #{ffnet_forward.1} parent=1 // pred_check_branch
      %14 = sbr.rel (0) target = $region5
    $region4: #{ffnet_forward.1} parent=1 // pred_region
      _
    $region5: #{ffnet_forward.1} parent=1 // pred_fallthru
      _
    // Predicated region
    $region6: #{ffnet_forward.1} parent=1 // pred_check
      _
    $region7: #{ffnet_forward.1} parent=1 // pred_check_branch
      %16 = sbr.rel (0) target = $region9
    $region8: #{ffnet_forward.1} parent=1 // pred_region
      %s18 = ssub.s32 131072, 131072
      %19 = vsyncadd [#allocation3], %s18
      %s20 = sshll.u32 [#allocation2], 4
      %s21 = int_to_ptr.vmem [resolvable:$true] %s20
      %26 = dma.hbm_to_vmem [thread:$0]  %s1, 131072, %s21, [#allocation3], 256, 256, 16
    $region9: #{ffnet_forward.1} parent=1 // pred_fallthru
      _
    // Predicated region
    $region10: #{ffnet_forward.1} parent=1 // pred_check
      _
    $region11: #{ffnet_forward.1} parent=1 // pred_check_branch
      %28 = sbr.rel (0) target = $region13
    $region12: #{ffnet_forward.1} parent=1 // pred_region
      %s30 = ssub.s32 64, 64
      %31 = vsyncadd [#allocation5], %s30
      %s33 = sshll.u32 [#allocation4], 4
      %s34 = int_to_ptr.vmem [resolvable:$true] %s33
      %36 = dma.hbm_to_vmem [thread:$0]  %s2, 64, %s34, [#allocation5]
    $region13: #{ffnet_forward.1} parent=1 // pred_fallthru
      _
    // Predicated region
    $region14: #{ffnet_forward.1} parent=1 // pred_check
      _
    $region15: #{ffnet_forward.1} parent=1 // pred_check_branch
      %38 = sbr.rel (0) target = $region17
    $region16: #{ffnet_forward.1} parent=1 // pred_region
      %s40 = ssub.s32 4096, 4096
      %41 = vsyncadd [#allocation5], %s40
      %s42 = sshll.u32 [#allocation6], 4
      %s43 = int_to_ptr.vmem [resolvable:$true] %s42
      %48 = dma.hbm_to_vmem [thread:$0]  %s3, 4096, %s43, [#allocation5], 64, 64, 4
    $region17: #{ffnet_forward.1} parent=1 // pred_fallthru
      _
    // Predicated region
    $region18: #{ffnet_forward.1} parent=1 // pred_check
      _
    $region19: #{ffnet_forward.1} parent=1 // pred_check_branch
      %50 = sbr.rel (0) target = $region21
    $region20: #{ffnet_forward.1} parent=1 // pred_region
      %s52 = ssub.s32 16, 16
      %53 = vsyncadd [#allocation8], %s52
      %s55 = sshll.u32 [#allocation7], 4
      %s56 = int_to_ptr.vmem [resolvable:$true] %s55
      %58 = dma.hbm_to_vmem [thread:$0]  %s4, 16, %s56, [#allocation8]
    $region21: #{ffnet_forward.1} parent=1 // pred_fallthru
      _
    // Predicated region
    $region22: #{ffnet_forward.1} parent=1 // pred_check
      _
    $region23: #{ffnet_forward.1} parent=1 // pred_check_branch
      %60 = sbr.rel (0) target = $region25
    $region24: #{ffnet_forward.1} parent=1 // pred_region
      %61 = dma.done [#allocation3], 131072
    $region25: #{ffnet_forward.1} parent=1 // pred_fallthru
      _
    // Predicated region
    $region26: #{ffnet_forward.1} parent=1 // pred_check
      _
    $region27: #{ffnet_forward.1} parent=1 // pred_check_branch
      %63 = sbr.rel (0) target = $region29
    $region28: #{ffnet_forward.1} parent=1 // pred_region
      %64 = dma.done [#allocation5], 64
    $region29: #{ffnet_forward.1} parent=1 // pred_fallthru
      _
    // Predicated region
    $region30: #{ffnet_forward.1} parent=1 // pred_check
      _
    $region31: #{ffnet_forward.1} parent=1 // pred_check_branch
      %66 = sbr.rel (0) target = $region33
    $region32: #{ffnet_forward.1} parent=1 // pred_region
      %67 = dma.done [#allocation5], 4096
    $region33: #{ffnet_forward.1} parent=1 // pred_fallthru
      _
    // Predicated region
    $region34: #{ffnet_forward.1} parent=1 // pred_check
      _
    $region35: #{ffnet_forward.1} parent=1 // pred_check_branch
      %69 = sbr.rel (0) target = $region37
    $region36: #{ffnet_forward.1} parent=1 // pred_region
      %70 = dma.done [#allocation8], 16
    $region37: #{ffnet_forward.1} parent=1 // pred_fallthru
      _
    %v72 = vld [vmem:[%s0] sm:$0xff]
    %v73 = vld [vmem:[%s0 + $0x8] sm:$0xff]
    %v74 = vld [vmem:[%s0 + $0x10] sm:$0xff]
    %v75 = vld [vmem:[%s0 + $0x18] sm:$0xff]
    %v76 = vld [vmem:[%s0 + $0x20] sm:$0xff]
    %v77 = vld [vmem:[%s0 + $0x28] sm:$0xff]
    %v78 = vld [vmem:[%s0 + $0x30] sm:$0xff]
    %v79 = vld [vmem:[%s0 + $0x38] sm:$0xff]
    %v80 = vld [vmem:[%s0 + $0x40] sm:$0xff]
    %v81 = vld [vmem:[%s0 + $0x48] sm:$0xff]
    %v82 = vld [vmem:[%s0 + $0x50] sm:$0xff]
    %v83 = vld [vmem:[%s0 + $0x58] sm:$0xff]
    %v84 = vld [vmem:[%s0 + $0x60] sm:$0xff]
    %v85 = vld [vmem:[%s0 + $0x68] sm:$0xff]
    %v86 = vld [vmem:[%s0 + $0x70] sm:$0xff]
    %v87 = vld [vmem:[%s0 + $0x78] sm:$0xff]
    %v88 = vld [vmem:[#allocation2] sm:$0xff]
    %v89 = vld [vmem:[#allocation2 + $0x8] sm:$0xff]
    %v90 = vld [vmem:[#allocation2 + $0x10] sm:$0xff]
    %v91 = vld [vmem:[#allocation2 + $0x18] sm:$0xff]
    %v92 = vld [vmem:[#allocation2 + $0x20] sm:$0xff]
    %v93 = vld [vmem:[#allocation2 + $0x28] sm:$0xff]
    %v94 = vld [vmem:[#allocation2 + $0x30] sm:$0xff]
    %v95 = vld [vmem:[#allocation2 + $0x38] sm:$0xff]
    %v96 = vld [vmem:[#allocation2 + $0x40] sm:$0xff]
    %v97 = vld [vmem:[#allocation2 + $0x48] sm:$0xff]
    %v98 = vld [vmem:[#allocation2 + $0x50] sm:$0xff]
    %v99 = vld [vmem:[#allocation2 + $0x58] sm:$0xff]
    %v100 = vld [vmem:[#allocation2 + $0x60] sm:$0xff]
    %v101 = vld [vmem:[#allocation2 + $0x68] sm:$0xff]
    %v102 = vld [vmem:[#allocation2 + $0x70] sm:$0xff]
    %v103 = vld [vmem:[#allocation2 + $0x78] sm:$0xff]
    %v104 = vld [vmem:[#allocation2 + $0x80] sm:$0xff]
    %v105 = vld [vmem:[#allocation2 + $0x88] sm:$0xff]
    %v106 = vld [vmem:[#allocation2 + $0x90] sm:$0xff]
    %v107 = vld [vmem:[#allocation2 + $0x98] sm:$0xff]
    %v108 = vld [vmem:[#allocation2 + $0xa0] sm:$0xff]
    %v109 = vld [vmem:[#allocation2 + $0xa8] sm:$0xff]
    %v110 = vld [vmem:[#allocation2 + $0xb0] sm:$0xff]
    %v111 = vld [vmem:[#allocation2 + $0xb8] sm:$0xff]
    %v112 = vld [vmem:[#allocation2 + $0xc0] sm:$0xff]
    %v113 = vld [vmem:[#allocation2 + $0xc8] sm:$0xff]
    %v114 = vld [vmem:[#allocation2 + $0xd0] sm:$0xff]
    %v115 = vld [vmem:[#allocation2 + $0xd8] sm:$0xff]
    %v116 = vld [vmem:[#allocation2 + $0xe0] sm:$0xff]
    %v117 = vld [vmem:[#allocation2 + $0xe8] sm:$0xff]
    %v118 = vld [vmem:[#allocation2 + $0xf0] sm:$0xff]
    %v119 = vld [vmem:[#allocation2 + $0xf8] sm:$0xff]
    %v120 = vld [vmem:[#allocation2 + $0x100] sm:$0xff]
    %v121 = vld [vmem:[#allocation2 + $0x108] sm:$0xff]
    %v122 = vld [vmem:[#allocation2 + $0x110] sm:$0xff]
    %v123 = vld [vmem:[#allocation2 + $0x118] sm:$0xff]
    %v124 = vld [vmem:[#allocation2 + $0x120] sm:$0xff]
    %v125 = vld [vmem:[#allocation2 + $0x128] sm:$0xff]
    %v126 = vld [vmem:[#allocation2 + $0x130] sm:$0xff]
    %v127 = vld [vmem:[#allocation2 + $0x138] sm:$0xff]
    %v128 = vld [vmem:[#allocation2 + $0x140] sm:$0xff]
    %v129 = vld [vmem:[#allocation2 + $0x148] sm:$0xff]
    %v130 = vld [vmem:[#allocation2 + $0x150] sm:$0xff]
    %v131 = vld [vmem:[#allocation2 + $0x158] sm:$0xff]
    %v132 = vld [vmem:[#allocation2 + $0x160] sm:$0xff]
    %v133 = vld [vmem:[#allocation2 + $0x168] sm:$0xff]
    %v134 = vld [vmem:[#allocation2 + $0x170] sm:$0xff]
    %v135 = vld [vmem:[#allocation2 + $0x178] sm:$0xff]
    %v136 = vld [vmem:[#allocation2 + $0x180] sm:$0xff]
    %v137 = vld [vmem:[#allocation2 + $0x188] sm:$0xff]
    %v138 = vld [vmem:[#allocation2 + $0x190] sm:$0xff]
    %v139 = vld [vmem:[#allocation2 + $0x198] sm:$0xff]
    %v140 = vld [vmem:[#allocation2 + $0x1a0] sm:$0xff]
    %v141 = vld [vmem:[#allocation2 + $0x1a8] sm:$0xff]
    %v142 = vld [vmem:[#allocation2 + $0x1b0] sm:$0xff]
    %v143 = vld [vmem:[#allocation2 + $0x1b8] sm:$0xff]
    %v144 = vld [vmem:[#allocation2 + $0x1c0] sm:$0xff]
    %v145 = vld [vmem:[#allocation2 + $0x1c8] sm:$0xff]
    %v146 = vld [vmem:[#allocation2 + $0x1d0] sm:$0xff]
    %v147 = vld [vmem:[#allocation2 + $0x1d8] sm:$0xff]
    %v148 = vld [vmem:[#allocation2 + $0x1e0] sm:$0xff]
    %v149 = vld [vmem:[#allocation2 + $0x1e8] sm:$0xff]
    %v150 = vld [vmem:[#allocation2 + $0x1f0] sm:$0xff]
    %v151 = vld [vmem:[#allocation2 + $0x1f8] sm:$0xff]
    %v152 = vld [vmem:[#allocation2 + $0x200] sm:$0xff]
    %v153 = vld [vmem:[#allocation2 + $0x208] sm:$0xff]
    %v154 = vld [vmem:[#allocation2 + $0x210] sm:$0xff]
    %v155 = vld [vmem:[#allocation2 + $0x218] sm:$0xff]
    %v156 = vld [vmem:[#allocation2 + $0x220] sm:$0xff]
    %v157 = vld [vmem:[#allocation2 + $0x228] sm:$0xff]
    %v158 = vld [vmem:[#allocation2 + $0x230] sm:$0xff]
    %v159 = vld [vmem:[#allocation2 + $0x238] sm:$0xff]
    %v160 = vld [vmem:[#allocation2 + $0x240] sm:$0xff]
    %v161 = vld [vmem:[#allocation2 + $0x248] sm:$0xff]
    %v162 = vld [vmem:[#allocation2 + $0x250] sm:$0xff]
    %v163 = vld [vmem:[#allocation2 + $0x258] sm:$0xff]
    %v164 = vld [vmem:[#allocation2 + $0x260] sm:$0xff]
    %v165 = vld [vmem:[#allocation2 + $0x268] sm:$0xff]
    %v166 = vld [vmem:[#allocation2 + $0x270] sm:$0xff]
    %v167 = vld [vmem:[#allocation2 + $0x278] sm:$0xff]
    %v168 = vld [vmem:[#allocation2 + $0x280] sm:$0xff]
    %v169 = vld [vmem:[#allocation2 + $0x288] sm:$0xff]
    %v170 = vld [vmem:[#allocation2 + $0x290] sm:$0xff]
    %v171 = vld [vmem:[#allocation2 + $0x298] sm:$0xff]
    %v172 = vld [vmem:[#allocation2 + $0x2a0] sm:$0xff]
    %v173 = vld [vmem:[#allocation2 + $0x2a8] sm:$0xff]
    %v174 = vld [vmem:[#allocation2 + $0x2b0] sm:$0xff]
    %v175 = vld [vmem:[#allocation2 + $0x2b8] sm:$0xff]
    %v176 = vld [vmem:[#allocation2 + $0x2c0] sm:$0xff]
    %v177 = vld [vmem:[#allocation2 + $0x2c8] sm:$0xff]
    %v178 = vld [vmem:[#allocation2 + $0x2d0] sm:$0xff]
    %v179 = vld [vmem:[#allocation2 + $0x2d8] sm:$0xff]
    %v180 = vld [vmem:[#allocation2 + $0x2e0] sm:$0xff]
    %v181 = vld [vmem:[#allocation2 + $0x2e8] sm:$0xff]
    %v182 = vld [vmem:[#allocation2 + $0x2f0] sm:$0xff]
    %v183 = vld [vmem:[#allocation2 + $0x2f8] sm:$0xff]
    %v184 = vld [vmem:[#allocation2 + $0x300] sm:$0xff]
    %v185 = vld [vmem:[#allocation2 + $0x308] sm:$0xff]
    %v186 = vld [vmem:[#allocation2 + $0x310] sm:$0xff]
    %v187 = vld [vmem:[#allocation2 + $0x318] sm:$0xff]
    %v188 = vld [vmem:[#allocation2 + $0x320] sm:$0xff]
    %v189 = vld [vmem:[#allocation2 + $0x328] sm:$0xff]
    %v190 = vld [vmem:[#allocation2 + $0x330] sm:$0xff]
    %v191 = vld [vmem:[#allocation2 + $0x338] sm:$0xff]
    %v192 = vld [vmem:[#allocation2 + $0x340] sm:$0xff]
    %v193 = vld [vmem:[#allocation2 + $0x348] sm:$0xff]
    %v194 = vld [vmem:[#allocation2 + $0x350] sm:$0xff]
    %v195 = vld [vmem:[#allocation2 + $0x358] sm:$0xff]
    %v196 = vld [vmem:[#allocation2 + $0x360] sm:$0xff]
    %v197 = vld [vmem:[#allocation2 + $0x368] sm:$0xff]
    %v198 = vld [vmem:[#allocation2 + $0x370] sm:$0xff]
    %v199 = vld [vmem:[#allocation2 + $0x378] sm:$0xff]
    %v200 = vld [vmem:[#allocation2 + $0x380] sm:$0xff]
    %v201 = vld [vmem:[#allocation2 + $0x388] sm:$0xff]
    %v202 = vld [vmem:[#allocation2 + $0x390] sm:$0xff]
    %v203 = vld [vmem:[#allocation2 + $0x398] sm:$0xff]
    %v204 = vld [vmem:[#allocation2 + $0x3a0] sm:$0xff]
    %v205 = vld [vmem:[#allocation2 + $0x3a8] sm:$0xff]
    %v206 = vld [vmem:[#allocation2 + $0x3b0] sm:$0xff]
    %v207 = vld [vmem:[#allocation2 + $0x3b8] sm:$0xff]
    %v208 = vld [vmem:[#allocation2 + $0x3c0] sm:$0xff]
    %v209 = vld [vmem:[#allocation2 + $0x3c8] sm:$0xff]
    %v210 = vld [vmem:[#allocation2 + $0x3d0] sm:$0xff]
    %v211 = vld [vmem:[#allocation2 + $0x3d8] sm:$0xff]
    %v212 = vld [vmem:[#allocation2 + $0x3e0] sm:$0xff]
    %v213 = vld [vmem:[#allocation2 + $0x3e8] sm:$0xff]
    %v214 = vld [vmem:[#allocation2 + $0x3f0] sm:$0xff]
    %v215 = vld [vmem:[#allocation2 + $0x3f8] sm:$0xff]
    %v216 = vld [vmem:[#allocation2 + $0x400] sm:$0xff]
    %v217 = vld [vmem:[#allocation2 + $0x408] sm:$0xff]
    %v218 = vld [vmem:[#allocation2 + $0x410] sm:$0xff]
    %v219 = vld [vmem:[#allocation2 + $0x418] sm:$0xff]
    %v220 = vld [vmem:[#allocation2 + $0x420] sm:$0xff]
    %v221 = vld [vmem:[#allocation2 + $0x428] sm:$0xff]
    %v222 = vld [vmem:[#allocation2 + $0x430] sm:$0xff]
    %v223 = vld [vmem:[#allocation2 + $0x438] sm:$0xff]
    %v224 = vld [vmem:[#allocation2 + $0x440] sm:$0xff]
    %v225 = vld [vmem:[#allocation2 + $0x448] sm:$0xff]
    %v226 = vld [vmem:[#allocation2 + $0x450] sm:$0xff]
    %v227 = vld [vmem:[#allocation2 + $0x458] sm:$0xff]
    %v228 = vld [vmem:[#allocation2 + $0x460] sm:$0xff]
    %v229 = vld [vmem:[#allocation2 + $0x468] sm:$0xff]
    %v230 = vld [vmem:[#allocation2 + $0x470] sm:$0xff]
    %v231 = vld [vmem:[#allocation2 + $0x478] sm:$0xff]
    %v232 = vld [vmem:[#allocation2 + $0x480] sm:$0xff]
    %v233 = vld [vmem:[#allocation2 + $0x488] sm:$0xff]
    %v234 = vld [vmem:[#allocation2 + $0x490] sm:$0xff]
    %v235 = vld [vmem:[#allocation2 + $0x498] sm:$0xff]
    %v236 = vld [vmem:[#allocation2 + $0x4a0] sm:$0xff]
    %v237 = vld [vmem:[#allocation2 + $0x4a8] sm:$0xff]
    %v238 = vld [vmem:[#allocation2 + $0x4b0] sm:$0xff]
    %v239 = vld [vmem:[#allocation2 + $0x4b8] sm:$0xff]
    %v240 = vld [vmem:[#allocation2 + $0x4c0] sm:$0xff]
    %v241 = vld [vmem:[#allocation2 + $0x4c8] sm:$0xff]
    %v242 = vld [vmem:[#allocation2 + $0x4d0] sm:$0xff]
    %v243 = vld [vmem:[#allocation2 + $0x4d8] sm:$0xff]
    %v244 = vld [vmem:[#allocation2 + $0x4e0] sm:$0xff]
    %v245 = vld [vmem:[#allocation2 + $0x4e8] sm:$0xff]
    %v246 = vld [vmem:[#allocation2 + $0x4f0] sm:$0xff]
    %v247 = vld [vmem:[#allocation2 + $0x4f8] sm:$0xff]
    %v248 = vld [vmem:[#allocation2 + $0x500] sm:$0xff]
    %v249 = vld [vmem:[#allocation2 + $0x508] sm:$0xff]
    %v250 = vld [vmem:[#allocation2 + $0x510] sm:$0xff]
    %v251 = vld [vmem:[#allocation2 + $0x518] sm:$0xff]
    %v252 = vld [vmem:[#allocation2 + $0x520] sm:$0xff]
    %v253 = vld [vmem:[#allocation2 + $0x528] sm:$0xff]
    %v254 = vld [vmem:[#allocation2 + $0x530] sm:$0xff]
    %v255 = vld [vmem:[#allocation2 + $0x538] sm:$0xff]
    %v256 = vld [vmem:[#allocation2 + $0x540] sm:$0xff]
    %v257 = vld [vmem:[#allocation2 + $0x548] sm:$0xff]
    %v258 = vld [vmem:[#allocation2 + $0x550] sm:$0xff]
    %v259 = vld [vmem:[#allocation2 + $0x558] sm:$0xff]
    %v260 = vld [vmem:[#allocation2 + $0x560] sm:$0xff]
    %v261 = vld [vmem:[#allocation2 + $0x568] sm:$0xff]
    %v262 = vld [vmem:[#allocation2 + $0x570] sm:$0xff]
    %v263 = vld [vmem:[#allocation2 + $0x578] sm:$0xff]
    %v264 = vld [vmem:[#allocation2 + $0x580] sm:$0xff]
    %v265 = vld [vmem:[#allocation2 + $0x588] sm:$0xff]
    %v266 = vld [vmem:[#allocation2 + $0x590] sm:$0xff]
    %v267 = vld [vmem:[#allocation2 + $0x598] sm:$0xff]
    %v268 = vld [vmem:[#allocation2 + $0x5a0] sm:$0xff]
    %v269 = vld [vmem:[#allocation2 + $0x5a8] sm:$0xff]
    %v270 = vld [vmem:[#allocation2 + $0x5b0] sm:$0xff]
    %v271 = vld [vmem:[#allocation2 + $0x5b8] sm:$0xff]
    %v272 = vld [vmem:[#allocation2 + $0x5c0] sm:$0xff]
    %v273 = vld [vmem:[#allocation2 + $0x5c8] sm:$0xff]
    %v274 = vld [vmem:[#allocation2 + $0x5d0] sm:$0xff]
    %v275 = vld [vmem:[#allocation2 + $0x5d8] sm:$0xff]
    %v276 = vld [vmem:[#allocation2 + $0x5e0] sm:$0xff]
    %v277 = vld [vmem:[#allocation2 + $0x5e8] sm:$0xff]
    %v278 = vld [vmem:[#allocation2 + $0x5f0] sm:$0xff]
    %v279 = vld [vmem:[#allocation2 + $0x5f8] sm:$0xff]
    %v280 = vld [vmem:[#allocation2 + $0x600] sm:$0xff]
    %v281 = vld [vmem:[#allocation2 + $0x608] sm:$0xff]
    %v282 = vld [vmem:[#allocation2 + $0x610] sm:$0xff]
    %v283 = vld [vmem:[#allocation2 + $0x618] sm:$0xff]
    %v284 = vld [vmem:[#allocation2 + $0x620] sm:$0xff]
    %v285 = vld [vmem:[#allocation2 + $0x628] sm:$0xff]
    %v286 = vld [vmem:[#allocation2 + $0x630] sm:$0xff]
    %v287 = vld [vmem:[#allocation2 + $0x638] sm:$0xff]
    %v288 = vld [vmem:[#allocation2 + $0x640] sm:$0xff]
    %v289 = vld [vmem:[#allocation2 + $0x648] sm:$0xff]
    %v290 = vld [vmem:[#allocation2 + $0x650] sm:$0xff]
    %v291 = vld [vmem:[#allocation2 + $0x658] sm:$0xff]
    %v292 = vld [vmem:[#allocation2 + $0x660] sm:$0xff]
    %v293 = vld [vmem:[#allocation2 + $0x668] sm:$0xff]
    %v294 = vld [vmem:[#allocation2 + $0x670] sm:$0xff]
    %v295 = vld [vmem:[#allocation2 + $0x678] sm:$0xff]
    %v296 = vld [vmem:[#allocation2 + $0x680] sm:$0xff]
    %v297 = vld [vmem:[#allocation2 + $0x688] sm:$0xff]
    %v298 = vld [vmem:[#allocation2 + $0x690] sm:$0xff]
    %v299 = vld [vmem:[#allocation2 + $0x698] sm:$0xff]
    %v300 = vld [vmem:[#allocation2 + $0x6a0] sm:$0xff]
    %v301 = vld [vmem:[#allocation2 + $0x6a8] sm:$0xff]
    %v302 = vld [vmem:[#allocation2 + $0x6b0] sm:$0xff]
    %v303 = vld [vmem:[#allocation2 + $0x6b8] sm:$0xff]
    %v304 = vld [vmem:[#allocation2 + $0x6c0] sm:$0xff]
    %v305 = vld [vmem:[#allocation2 + $0x6c8] sm:$0xff]
    %v306 = vld [vmem:[#allocation2 + $0x6d0] sm:$0xff]
    %v307 = vld [vmem:[#allocation2 + $0x6d8] sm:$0xff]
    %v308 = vld [vmem:[#allocation2 + $0x6e0] sm:$0xff]
    %v309 = vld [vmem:[#allocation2 + $0x6e8] sm:$0xff]
    %v310 = vld [vmem:[#allocation2 + $0x6f0] sm:$0xff]
    %v311 = vld [vmem:[#allocation2 + $0x6f8] sm:$0xff]
    %v312 = vld [vmem:[#allocation2 + $0x700] sm:$0xff]
    %v313 = vld [vmem:[#allocation2 + $0x708] sm:$0xff]
    %v314 = vld [vmem:[#allocation2 + $0x710] sm:$0xff]
    %v315 = vld [vmem:[#allocation2 + $0x718] sm:$0xff]
    %v316 = vld [vmem:[#allocation2 + $0x720] sm:$0xff]
    %v317 = vld [vmem:[#allocation2 + $0x728] sm:$0xff]
    %v318 = vld [vmem:[#allocation2 + $0x730] sm:$0xff]
    %v319 = vld [vmem:[#allocation2 + $0x738] sm:$0xff]
    %v320 = vld [vmem:[#allocation2 + $0x740] sm:$0xff]
    %v321 = vld [vmem:[#allocation2 + $0x748] sm:$0xff]
    %v322 = vld [vmem:[#allocation2 + $0x750] sm:$0xff]
    %v323 = vld [vmem:[#allocation2 + $0x758] sm:$0xff]
    %v324 = vld [vmem:[#allocation2 + $0x760] sm:$0xff]
    %v325 = vld [vmem:[#allocation2 + $0x768] sm:$0xff]
    %v326 = vld [vmem:[#allocation2 + $0x770] sm:$0xff]
    %v327 = vld [vmem:[#allocation2 + $0x778] sm:$0xff]
    %v328 = vld [vmem:[#allocation2 + $0x780] sm:$0xff]
    %v329 = vld [vmem:[#allocation2 + $0x788] sm:$0xff]
    %v330 = vld [vmem:[#allocation2 + $0x790] sm:$0xff]
    %v331 = vld [vmem:[#allocation2 + $0x798] sm:$0xff]
    %v332 = vld [vmem:[#allocation2 + $0x7a0] sm:$0xff]
    %v333 = vld [vmem:[#allocation2 + $0x7a8] sm:$0xff]
    %v334 = vld [vmem:[#allocation2 + $0x7b0] sm:$0xff]
    %v335 = vld [vmem:[#allocation2 + $0x7b8] sm:$0xff]
    %v336 = vld [vmem:[#allocation2 + $0x7c0] sm:$0xff]
    %v337 = vld [vmem:[#allocation2 + $0x7c8] sm:$0xff]
    %v338 = vld [vmem:[#allocation2 + $0x7d0] sm:$0xff]
    %v339 = vld [vmem:[#allocation2 + $0x7d8] sm:$0xff]
    %v340 = vld [vmem:[#allocation2 + $0x7e0] sm:$0xff]
    %v341 = vld [vmem:[#allocation2 + $0x7e8] sm:$0xff]
    %v342 = vld [vmem:[#allocation2 + $0x7f0] sm:$0xff]
    %v343 = vld [vmem:[#allocation2 + $0x7f8] sm:$0xff]
    %v344 = vld [vmem:[#allocation2 + $0x800] sm:$0xff]
    %v345 = vld [vmem:[#allocation2 + $0x808] sm:$0xff]
    %v346 = vld [vmem:[#allocation2 + $0x810] sm:$0xff]
    %v347 = vld [vmem:[#allocation2 + $0x818] sm:$0xff]
    %v348 = vld [vmem:[#allocation2 + $0x820] sm:$0xff]
    %v349 = vld [vmem:[#allocation2 + $0x828] sm:$0xff]
    %v350 = vld [vmem:[#allocation2 + $0x830] sm:$0xff]
    %v351 = vld [vmem:[#allocation2 + $0x838] sm:$0xff]
    %v352 = vld [vmem:[#allocation2 + $0x840] sm:$0xff]
    %v353 = vld [vmem:[#allocation2 + $0x848] sm:$0xff]
    %v354 = vld [vmem:[#allocation2 + $0x850] sm:$0xff]
    %v355 = vld [vmem:[#allocation2 + $0x858] sm:$0xff]
    %v356 = vld [vmem:[#allocation2 + $0x860] sm:$0xff]
    %v357 = vld [vmem:[#allocation2 + $0x868] sm:$0xff]
    %v358 = vld [vmem:[#allocation2 + $0x870] sm:$0xff]
    %v359 = vld [vmem:[#allocation2 + $0x878] sm:$0xff]
    %v360 = vld [vmem:[#allocation2 + $0x880] sm:$0xff]
    %v361 = vld [vmem:[#allocation2 + $0x888] sm:$0xff]
    %v362 = vld [vmem:[#allocation2 + $0x890] sm:$0xff]
    %v363 = vld [vmem:[#allocation2 + $0x898] sm:$0xff]
    %v364 = vld [vmem:[#allocation2 + $0x8a0] sm:$0xff]
    %v365 = vld [vmem:[#allocation2 + $0x8a8] sm:$0xff]
    %v366 = vld [vmem:[#allocation2 + $0x8b0] sm:$0xff]
    %v367 = vld [vmem:[#allocation2 + $0x8b8] sm:$0xff]
    %v368 = vld [vmem:[#allocation2 + $0x8c0] sm:$0xff]
    %v369 = vld [vmem:[#allocation2 + $0x8c8] sm:$0xff]
    %v370 = vld [vmem:[#allocation2 + $0x8d0] sm:$0xff]
    %v371 = vld [vmem:[#allocation2 + $0x8d8] sm:$0xff]
    %v372 = vld [vmem:[#allocation2 + $0x8e0] sm:$0xff]
    %v373 = vld [vmem:[#allocation2 + $0x8e8] sm:$0xff]
    %v374 = vld [vmem:[#allocation2 + $0x8f0] sm:$0xff]
    %v375 = vld [vmem:[#allocation2 + $0x8f8] sm:$0xff]
    %v376 = vld [vmem:[#allocation2 + $0x900] sm:$0xff]
    %v377 = vld [vmem:[#allocation2 + $0x908] sm:$0xff]
    %v378 = vld [vmem:[#allocation2 + $0x910] sm:$0xff]
    %v379 = vld [vmem:[#allocation2 + $0x918] sm:$0xff]
    %v380 = vld [vmem:[#allocation2 + $0x920] sm:$0xff]
    %v381 = vld [vmem:[#allocation2 + $0x928] sm:$0xff]
    %v382 = vld [vmem:[#allocation2 + $0x930] sm:$0xff]
    %v383 = vld [vmem:[#allocation2 + $0x938] sm:$0xff]
    %v384 = vld [vmem:[#allocation2 + $0x940] sm:$0xff]
    %v385 = vld [vmem:[#allocation2 + $0x948] sm:$0xff]
    %v386 = vld [vmem:[#allocation2 + $0x950] sm:$0xff]
    %v387 = vld [vmem:[#allocation2 + $0x958] sm:$0xff]
    %v388 = vld [vmem:[#allocation2 + $0x960] sm:$0xff]
    %v389 = vld [vmem:[#allocation2 + $0x968] sm:$0xff]
    %v390 = vld [vmem:[#allocation2 + $0x970] sm:$0xff]
    %v391 = vld [vmem:[#allocation2 + $0x978] sm:$0xff]
    %v392 = vld [vmem:[#allocation2 + $0x980] sm:$0xff]
    %v393 = vld [vmem:[#allocation2 + $0x988] sm:$0xff]
    %v394 = vld [vmem:[#allocation2 + $0x990] sm:$0xff]
    %v395 = vld [vmem:[#allocation2 + $0x998] sm:$0xff]
    %v396 = vld [vmem:[#allocation2 + $0x9a0] sm:$0xff]
    %v397 = vld [vmem:[#allocation2 + $0x9a8] sm:$0xff]
    %v398 = vld [vmem:[#allocation2 + $0x9b0] sm:$0xff]
    %v399 = vld [vmem:[#allocation2 + $0x9b8] sm:$0xff]
    %v400 = vld [vmem:[#allocation2 + $0x9c0] sm:$0xff]
    %v401 = vld [vmem:[#allocation2 + $0x9c8] sm:$0xff]
    %v402 = vld [vmem:[#allocation2 + $0x9d0] sm:$0xff]
    %v403 = vld [vmem:[#allocation2 + $0x9d8] sm:$0xff]
    %v404 = vld [vmem:[#allocation2 + $0x9e0] sm:$0xff]
    %v405 = vld [vmem:[#allocation2 + $0x9e8] sm:$0xff]
    %v406 = vld [vmem:[#allocation2 + $0x9f0] sm:$0xff]
    %v407 = vld [vmem:[#allocation2 + $0x9f8] sm:$0xff]
    %v408 = vld [vmem:[#allocation2 + $0xa00] sm:$0xff]
    %v409 = vld [vmem:[#allocation2 + $0xa08] sm:$0xff]
    %v410 = vld [vmem:[#allocation2 + $0xa10] sm:$0xff]
    %v411 = vld [vmem:[#allocation2 + $0xa18] sm:$0xff]
    %v412 = vld [vmem:[#allocation2 + $0xa20] sm:$0xff]
    %v413 = vld [vmem:[#allocation2 + $0xa28] sm:$0xff]
    %v414 = vld [vmem:[#allocation2 + $0xa30] sm:$0xff]
    %v415 = vld [vmem:[#allocation2 + $0xa38] sm:$0xff]
    %v416 = vld [vmem:[#allocation2 + $0xa40] sm:$0xff]
    %v417 = vld [vmem:[#allocation2 + $0xa48] sm:$0xff]
    %v418 = vld [vmem:[#allocation2 + $0xa50] sm:$0xff]
    %v419 = vld [vmem:[#allocation2 + $0xa58] sm:$0xff]
    %v420 = vld [vmem:[#allocation2 + $0xa60] sm:$0xff]
    %v421 = vld [vmem:[#allocation2 + $0xa68] sm:$0xff]
    %v422 = vld [vmem:[#allocation2 + $0xa70] sm:$0xff]
    %v423 = vld [vmem:[#allocation2 + $0xa78] sm:$0xff]
    %v424 = vld [vmem:[#allocation2 + $0xa80] sm:$0xff]
    %v425 = vld [vmem:[#allocation2 + $0xa88] sm:$0xff]
    %v426 = vld [vmem:[#allocation2 + $0xa90] sm:$0xff]
    %v427 = vld [vmem:[#allocation2 + $0xa98] sm:$0xff]
    %v428 = vld [vmem:[#allocation2 + $0xaa0] sm:$0xff]
    %v429 = vld [vmem:[#allocation2 + $0xaa8] sm:$0xff]
    %v430 = vld [vmem:[#allocation2 + $0xab0] sm:$0xff]
    %v431 = vld [vmem:[#allocation2 + $0xab8] sm:$0xff]
    %v432 = vld [vmem:[#allocation2 + $0xac0] sm:$0xff]
    %v433 = vld [vmem:[#allocation2 + $0xac8] sm:$0xff]
    %v434 = vld [vmem:[#allocation2 + $0xad0] sm:$0xff]
    %v435 = vld [vmem:[#allocation2 + $0xad8] sm:$0xff]
    %v436 = vld [vmem:[#allocation2 + $0xae0] sm:$0xff]
    %v437 = vld [vmem:[#allocation2 + $0xae8] sm:$0xff]
    %v438 = vld [vmem:[#allocation2 + $0xaf0] sm:$0xff]
    %v439 = vld [vmem:[#allocation2 + $0xaf8] sm:$0xff]
    %v440 = vld [vmem:[#allocation2 + $0xb00] sm:$0xff]
    %v441 = vld [vmem:[#allocation2 + $0xb08] sm:$0xff]
    %v442 = vld [vmem:[#allocation2 + $0xb10] sm:$0xff]
    %v443 = vld [vmem:[#allocation2 + $0xb18] sm:$0xff]
    %v444 = vld [vmem:[#allocation2 + $0xb20] sm:$0xff]
    %v445 = vld [vmem:[#allocation2 + $0xb28] sm:$0xff]
    %v446 = vld [vmem:[#allocation2 + $0xb30] sm:$0xff]
    %v447 = vld [vmem:[#allocation2 + $0xb38] sm:$0xff]
    %v448 = vld [vmem:[#allocation2 + $0xb40] sm:$0xff]
    %v449 = vld [vmem:[#allocation2 + $0xb48] sm:$0xff]
    %v450 = vld [vmem:[#allocation2 + $0xb50] sm:$0xff]
    %v451 = vld [vmem:[#allocation2 + $0xb58] sm:$0xff]
    %v452 = vld [vmem:[#allocation2 + $0xb60] sm:$0xff]
    %v453 = vld [vmem:[#allocation2 + $0xb68] sm:$0xff]
    %v454 = vld [vmem:[#allocation2 + $0xb70] sm:$0xff]
    %v455 = vld [vmem:[#allocation2 + $0xb78] sm:$0xff]
    %v456 = vld [vmem:[#allocation2 + $0xb80] sm:$0xff]
    %v457 = vld [vmem:[#allocation2 + $0xb88] sm:$0xff]
    %v458 = vld [vmem:[#allocation2 + $0xb90] sm:$0xff]
    %v459 = vld [vmem:[#allocation2 + $0xb98] sm:$0xff]
    %v460 = vld [vmem:[#allocation2 + $0xba0] sm:$0xff]
    %v461 = vld [vmem:[#allocation2 + $0xba8] sm:$0xff]
    %v462 = vld [vmem:[#allocation2 + $0xbb0] sm:$0xff]
    %v463 = vld [vmem:[#allocation2 + $0xbb8] sm:$0xff]
    %v464 = vld [vmem:[#allocation2 + $0xbc0] sm:$0xff]
    %v465 = vld [vmem:[#allocation2 + $0xbc8] sm:$0xff]
    %v466 = vld [vmem:[#allocation2 + $0xbd0] sm:$0xff]
    %v467 = vld [vmem:[#allocation2 + $0xbd8] sm:$0xff]
    %v468 = vld [vmem:[#allocation2 + $0xbe0] sm:$0xff]
    %v469 = vld [vmem:[#allocation2 + $0xbe8] sm:$0xff]
    %v470 = vld [vmem:[#allocation2 + $0xbf0] sm:$0xff]
    %v471 = vld [vmem:[#allocation2 + $0xbf8] sm:$0xff]
    %v472 = vld [vmem:[#allocation2 + $0xc00] sm:$0xff]
    %v473 = vld [vmem:[#allocation2 + $0xc08] sm:$0xff]
    %v474 = vld [vmem:[#allocation2 + $0xc10] sm:$0xff]
    %v475 = vld [vmem:[#allocation2 + $0xc18] sm:$0xff]
    %v476 = vld [vmem:[#allocation2 + $0xc20] sm:$0xff]
    %v477 = vld [vmem:[#allocation2 + $0xc28] sm:$0xff]
    %v478 = vld [vmem:[#allocation2 + $0xc30] sm:$0xff]
    %v479 = vld [vmem:[#allocation2 + $0xc38] sm:$0xff]
    %v480 = vld [vmem:[#allocation2 + $0xc40] sm:$0xff]
    %v481 = vld [vmem:[#allocation2 + $0xc48] sm:$0xff]
    %v482 = vld [vmem:[#allocation2 + $0xc50] sm:$0xff]
    %v483 = vld [vmem:[#allocation2 + $0xc58] sm:$0xff]
    %v484 = vld [vmem:[#allocation2 + $0xc60] sm:$0xff]
    %v485 = vld [vmem:[#allocation2 + $0xc68] sm:$0xff]
    %v486 = vld [vmem:[#allocation2 + $0xc70] sm:$0xff]
    %v487 = vld [vmem:[#allocation2 + $0xc78] sm:$0xff]
    %v488 = vld [vmem:[#allocation2 + $0xc80] sm:$0xff]
    %v489 = vld [vmem:[#allocation2 + $0xc88] sm:$0xff]
    %v490 = vld [vmem:[#allocation2 + $0xc90] sm:$0xff]
    %v491 = vld [vmem:[#allocation2 + $0xc98] sm:$0xff]
    %v492 = vld [vmem:[#allocation2 + $0xca0] sm:$0xff]
    %v493 = vld [vmem:[#allocation2 + $0xca8] sm:$0xff]
    %v494 = vld [vmem:[#allocation2 + $0xcb0] sm:$0xff]
    %v495 = vld [vmem:[#allocation2 + $0xcb8] sm:$0xff]
    %v496 = vld [vmem:[#allocation2 + $0xcc0] sm:$0xff]
    %v497 = vld [vmem:[#allocation2 + $0xcc8] sm:$0xff]
    %v498 = vld [vmem:[#allocation2 + $0xcd0] sm:$0xff]
    %v499 = vld [vmem:[#allocation2 + $0xcd8] sm:$0xff]
    %v500 = vld [vmem:[#allocation2 + $0xce0] sm:$0xff]
    %v501 = vld [vmem:[#allocation2 + $0xce8] sm:$0xff]
    %v502 = vld [vmem:[#allocation2 + $0xcf0] sm:$0xff]
    %v503 = vld [vmem:[#allocation2 + $0xcf8] sm:$0xff]
    %v504 = vld [vmem:[#allocation2 + $0xd00] sm:$0xff]
    %v505 = vld [vmem:[#allocation2 + $0xd08] sm:$0xff]
    %v506 = vld [vmem:[#allocation2 + $0xd10] sm:$0xff]
    %v507 = vld [vmem:[#allocation2 + $0xd18] sm:$0xff]
    %v508 = vld [vmem:[#allocation2 + $0xd20] sm:$0xff]
    %v509 = vld [vmem:[#allocation2 + $0xd28] sm:$0xff]
    %v510 = vld [vmem:[#allocation2 + $0xd30] sm:$0xff]
    %v511 = vld [vmem:[#allocation2 + $0xd38] sm:$0xff]
    %v512 = vld [vmem:[#allocation2 + $0xd40] sm:$0xff]
    %v513 = vld [vmem:[#allocation2 + $0xd48] sm:$0xff]
    %v514 = vld [vmem:[#allocation2 + $0xd50] sm:$0xff]
    %v515 = vld [vmem:[#allocation2 + $0xd58] sm:$0xff]
    %v516 = vld [vmem:[#allocation2 + $0xd60] sm:$0xff]
    %v517 = vld [vmem:[#allocation2 + $0xd68] sm:$0xff]
    %v518 = vld [vmem:[#allocation2 + $0xd70] sm:$0xff]
    %v519 = vld [vmem:[#allocation2 + $0xd78] sm:$0xff]
    %v520 = vld [vmem:[#allocation2 + $0xd80] sm:$0xff]
    %v521 = vld [vmem:[#allocation2 + $0xd88] sm:$0xff]
    %v522 = vld [vmem:[#allocation2 + $0xd90] sm:$0xff]
    %v523 = vld [vmem:[#allocation2 + $0xd98] sm:$0xff]
    %v524 = vld [vmem:[#allocation2 + $0xda0] sm:$0xff]
    %v525 = vld [vmem:[#allocation2 + $0xda8] sm:$0xff]
    %v526 = vld [vmem:[#allocation2 + $0xdb0] sm:$0xff]
    %v527 = vld [vmem:[#allocation2 + $0xdb8] sm:$0xff]
    %v528 = vld [vmem:[#allocation2 + $0xdc0] sm:$0xff]
    %v529 = vld [vmem:[#allocation2 + $0xdc8] sm:$0xff]
    %v530 = vld [vmem:[#allocation2 + $0xdd0] sm:$0xff]
    %v531 = vld [vmem:[#allocation2 + $0xdd8] sm:$0xff]
    %v532 = vld [vmem:[#allocation2 + $0xde0] sm:$0xff]
    %v533 = vld [vmem:[#allocation2 + $0xde8] sm:$0xff]
    %v534 = vld [vmem:[#allocation2 + $0xdf0] sm:$0xff]
    %v535 = vld [vmem:[#allocation2 + $0xdf8] sm:$0xff]
    %v536 = vld [vmem:[#allocation2 + $0xe00] sm:$0xff]
    %v537 = vld [vmem:[#allocation2 + $0xe08] sm:$0xff]
    %v538 = vld [vmem:[#allocation2 + $0xe10] sm:$0xff]
    %v539 = vld [vmem:[#allocation2 + $0xe18] sm:$0xff]
    %v540 = vld [vmem:[#allocation2 + $0xe20] sm:$0xff]
    %v541 = vld [vmem:[#allocation2 + $0xe28] sm:$0xff]
    %v542 = vld [vmem:[#allocation2 + $0xe30] sm:$0xff]
    %v543 = vld [vmem:[#allocation2 + $0xe38] sm:$0xff]
    %v544 = vld [vmem:[#allocation2 + $0xe40] sm:$0xff]
    %v545 = vld [vmem:[#allocation2 + $0xe48] sm:$0xff]
    %v546 = vld [vmem:[#allocation2 + $0xe50] sm:$0xff]
    %v547 = vld [vmem:[#allocation2 + $0xe58] sm:$0xff]
    %v548 = vld [vmem:[#allocation2 + $0xe60] sm:$0xff]
    %v549 = vld [vmem:[#allocation2 + $0xe68] sm:$0xff]
    %v550 = vld [vmem:[#allocation2 + $0xe70] sm:$0xff]
    %v551 = vld [vmem:[#allocation2 + $0xe78] sm:$0xff]
    %v552 = vld [vmem:[#allocation2 + $0xe80] sm:$0xff]
    %v553 = vld [vmem:[#allocation2 + $0xe88] sm:$0xff]
    %v554 = vld [vmem:[#allocation2 + $0xe90] sm:$0xff]
    %v555 = vld [vmem:[#allocation2 + $0xe98] sm:$0xff]
    %v556 = vld [vmem:[#allocation2 + $0xea0] sm:$0xff]
    %v557 = vld [vmem:[#allocation2 + $0xea8] sm:$0xff]
    %v558 = vld [vmem:[#allocation2 + $0xeb0] sm:$0xff]
    %v559 = vld [vmem:[#allocation2 + $0xeb8] sm:$0xff]
    %v560 = vld [vmem:[#allocation2 + $0xec0] sm:$0xff]
    %v561 = vld [vmem:[#allocation2 + $0xec8] sm:$0xff]
    %v562 = vld [vmem:[#allocation2 + $0xed0] sm:$0xff]
    %v563 = vld [vmem:[#allocation2 + $0xed8] sm:$0xff]
    %v564 = vld [vmem:[#allocation2 + $0xee0] sm:$0xff]
    %v565 = vld [vmem:[#allocation2 + $0xee8] sm:$0xff]
    %v566 = vld [vmem:[#allocation2 + $0xef0] sm:$0xff]
    %v567 = vld [vmem:[#allocation2 + $0xef8] sm:$0xff]
    %v568 = vld [vmem:[#allocation2 + $0xf00] sm:$0xff]
    %v569 = vld [vmem:[#allocation2 + $0xf08] sm:$0xff]
    %v570 = vld [vmem:[#allocation2 + $0xf10] sm:$0xff]
    %v571 = vld [vmem:[#allocation2 + $0xf18] sm:$0xff]
    %v572 = vld [vmem:[#allocation2 + $0xf20] sm:$0xff]
    %v573 = vld [vmem:[#allocation2 + $0xf28] sm:$0xff]
    %v574 = vld [vmem:[#allocation2 + $0xf30] sm:$0xff]
    %v575 = vld [vmem:[#allocation2 + $0xf38] sm:$0xff]
    %v576 = vld [vmem:[#allocation2 + $0xf40] sm:$0xff]
    %v577 = vld [vmem:[#allocation2 + $0xf48] sm:$0xff]
    %v578 = vld [vmem:[#allocation2 + $0xf50] sm:$0xff]
    %v579 = vld [vmem:[#allocation2 + $0xf58] sm:$0xff]
    %v580 = vld [vmem:[#allocation2 + $0xf60] sm:$0xff]
    %v581 = vld [vmem:[#allocation2 + $0xf68] sm:$0xff]
    %v582 = vld [vmem:[#allocation2 + $0xf70] sm:$0xff]
    %v583 = vld [vmem:[#allocation2 + $0xf78] sm:$0xff]
    %v584 = vld [vmem:[#allocation2 + $0xf80] sm:$0xff]
    %v585 = vld [vmem:[#allocation2 + $0xf88] sm:$0xff]
    %v586 = vld [vmem:[#allocation2 + $0xf90] sm:$0xff]
    %v587 = vld [vmem:[#allocation2 + $0xf98] sm:$0xff]
    %v588 = vld [vmem:[#allocation2 + $0xfa0] sm:$0xff]
    %v589 = vld [vmem:[#allocation2 + $0xfa8] sm:$0xff]
    %v590 = vld [vmem:[#allocation2 + $0xfb0] sm:$0xff]
    %v591 = vld [vmem:[#allocation2 + $0xfb8] sm:$0xff]
    %v592 = vld [vmem:[#allocation2 + $0xfc0] sm:$0xff]
    %v593 = vld [vmem:[#allocation2 + $0xfc8] sm:$0xff]
    %v594 = vld [vmem:[#allocation2 + $0xfd0] sm:$0xff]
    %v595 = vld [vmem:[#allocation2 + $0xfd8] sm:$0xff]
    %v596 = vld [vmem:[#allocation2 + $0xfe0] sm:$0xff]
    %v597 = vld [vmem:[#allocation2 + $0xfe8] sm:$0xff]
    %v598 = vld [vmem:[#allocation2 + $0xff0] sm:$0xff]
    %v599 = vld [vmem:[#allocation2 + $0xff8] sm:$0xff]
    %v600 = vld [vmem:[#allocation2 + $0x1000] sm:$0xff]
    %v601 = vld [vmem:[#allocation2 + $0x1008] sm:$0xff]
    %v602 = vld [vmem:[#allocation2 + $0x1010] sm:$0xff]
    %v603 = vld [vmem:[#allocation2 + $0x1018] sm:$0xff]
    %v604 = vld [vmem:[#allocation2 + $0x1020] sm:$0xff]
    %v605 = vld [vmem:[#allocation2 + $0x1028] sm:$0xff]
    %v606 = vld [vmem:[#allocation2 + $0x1030] sm:$0xff]
    %v607 = vld [vmem:[#allocation2 + $0x1038] sm:$0xff]
    %v608 = vld [vmem:[#allocation2 + $0x1040] sm:$0xff]
    %v609 = vld [vmem:[#allocation2 + $0x1048] sm:$0xff]
    %v610 = vld [vmem:[#allocation2 + $0x1050] sm:$0xff]
    %v611 = vld [vmem:[#allocation2 + $0x1058] sm:$0xff]
    %v612 = vld [vmem:[#allocation2 + $0x1060] sm:$0xff]
    %v613 = vld [vmem:[#allocation2 + $0x1068] sm:$0xff]
    %v614 = vld [vmem:[#allocation2 + $0x1070] sm:$0xff]
    %v615 = vld [vmem:[#allocation2 + $0x1078] sm:$0xff]
    %v616 = vld [vmem:[#allocation2 + $0x1080] sm:$0xff]
    %v617 = vld [vmem:[#allocation2 + $0x1088] sm:$0xff]
    %v618 = vld [vmem:[#allocation2 + $0x1090] sm:$0xff]
    %v619 = vld [vmem:[#allocation2 + $0x1098] sm:$0xff]
    %v620 = vld [vmem:[#allocation2 + $0x10a0] sm:$0xff]
    %v621 = vld [vmem:[#allocation2 + $0x10a8] sm:$0xff]
    %v622 = vld [vmem:[#allocation2 + $0x10b0] sm:$0xff]
    %v623 = vld [vmem:[#allocation2 + $0x10b8] sm:$0xff]
    %v624 = vld [vmem:[#allocation2 + $0x10c0] sm:$0xff]
    %v625 = vld [vmem:[#allocation2 + $0x10c8] sm:$0xff]
    %v626 = vld [vmem:[#allocation2 + $0x10d0] sm:$0xff]
    %v627 = vld [vmem:[#allocation2 + $0x10d8] sm:$0xff]
    %v628 = vld [vmem:[#allocation2 + $0x10e0] sm:$0xff]
    %v629 = vld [vmem:[#allocation2 + $0x10e8] sm:$0xff]
    %v630 = vld [vmem:[#allocation2 + $0x10f0] sm:$0xff]
    %v631 = vld [vmem:[#allocation2 + $0x10f8] sm:$0xff]
    %v632 = vld [vmem:[#allocation2 + $0x1100] sm:$0xff]
    %v633 = vld [vmem:[#allocation2 + $0x1108] sm:$0xff]
    %v634 = vld [vmem:[#allocation2 + $0x1110] sm:$0xff]
    %v635 = vld [vmem:[#allocation2 + $0x1118] sm:$0xff]
    %v636 = vld [vmem:[#allocation2 + $0x1120] sm:$0xff]
    %v637 = vld [vmem:[#allocation2 + $0x1128] sm:$0xff]
    %v638 = vld [vmem:[#allocation2 + $0x1130] sm:$0xff]
    %v639 = vld [vmem:[#allocation2 + $0x1138] sm:$0xff]
    %v640 = vld [vmem:[#allocation2 + $0x1140] sm:$0xff]
    %v641 = vld [vmem:[#allocation2 + $0x1148] sm:$0xff]
    %v642 = vld [vmem:[#allocation2 + $0x1150] sm:$0xff]
    %v643 = vld [vmem:[#allocation2 + $0x1158] sm:$0xff]
    %v644 = vld [vmem:[#allocation2 + $0x1160] sm:$0xff]
    %v645 = vld [vmem:[#allocation2 + $0x1168] sm:$0xff]
    %v646 = vld [vmem:[#allocation2 + $0x1170] sm:$0xff]
    %v647 = vld [vmem:[#allocation2 + $0x1178] sm:$0xff]
    %v648 = vld [vmem:[#allocation2 + $0x1180] sm:$0xff]
    %v649 = vld [vmem:[#allocation2 + $0x1188] sm:$0xff]
    %v650 = vld [vmem:[#allocation2 + $0x1190] sm:$0xff]
    %v651 = vld [vmem:[#allocation2 + $0x1198] sm:$0xff]
    %v652 = vld [vmem:[#allocation2 + $0x11a0] sm:$0xff]
    %v653 = vld [vmem:[#allocation2 + $0x11a8] sm:$0xff]
    %v654 = vld [vmem:[#allocation2 + $0x11b0] sm:$0xff]
    %v655 = vld [vmem:[#allocation2 + $0x11b8] sm:$0xff]
    %v656 = vld [vmem:[#allocation2 + $0x11c0] sm:$0xff]
    %v657 = vld [vmem:[#allocation2 + $0x11c8] sm:$0xff]
    %v658 = vld [vmem:[#allocation2 + $0x11d0] sm:$0xff]
    %v659 = vld [vmem:[#allocation2 + $0x11d8] sm:$0xff]
    %v660 = vld [vmem:[#allocation2 + $0x11e0] sm:$0xff]
    %v661 = vld [vmem:[#allocation2 + $0x11e8] sm:$0xff]
    %v662 = vld [vmem:[#allocation2 + $0x11f0] sm:$0xff]
    %v663 = vld [vmem:[#allocation2 + $0x11f8] sm:$0xff]
    %v664 = vld [vmem:[#allocation2 + $0x1200] sm:$0xff]
    %v665 = vld [vmem:[#allocation2 + $0x1208] sm:$0xff]
    %v666 = vld [vmem:[#allocation2 + $0x1210] sm:$0xff]
    %v667 = vld [vmem:[#allocation2 + $0x1218] sm:$0xff]
    %v668 = vld [vmem:[#allocation2 + $0x1220] sm:$0xff]
    %v669 = vld [vmem:[#allocation2 + $0x1228] sm:$0xff]
    %v670 = vld [vmem:[#allocation2 + $0x1230] sm:$0xff]
    %v671 = vld [vmem:[#allocation2 + $0x1238] sm:$0xff]
    %v672 = vld [vmem:[#allocation2 + $0x1240] sm:$0xff]
    %v673 = vld [vmem:[#allocation2 + $0x1248] sm:$0xff]
    %v674 = vld [vmem:[#allocation2 + $0x1250] sm:$0xff]
    %v675 = vld [vmem:[#allocation2 + $0x1258] sm:$0xff]
    %v676 = vld [vmem:[#allocation2 + $0x1260] sm:$0xff]
    %v677 = vld [vmem:[#allocation2 + $0x1268] sm:$0xff]
    %v678 = vld [vmem:[#allocation2 + $0x1270] sm:$0xff]
    %v679 = vld [vmem:[#allocation2 + $0x1278] sm:$0xff]
    %v680 = vld [vmem:[#allocation2 + $0x1280] sm:$0xff]
    %v681 = vld [vmem:[#allocation2 + $0x1288] sm:$0xff]
    %v682 = vld [vmem:[#allocation2 + $0x1290] sm:$0xff]
    %v683 = vld [vmem:[#allocation2 + $0x1298] sm:$0xff]
    %v684 = vld [vmem:[#allocation2 + $0x12a0] sm:$0xff]
    %v685 = vld [vmem:[#allocation2 + $0x12a8] sm:$0xff]
    %v686 = vld [vmem:[#allocation2 + $0x12b0] sm:$0xff]
    %v687 = vld [vmem:[#allocation2 + $0x12b8] sm:$0xff]
    %v688 = vld [vmem:[#allocation2 + $0x12c0] sm:$0xff]
    %v689 = vld [vmem:[#allocation2 + $0x12c8] sm:$0xff]
    %v690 = vld [vmem:[#allocation2 + $0x12d0] sm:$0xff]
    %v691 = vld [vmem:[#allocation2 + $0x12d8] sm:$0xff]
    %v692 = vld [vmem:[#allocation2 + $0x12e0] sm:$0xff]
    %v693 = vld [vmem:[#allocation2 + $0x12e8] sm:$0xff]
    %v694 = vld [vmem:[#allocation2 + $0x12f0] sm:$0xff]
    %v695 = vld [vmem:[#allocation2 + $0x12f8] sm:$0xff]
    %v696 = vld [vmem:[#allocation2 + $0x1300] sm:$0xff]
    %v697 = vld [vmem:[#allocation2 + $0x1308] sm:$0xff]
    %v698 = vld [vmem:[#allocation2 + $0x1310] sm:$0xff]
    %v699 = vld [vmem:[#allocation2 + $0x1318] sm:$0xff]
    %v700 = vld [vmem:[#allocation2 + $0x1320] sm:$0xff]
    %v701 = vld [vmem:[#allocation2 + $0x1328] sm:$0xff]
    %v702 = vld [vmem:[#allocation2 + $0x1330] sm:$0xff]
    %v703 = vld [vmem:[#allocation2 + $0x1338] sm:$0xff]
    %v704 = vld [vmem:[#allocation2 + $0x1340] sm:$0xff]
    %v705 = vld [vmem:[#allocation2 + $0x1348] sm:$0xff]
    %v706 = vld [vmem:[#allocation2 + $0x1350] sm:$0xff]
    %v707 = vld [vmem:[#allocation2 + $0x1358] sm:$0xff]
    %v708 = vld [vmem:[#allocation2 + $0x1360] sm:$0xff]
    %v709 = vld [vmem:[#allocation2 + $0x1368] sm:$0xff]
    %v710 = vld [vmem:[#allocation2 + $0x1370] sm:$0xff]
    %v711 = vld [vmem:[#allocation2 + $0x1378] sm:$0xff]
    %v712 = vld [vmem:[#allocation2 + $0x1380] sm:$0xff]
    %v713 = vld [vmem:[#allocation2 + $0x1388] sm:$0xff]
    %v714 = vld [vmem:[#allocation2 + $0x1390] sm:$0xff]
    %v715 = vld [vmem:[#allocation2 + $0x1398] sm:$0xff]
    %v716 = vld [vmem:[#allocation2 + $0x13a0] sm:$0xff]
    %v717 = vld [vmem:[#allocation2 + $0x13a8] sm:$0xff]
    %v718 = vld [vmem:[#allocation2 + $0x13b0] sm:$0xff]
    %v719 = vld [vmem:[#allocation2 + $0x13b8] sm:$0xff]
    %v720 = vld [vmem:[#allocation2 + $0x13c0] sm:$0xff]
    %v721 = vld [vmem:[#allocation2 + $0x13c8] sm:$0xff]
    %v722 = vld [vmem:[#allocation2 + $0x13d0] sm:$0xff]
    %v723 = vld [vmem:[#allocation2 + $0x13d8] sm:$0xff]
    %v724 = vld [vmem:[#allocation2 + $0x13e0] sm:$0xff]
    %v725 = vld [vmem:[#allocation2 + $0x13e8] sm:$0xff]
    %v726 = vld [vmem:[#allocation2 + $0x13f0] sm:$0xff]
    %v727 = vld [vmem:[#allocation2 + $0x13f8] sm:$0xff]
    %v728 = vld [vmem:[#allocation2 + $0x1400] sm:$0xff]
    %v729 = vld [vmem:[#allocation2 + $0x1408] sm:$0xff]
    %v730 = vld [vmem:[#allocation2 + $0x1410] sm:$0xff]
    %v731 = vld [vmem:[#allocation2 + $0x1418] sm:$0xff]
    %v732 = vld [vmem:[#allocation2 + $0x1420] sm:$0xff]
    %v733 = vld [vmem:[#allocation2 + $0x1428] sm:$0xff]
    %v734 = vld [vmem:[#allocation2 + $0x1430] sm:$0xff]
    %v735 = vld [vmem:[#allocation2 + $0x1438] sm:$0xff]
    %v736 = vld [vmem:[#allocation2 + $0x1440] sm:$0xff]
    %v737 = vld [vmem:[#allocation2 + $0x1448] sm:$0xff]
    %v738 = vld [vmem:[#allocation2 + $0x1450] sm:$0xff]
    %v739 = vld [vmem:[#allocation2 + $0x1458] sm:$0xff]
    %v740 = vld [vmem:[#allocation2 + $0x1460] sm:$0xff]
    %v741 = vld [vmem:[#allocation2 + $0x1468] sm:$0xff]
    %v742 = vld [vmem:[#allocation2 + $0x1470] sm:$0xff]
    %v743 = vld [vmem:[#allocation2 + $0x1478] sm:$0xff]
    %v744 = vld [vmem:[#allocation2 + $0x1480] sm:$0xff]
    %v745 = vld [vmem:[#allocation2 + $0x1488] sm:$0xff]
    %v746 = vld [vmem:[#allocation2 + $0x1490] sm:$0xff]
    %v747 = vld [vmem:[#allocation2 + $0x1498] sm:$0xff]
    %v748 = vld [vmem:[#allocation2 + $0x14a0] sm:$0xff]
    %v749 = vld [vmem:[#allocation2 + $0x14a8] sm:$0xff]
    %v750 = vld [vmem:[#allocation2 + $0x14b0] sm:$0xff]
    %v751 = vld [vmem:[#allocation2 + $0x14b8] sm:$0xff]
    %v752 = vld [vmem:[#allocation2 + $0x14c0] sm:$0xff]
    %v753 = vld [vmem:[#allocation2 + $0x14c8] sm:$0xff]
    %v754 = vld [vmem:[#allocation2 + $0x14d0] sm:$0xff]
    %v755 = vld [vmem:[#allocation2 + $0x14d8] sm:$0xff]
    %v756 = vld [vmem:[#allocation2 + $0x14e0] sm:$0xff]
    %v757 = vld [vmem:[#allocation2 + $0x14e8] sm:$0xff]
    %v758 = vld [vmem:[#allocation2 + $0x14f0] sm:$0xff]
    %v759 = vld [vmem:[#allocation2 + $0x14f8] sm:$0xff]
    %v760 = vld [vmem:[#allocation2 + $0x1500] sm:$0xff]
    %v761 = vld [vmem:[#allocation2 + $0x1508] sm:$0xff]
    %v762 = vld [vmem:[#allocation2 + $0x1510] sm:$0xff]
    %v763 = vld [vmem:[#allocation2 + $0x1518] sm:$0xff]
    %v764 = vld [vmem:[#allocation2 + $0x1520] sm:$0xff]
    %v765 = vld [vmem:[#allocation2 + $0x1528] sm:$0xff]
    %v766 = vld [vmem:[#allocation2 + $0x1530] sm:$0xff]
    %v767 = vld [vmem:[#allocation2 + $0x1538] sm:$0xff]
    %v768 = vld [vmem:[#allocation2 + $0x1540] sm:$0xff]
    %v769 = vld [vmem:[#allocation2 + $0x1548] sm:$0xff]
    %v770 = vld [vmem:[#allocation2 + $0x1550] sm:$0xff]
    %v771 = vld [vmem:[#allocation2 + $0x1558] sm:$0xff]
    %v772 = vld [vmem:[#allocation2 + $0x1560] sm:$0xff]
    %v773 = vld [vmem:[#allocation2 + $0x1568] sm:$0xff]
    %v774 = vld [vmem:[#allocation2 + $0x1570] sm:$0xff]
    %v775 = vld [vmem:[#allocation2 + $0x1578] sm:$0xff]
    %v776 = vld [vmem:[#allocation2 + $0x1580] sm:$0xff]
    %v777 = vld [vmem:[#allocation2 + $0x1588] sm:$0xff]
    %v778 = vld [vmem:[#allocation2 + $0x1590] sm:$0xff]
    %v779 = vld [vmem:[#allocation2 + $0x1598] sm:$0xff]
    %v780 = vld [vmem:[#allocation2 + $0x15a0] sm:$0xff]
    %v781 = vld [vmem:[#allocation2 + $0x15a8] sm:$0xff]
    %v782 = vld [vmem:[#allocation2 + $0x15b0] sm:$0xff]
    %v783 = vld [vmem:[#allocation2 + $0x15b8] sm:$0xff]
    %v784 = vld [vmem:[#allocation2 + $0x15c0] sm:$0xff]
    %v785 = vld [vmem:[#allocation2 + $0x15c8] sm:$0xff]
    %v786 = vld [vmem:[#allocation2 + $0x15d0] sm:$0xff]
    %v787 = vld [vmem:[#allocation2 + $0x15d8] sm:$0xff]
    %v788 = vld [vmem:[#allocation2 + $0x15e0] sm:$0xff]
    %v789 = vld [vmem:[#allocation2 + $0x15e8] sm:$0xff]
    %v790 = vld [vmem:[#allocation2 + $0x15f0] sm:$0xff]
    %v791 = vld [vmem:[#allocation2 + $0x15f8] sm:$0xff]
    %v792 = vld [vmem:[#allocation2 + $0x1600] sm:$0xff]
    %v793 = vld [vmem:[#allocation2 + $0x1608] sm:$0xff]
    %v794 = vld [vmem:[#allocation2 + $0x1610] sm:$0xff]
    %v795 = vld [vmem:[#allocation2 + $0x1618] sm:$0xff]
    %v796 = vld [vmem:[#allocation2 + $0x1620] sm:$0xff]
    %v797 = vld [vmem:[#allocation2 + $0x1628] sm:$0xff]
    %v798 = vld [vmem:[#allocation2 + $0x1630] sm:$0xff]
    %v799 = vld [vmem:[#allocation2 + $0x1638] sm:$0xff]
    %v800 = vld [vmem:[#allocation2 + $0x1640] sm:$0xff]
    %v801 = vld [vmem:[#allocation2 + $0x1648] sm:$0xff]
    %v802 = vld [vmem:[#allocation2 + $0x1650] sm:$0xff]
    %v803 = vld [vmem:[#allocation2 + $0x1658] sm:$0xff]
    %v804 = vld [vmem:[#allocation2 + $0x1660] sm:$0xff]
    %v805 = vld [vmem:[#allocation2 + $0x1668] sm:$0xff]
    %v806 = vld [vmem:[#allocation2 + $0x1670] sm:$0xff]
    %v807 = vld [vmem:[#allocation2 + $0x1678] sm:$0xff]
    %v808 = vld [vmem:[#allocation2 + $0x1680] sm:$0xff]
    %v809 = vld [vmem:[#allocation2 + $0x1688] sm:$0xff]
    %v810 = vld [vmem:[#allocation2 + $0x1690] sm:$0xff]
    %v811 = vld [vmem:[#allocation2 + $0x1698] sm:$0xff]
    %v812 = vld [vmem:[#allocation2 + $0x16a0] sm:$0xff]
    %v813 = vld [vmem:[#allocation2 + $0x16a8] sm:$0xff]
    %v814 = vld [vmem:[#allocation2 + $0x16b0] sm:$0xff]
    %v815 = vld [vmem:[#allocation2 + $0x16b8] sm:$0xff]
    %v816 = vld [vmem:[#allocation2 + $0x16c0] sm:$0xff]
    %v817 = vld [vmem:[#allocation2 + $0x16c8] sm:$0xff]
    %v818 = vld [vmem:[#allocation2 + $0x16d0] sm:$0xff]
    %v819 = vld [vmem:[#allocation2 + $0x16d8] sm:$0xff]
    %v820 = vld [vmem:[#allocation2 + $0x16e0] sm:$0xff]
    %v821 = vld [vmem:[#allocation2 + $0x16e8] sm:$0xff]
    %v822 = vld [vmem:[#allocation2 + $0x16f0] sm:$0xff]
    %v823 = vld [vmem:[#allocation2 + $0x16f8] sm:$0xff]
    %v824 = vld [vmem:[#allocation2 + $0x1700] sm:$0xff]
    %v825 = vld [vmem:[#allocation2 + $0x1708] sm:$0xff]
    %v826 = vld [vmem:[#allocation2 + $0x1710] sm:$0xff]
    %v827 = vld [vmem:[#allocation2 + $0x1718] sm:$0xff]
    %v828 = vld [vmem:[#allocation2 + $0x1720] sm:$0xff]
    %v829 = vld [vmem:[#allocation2 + $0x1728] sm:$0xff]
    %v830 = vld [vmem:[#allocation2 + $0x1730] sm:$0xff]
    %v831 = vld [vmem:[#allocation2 + $0x1738] sm:$0xff]
    %v832 = vld [vmem:[#allocation2 + $0x1740] sm:$0xff]
    %v833 = vld [vmem:[#allocation2 + $0x1748] sm:$0xff]
    %v834 = vld [vmem:[#allocation2 + $0x1750] sm:$0xff]
    %v835 = vld [vmem:[#allocation2 + $0x1758] sm:$0xff]
    %v836 = vld [vmem:[#allocation2 + $0x1760] sm:$0xff]
    %v837 = vld [vmem:[#allocation2 + $0x1768] sm:$0xff]
    %v838 = vld [vmem:[#allocation2 + $0x1770] sm:$0xff]
    %v839 = vld [vmem:[#allocation2 + $0x1778] sm:$0xff]
    %v840 = vld [vmem:[#allocation2 + $0x1780] sm:$0xff]
    %v841 = vld [vmem:[#allocation2 + $0x1788] sm:$0xff]
    %v842 = vld [vmem:[#allocation2 + $0x1790] sm:$0xff]
    %v843 = vld [vmem:[#allocation2 + $0x1798] sm:$0xff]
    %v844 = vld [vmem:[#allocation2 + $0x17a0] sm:$0xff]
    %v845 = vld [vmem:[#allocation2 + $0x17a8] sm:$0xff]
    %v846 = vld [vmem:[#allocation2 + $0x17b0] sm:$0xff]
    %v847 = vld [vmem:[#allocation2 + $0x17b8] sm:$0xff]
    %v848 = vld [vmem:[#allocation2 + $0x17c0] sm:$0xff]
    %v849 = vld [vmem:[#allocation2 + $0x17c8] sm:$0xff]
    %v850 = vld [vmem:[#allocation2 + $0x17d0] sm:$0xff]
    %v851 = vld [vmem:[#allocation2 + $0x17d8] sm:$0xff]
    %v852 = vld [vmem:[#allocation2 + $0x17e0] sm:$0xff]
    %v853 = vld [vmem:[#allocation2 + $0x17e8] sm:$0xff]
    %v854 = vld [vmem:[#allocation2 + $0x17f0] sm:$0xff]
    %v855 = vld [vmem:[#allocation2 + $0x17f8] sm:$0xff]
    %v856 = vld [vmem:[#allocation2 + $0x1800] sm:$0xff]
    %v857 = vld [vmem:[#allocation2 + $0x1808] sm:$0xff]
    %v858 = vld [vmem:[#allocation2 + $0x1810] sm:$0xff]
    %v859 = vld [vmem:[#allocation2 + $0x1818] sm:$0xff]
    %v860 = vld [vmem:[#allocation2 + $0x1820] sm:$0xff]
    %v861 = vld [vmem:[#allocation2 + $0x1828] sm:$0xff]
    %v862 = vld [vmem:[#allocation2 + $0x1830] sm:$0xff]
    %v863 = vld [vmem:[#allocation2 + $0x1838] sm:$0xff]
    %v864 = vld [vmem:[#allocation2 + $0x1840] sm:$0xff]
    %v865 = vld [vmem:[#allocation2 + $0x1848] sm:$0xff]
    %v866 = vld [vmem:[#allocation2 + $0x1850] sm:$0xff]
    %v867 = vld [vmem:[#allocation2 + $0x1858] sm:$0xff]
    %v868 = vld [vmem:[#allocation2 + $0x1860] sm:$0xff]
    %v869 = vld [vmem:[#allocation2 + $0x1868] sm:$0xff]
    %v870 = vld [vmem:[#allocation2 + $0x1870] sm:$0xff]
    %v871 = vld [vmem:[#allocation2 + $0x1878] sm:$0xff]
    %v872 = vld [vmem:[#allocation2 + $0x1880] sm:$0xff]
    %v873 = vld [vmem:[#allocation2 + $0x1888] sm:$0xff]
    %v874 = vld [vmem:[#allocation2 + $0x1890] sm:$0xff]
    %v875 = vld [vmem:[#allocation2 + $0x1898] sm:$0xff]
    %v876 = vld [vmem:[#allocation2 + $0x18a0] sm:$0xff]
    %v877 = vld [vmem:[#allocation2 + $0x18a8] sm:$0xff]
    %v878 = vld [vmem:[#allocation2 + $0x18b0] sm:$0xff]
    %v879 = vld [vmem:[#allocation2 + $0x18b8] sm:$0xff]
    %v880 = vld [vmem:[#allocation2 + $0x18c0] sm:$0xff]
    %v881 = vld [vmem:[#allocation2 + $0x18c8] sm:$0xff]
    %v882 = vld [vmem:[#allocation2 + $0x18d0] sm:$0xff]
    %v883 = vld [vmem:[#allocation2 + $0x18d8] sm:$0xff]
    %v884 = vld [vmem:[#allocation2 + $0x18e0] sm:$0xff]
    %v885 = vld [vmem:[#allocation2 + $0x18e8] sm:$0xff]
    %v886 = vld [vmem:[#allocation2 + $0x18f0] sm:$0xff]
    %v887 = vld [vmem:[#allocation2 + $0x18f8] sm:$0xff]
    %v888 = vld [vmem:[#allocation2 + $0x1900] sm:$0xff]
    %v889 = vld [vmem:[#allocation2 + $0x1908] sm:$0xff]
    %v890 = vld [vmem:[#allocation2 + $0x1910] sm:$0xff]
    %v891 = vld [vmem:[#allocation2 + $0x1918] sm:$0xff]
    %v892 = vld [vmem:[#allocation2 + $0x1920] sm:$0xff]
    %v893 = vld [vmem:[#allocation2 + $0x1928] sm:$0xff]
    %v894 = vld [vmem:[#allocation2 + $0x1930] sm:$0xff]
    %v895 = vld [vmem:[#allocation2 + $0x1938] sm:$0xff]
    %v896 = vld [vmem:[#allocation2 + $0x1940] sm:$0xff]
    %v897 = vld [vmem:[#allocation2 + $0x1948] sm:$0xff]
    %v898 = vld [vmem:[#allocation2 + $0x1950] sm:$0xff]
    %v899 = vld [vmem:[#allocation2 + $0x1958] sm:$0xff]
    %v900 = vld [vmem:[#allocation2 + $0x1960] sm:$0xff]
    %v901 = vld [vmem:[#allocation2 + $0x1968] sm:$0xff]
    %v902 = vld [vmem:[#allocation2 + $0x1970] sm:$0xff]
    %v903 = vld [vmem:[#allocation2 + $0x1978] sm:$0xff]
    %v904 = vld [vmem:[#allocation2 + $0x1980] sm:$0xff]
    %v905 = vld [vmem:[#allocation2 + $0x1988] sm:$0xff]
    %v906 = vld [vmem:[#allocation2 + $0x1990] sm:$0xff]
    %v907 = vld [vmem:[#allocation2 + $0x1998] sm:$0xff]
    %v908 = vld [vmem:[#allocation2 + $0x19a0] sm:$0xff]
    %v909 = vld [vmem:[#allocation2 + $0x19a8] sm:$0xff]
    %v910 = vld [vmem:[#allocation2 + $0x19b0] sm:$0xff]
    %v911 = vld [vmem:[#allocation2 + $0x19b8] sm:$0xff]
    %v912 = vld [vmem:[#allocation2 + $0x19c0] sm:$0xff]
    %v913 = vld [vmem:[#allocation2 + $0x19c8] sm:$0xff]
    %v914 = vld [vmem:[#allocation2 + $0x19d0] sm:$0xff]
    %v915 = vld [vmem:[#allocation2 + $0x19d8] sm:$0xff]
    %v916 = vld [vmem:[#allocation2 + $0x19e0] sm:$0xff]
    %v917 = vld [vmem:[#allocation2 + $0x19e8] sm:$0xff]
    %v918 = vld [vmem:[#allocation2 + $0x19f0] sm:$0xff]
    %v919 = vld [vmem:[#allocation2 + $0x19f8] sm:$0xff]
    %v920 = vld [vmem:[#allocation2 + $0x1a00] sm:$0xff]
    %v921 = vld [vmem:[#allocation2 + $0x1a08] sm:$0xff]
    %v922 = vld [vmem:[#allocation2 + $0x1a10] sm:$0xff]
    %v923 = vld [vmem:[#allocation2 + $0x1a18] sm:$0xff]
    %v924 = vld [vmem:[#allocation2 + $0x1a20] sm:$0xff]
    %v925 = vld [vmem:[#allocation2 + $0x1a28] sm:$0xff]
    %v926 = vld [vmem:[#allocation2 + $0x1a30] sm:$0xff]
    %v927 = vld [vmem:[#allocation2 + $0x1a38] sm:$0xff]
    %v928 = vld [vmem:[#allocation2 + $0x1a40] sm:$0xff]
    %v929 = vld [vmem:[#allocation2 + $0x1a48] sm:$0xff]
    %v930 = vld [vmem:[#allocation2 + $0x1a50] sm:$0xff]
    %v931 = vld [vmem:[#allocation2 + $0x1a58] sm:$0xff]
    %v932 = vld [vmem:[#allocation2 + $0x1a60] sm:$0xff]
    %v933 = vld [vmem:[#allocation2 + $0x1a68] sm:$0xff]
    %v934 = vld [vmem:[#allocation2 + $0x1a70] sm:$0xff]
    %v935 = vld [vmem:[#allocation2 + $0x1a78] sm:$0xff]
    %v936 = vld [vmem:[#allocation2 + $0x1a80] sm:$0xff]
    %v937 = vld [vmem:[#allocation2 + $0x1a88] sm:$0xff]
    %v938 = vld [vmem:[#allocation2 + $0x1a90] sm:$0xff]
    %v939 = vld [vmem:[#allocation2 + $0x1a98] sm:$0xff]
    %v940 = vld [vmem:[#allocation2 + $0x1aa0] sm:$0xff]
    %v941 = vld [vmem:[#allocation2 + $0x1aa8] sm:$0xff]
    %v942 = vld [vmem:[#allocation2 + $0x1ab0] sm:$0xff]
    %v943 = vld [vmem:[#allocation2 + $0x1ab8] sm:$0xff]
    %v944 = vld [vmem:[#allocation2 + $0x1ac0] sm:$0xff]
    %v945 = vld [vmem:[#allocation2 + $0x1ac8] sm:$0xff]
    %v946 = vld [vmem:[#allocation2 + $0x1ad0] sm:$0xff]
    %v947 = vld [vmem:[#allocation2 + $0x1ad8] sm:$0xff]
    %v948 = vld [vmem:[#allocation2 + $0x1ae0] sm:$0xff]
    %v949 = vld [vmem:[#allocation2 + $0x1ae8] sm:$0xff]
    %v950 = vld [vmem:[#allocation2 + $0x1af0] sm:$0xff]
    %v951 = vld [vmem:[#allocation2 + $0x1af8] sm:$0xff]
    %v952 = vld [vmem:[#allocation2 + $0x1b00] sm:$0xff]
    %v953 = vld [vmem:[#allocation2 + $0x1b08] sm:$0xff]
    %v954 = vld [vmem:[#allocation2 + $0x1b10] sm:$0xff]
    %v955 = vld [vmem:[#allocation2 + $0x1b18] sm:$0xff]
    %v956 = vld [vmem:[#allocation2 + $0x1b20] sm:$0xff]
    %v957 = vld [vmem:[#allocation2 + $0x1b28] sm:$0xff]
    %v958 = vld [vmem:[#allocation2 + $0x1b30] sm:$0xff]
    %v959 = vld [vmem:[#allocation2 + $0x1b38] sm:$0xff]
    %v960 = vld [vmem:[#allocation2 + $0x1b40] sm:$0xff]
    %v961 = vld [vmem:[#allocation2 + $0x1b48] sm:$0xff]
    %v962 = vld [vmem:[#allocation2 + $0x1b50] sm:$0xff]
    %v963 = vld [vmem:[#allocation2 + $0x1b58] sm:$0xff]
    %v964 = vld [vmem:[#allocation2 + $0x1b60] sm:$0xff]
    %v965 = vld [vmem:[#allocation2 + $0x1b68] sm:$0xff]
    %v966 = vld [vmem:[#allocation2 + $0x1b70] sm:$0xff]
    %v967 = vld [vmem:[#allocation2 + $0x1b78] sm:$0xff]
    %v968 = vld [vmem:[#allocation2 + $0x1b80] sm:$0xff]
    %v969 = vld [vmem:[#allocation2 + $0x1b88] sm:$0xff]
    %v970 = vld [vmem:[#allocation2 + $0x1b90] sm:$0xff]
    %v971 = vld [vmem:[#allocation2 + $0x1b98] sm:$0xff]
    %v972 = vld [vmem:[#allocation2 + $0x1ba0] sm:$0xff]
    %v973 = vld [vmem:[#allocation2 + $0x1ba8] sm:$0xff]
    %v974 = vld [vmem:[#allocation2 + $0x1bb0] sm:$0xff]
    %v975 = vld [vmem:[#allocation2 + $0x1bb8] sm:$0xff]
    %v976 = vld [vmem:[#allocation2 + $0x1bc0] sm:$0xff]
    %v977 = vld [vmem:[#allocation2 + $0x1bc8] sm:$0xff]
    %v978 = vld [vmem:[#allocation2 + $0x1bd0] sm:$0xff]
    %v979 = vld [vmem:[#allocation2 + $0x1bd8] sm:$0xff]
    %v980 = vld [vmem:[#allocation2 + $0x1be0] sm:$0xff]
    %v981 = vld [vmem:[#allocation2 + $0x1be8] sm:$0xff]
    %v982 = vld [vmem:[#allocation2 + $0x1bf0] sm:$0xff]
    %v983 = vld [vmem:[#allocation2 + $0x1bf8] sm:$0xff]
    %v984 = vld [vmem:[#allocation2 + $0x1c00] sm:$0xff]
    %v985 = vld [vmem:[#allocation2 + $0x1c08] sm:$0xff]
    %v986 = vld [vmem:[#allocation2 + $0x1c10] sm:$0xff]
    %v987 = vld [vmem:[#allocation2 + $0x1c18] sm:$0xff]
    %v988 = vld [vmem:[#allocation2 + $0x1c20] sm:$0xff]
    %v989 = vld [vmem:[#allocation2 + $0x1c28] sm:$0xff]
    %v990 = vld [vmem:[#allocation2 + $0x1c30] sm:$0xff]
    %v991 = vld [vmem:[#allocation2 + $0x1c38] sm:$0xff]
    %v992 = vld [vmem:[#allocation2 + $0x1c40] sm:$0xff]
    %v993 = vld [vmem:[#allocation2 + $0x1c48] sm:$0xff]
    %v994 = vld [vmem:[#allocation2 + $0x1c50] sm:$0xff]
    %v995 = vld [vmem:[#allocation2 + $0x1c58] sm:$0xff]
    %v996 = vld [vmem:[#allocation2 + $0x1c60] sm:$0xff]
    %v997 = vld [vmem:[#allocation2 + $0x1c68] sm:$0xff]
    %v998 = vld [vmem:[#allocation2 + $0x1c70] sm:$0xff]
    %v999 = vld [vmem:[#allocation2 + $0x1c78] sm:$0xff]
    %v1000 = vld [vmem:[#allocation2 + $0x1c80] sm:$0xff]
    %v1001 = vld [vmem:[#allocation2 + $0x1c88] sm:$0xff]
    %v1002 = vld [vmem:[#allocation2 + $0x1c90] sm:$0xff]
    %v1003 = vld [vmem:[#allocation2 + $0x1c98] sm:$0xff]
    %v1004 = vld [vmem:[#allocation2 + $0x1ca0] sm:$0xff]
    %v1005 = vld [vmem:[#allocation2 + $0x1ca8] sm:$0xff]
    %v1006 = vld [vmem:[#allocation2 + $0x1cb0] sm:$0xff]
    %v1007 = vld [vmem:[#allocation2 + $0x1cb8] sm:$0xff]
    %v1008 = vld [vmem:[#allocation2 + $0x1cc0] sm:$0xff]
    %v1009 = vld [vmem:[#allocation2 + $0x1cc8] sm:$0xff]
    %v1010 = vld [vmem:[#allocation2 + $0x1cd0] sm:$0xff]
    %v1011 = vld [vmem:[#allocation2 + $0x1cd8] sm:$0xff]
    %v1012 = vld [vmem:[#allocation2 + $0x1ce0] sm:$0xff]
    %v1013 = vld [vmem:[#allocation2 + $0x1ce8] sm:$0xff]
    %v1014 = vld [vmem:[#allocation2 + $0x1cf0] sm:$0xff]
    %v1015 = vld [vmem:[#allocation2 + $0x1cf8] sm:$0xff]
    %v1016 = vld [vmem:[#allocation2 + $0x1d00] sm:$0xff]
    %v1017 = vld [vmem:[#allocation2 + $0x1d08] sm:$0xff]
    %v1018 = vld [vmem:[#allocation2 + $0x1d10] sm:$0xff]
    %v1019 = vld [vmem:[#allocation2 + $0x1d18] sm:$0xff]
    %v1020 = vld [vmem:[#allocation2 + $0x1d20] sm:$0xff]
    %v1021 = vld [vmem:[#allocation2 + $0x1d28] sm:$0xff]
    %v1022 = vld [vmem:[#allocation2 + $0x1d30] sm:$0xff]
    %v1023 = vld [vmem:[#allocation2 + $0x1d38] sm:$0xff]
    %v1024 = vld [vmem:[#allocation2 + $0x1d40] sm:$0xff]
    %v1025 = vld [vmem:[#allocation2 + $0x1d48] sm:$0xff]
    %v1026 = vld [vmem:[#allocation2 + $0x1d50] sm:$0xff]
    %v1027 = vld [vmem:[#allocation2 + $0x1d58] sm:$0xff]
    %v1028 = vld [vmem:[#allocation2 + $0x1d60] sm:$0xff]
    %v1029 = vld [vmem:[#allocation2 + $0x1d68] sm:$0xff]
    %v1030 = vld [vmem:[#allocation2 + $0x1d70] sm:$0xff]
    %v1031 = vld [vmem:[#allocation2 + $0x1d78] sm:$0xff]
    %v1032 = vld [vmem:[#allocation2 + $0x1d80] sm:$0xff]
    %v1033 = vld [vmem:[#allocation2 + $0x1d88] sm:$0xff]
    %v1034 = vld [vmem:[#allocation2 + $0x1d90] sm:$0xff]
    %v1035 = vld [vmem:[#allocation2 + $0x1d98] sm:$0xff]
    %v1036 = vld [vmem:[#allocation2 + $0x1da0] sm:$0xff]
    %v1037 = vld [vmem:[#allocation2 + $0x1da8] sm:$0xff]
    %v1038 = vld [vmem:[#allocation2 + $0x1db0] sm:$0xff]
    %v1039 = vld [vmem:[#allocation2 + $0x1db8] sm:$0xff]
    %v1040 = vld [vmem:[#allocation2 + $0x1dc0] sm:$0xff]
    %v1041 = vld [vmem:[#allocation2 + $0x1dc8] sm:$0xff]
    %v1042 = vld [vmem:[#allocation2 + $0x1dd0] sm:$0xff]
    %v1043 = vld [vmem:[#allocation2 + $0x1dd8] sm:$0xff]
    %v1044 = vld [vmem:[#allocation2 + $0x1de0] sm:$0xff]
    %v1045 = vld [vmem:[#allocation2 + $0x1de8] sm:$0xff]
    %v1046 = vld [vmem:[#allocation2 + $0x1df0] sm:$0xff]
    %v1047 = vld [vmem:[#allocation2 + $0x1df8] sm:$0xff]
    %v1048 = vld [vmem:[#allocation2 + $0x1e00] sm:$0xff]
    %v1049 = vld [vmem:[#allocation2 + $0x1e08] sm:$0xff]
    %v1050 = vld [vmem:[#allocation2 + $0x1e10] sm:$0xff]
    %v1051 = vld [vmem:[#allocation2 + $0x1e18] sm:$0xff]
    %v1052 = vld [vmem:[#allocation2 + $0x1e20] sm:$0xff]
    %v1053 = vld [vmem:[#allocation2 + $0x1e28] sm:$0xff]
    %v1054 = vld [vmem:[#allocation2 + $0x1e30] sm:$0xff]
    %v1055 = vld [vmem:[#allocation2 + $0x1e38] sm:$0xff]
    %v1056 = vld [vmem:[#allocation2 + $0x1e40] sm:$0xff]
    %v1057 = vld [vmem:[#allocation2 + $0x1e48] sm:$0xff]
    %v1058 = vld [vmem:[#allocation2 + $0x1e50] sm:$0xff]
    %v1059 = vld [vmem:[#allocation2 + $0x1e58] sm:$0xff]
    %v1060 = vld [vmem:[#allocation2 + $0x1e60] sm:$0xff]
    %v1061 = vld [vmem:[#allocation2 + $0x1e68] sm:$0xff]
    %v1062 = vld [vmem:[#allocation2 + $0x1e70] sm:$0xff]
    %v1063 = vld [vmem:[#allocation2 + $0x1e78] sm:$0xff]
    %v1064 = vld [vmem:[#allocation2 + $0x1e80] sm:$0xff]
    %v1065 = vld [vmem:[#allocation2 + $0x1e88] sm:$0xff]
    %v1066 = vld [vmem:[#allocation2 + $0x1e90] sm:$0xff]
    %v1067 = vld [vmem:[#allocation2 + $0x1e98] sm:$0xff]
    %v1068 = vld [vmem:[#allocation2 + $0x1ea0] sm:$0xff]
    %v1069 = vld [vmem:[#allocation2 + $0x1ea8] sm:$0xff]
    %v1070 = vld [vmem:[#allocation2 + $0x1eb0] sm:$0xff]
    %v1071 = vld [vmem:[#allocation2 + $0x1eb8] sm:$0xff]
    %v1072 = vld [vmem:[#allocation2 + $0x1ec0] sm:$0xff]
    %v1073 = vld [vmem:[#allocation2 + $0x1ec8] sm:$0xff]
    %v1074 = vld [vmem:[#allocation2 + $0x1ed0] sm:$0xff]
    %v1075 = vld [vmem:[#allocation2 + $0x1ed8] sm:$0xff]
    %v1076 = vld [vmem:[#allocation2 + $0x1ee0] sm:$0xff]
    %v1077 = vld [vmem:[#allocation2 + $0x1ee8] sm:$0xff]
    %v1078 = vld [vmem:[#allocation2 + $0x1ef0] sm:$0xff]
    %v1079 = vld [vmem:[#allocation2 + $0x1ef8] sm:$0xff]
    %v1080 = vld [vmem:[#allocation2 + $0x1f00] sm:$0xff]
    %v1081 = vld [vmem:[#allocation2 + $0x1f08] sm:$0xff]
    %v1082 = vld [vmem:[#allocation2 + $0x1f10] sm:$0xff]
    %v1083 = vld [vmem:[#allocation2 + $0x1f18] sm:$0xff]
    %v1084 = vld [vmem:[#allocation2 + $0x1f20] sm:$0xff]
    %v1085 = vld [vmem:[#allocation2 + $0x1f28] sm:$0xff]
    %v1086 = vld [vmem:[#allocation2 + $0x1f30] sm:$0xff]
    %v1087 = vld [vmem:[#allocation2 + $0x1f38] sm:$0xff]
    %v1088 = vld [vmem:[#allocation2 + $0x1f40] sm:$0xff]
    %v1089 = vld [vmem:[#allocation2 + $0x1f48] sm:$0xff]
    %v1090 = vld [vmem:[#allocation2 + $0x1f50] sm:$0xff]
    %v1091 = vld [vmem:[#allocation2 + $0x1f58] sm:$0xff]
    %v1092 = vld [vmem:[#allocation2 + $0x1f60] sm:$0xff]
    %v1093 = vld [vmem:[#allocation2 + $0x1f68] sm:$0xff]
    %v1094 = vld [vmem:[#allocation2 + $0x1f70] sm:$0xff]
    %v1095 = vld [vmem:[#allocation2 + $0x1f78] sm:$0xff]
    %v1096 = vld [vmem:[#allocation2 + $0x1f80] sm:$0xff]
    %v1097 = vld [vmem:[#allocation2 + $0x1f88] sm:$0xff]
    %v1098 = vld [vmem:[#allocation2 + $0x1f90] sm:$0xff]
    %v1099 = vld [vmem:[#allocation2 + $0x1f98] sm:$0xff]
    %v1100 = vld [vmem:[#allocation2 + $0x1fa0] sm:$0xff]
    %v1101 = vld [vmem:[#allocation2 + $0x1fa8] sm:$0xff]
    %v1102 = vld [vmem:[#allocation2 + $0x1fb0] sm:$0xff]
    %v1103 = vld [vmem:[#allocation2 + $0x1fb8] sm:$0xff]
    %v1104 = vld [vmem:[#allocation2 + $0x1fc0] sm:$0xff]
    %v1105 = vld [vmem:[#allocation2 + $0x1fc8] sm:$0xff]
    %v1106 = vld [vmem:[#allocation2 + $0x1fd0] sm:$0xff]
    %v1107 = vld [vmem:[#allocation2 + $0x1fd8] sm:$0xff]
    %v1108 = vld [vmem:[#allocation2 + $0x1fe0] sm:$0xff]
    %v1109 = vld [vmem:[#allocation2 + $0x1fe8] sm:$0xff]
    %v1110 = vld [vmem:[#allocation2 + $0x1ff0] sm:$0xff]
    %v1111 = vld [vmem:[#allocation2 + $0x1ff8] sm:$0xff]
    %v1112 = vld [vmem:[#allocation4] sm:$0xf]
    %v1114 = vlaneseq
    %v1115 = vshrl.u32 %v1114, 7
    %v1116 = vsub.s32 0, %v1115
    %v1117 = vrot.slane %v1112, %v1116
    %v1118 = vlaneseq
    %v1119 = vshrl.u32 %v1118, 7
    %v1120 = vsub.s32 1, %v1119
    %v1121 = vrot.slane %v1112, %v1120
    %v1122 = vlaneseq
    %v1123 = vshrl.u32 %v1122, 7
    %v1124 = vsub.s32 2, %v1123
    %v1125 = vrot.slane %v1112, %v1124
    %v1126 = vlaneseq
    %v1127 = vshrl.u32 %v1126, 7
    %v1128 = vsub.s32 3, %v1127
    %v1129 = vrot.slane %v1112, %v1128
    %v1150 = vunpack.c.l.b16 %v72
    %v1151 = vunpack.c.h.b16 %v72
    %v1152 = vunpack.c.l.b16 %v73
    %v1153 = vunpack.c.h.b16 %v73
    %v1154 = vunpack.c.l.b16 %v74
    %v1155 = vunpack.c.h.b16 %v74
    %v1156 = vunpack.c.l.b16 %v75
    %v1157 = vunpack.c.h.b16 %v75
    %v1158 = vunpack.c.l.b16 %v76
    %v1159 = vunpack.c.h.b16 %v76
    %v1160 = vunpack.c.l.b16 %v77
    %v1161 = vunpack.c.h.b16 %v77
    %v1162 = vunpack.c.l.b16 %v78
    %v1163 = vunpack.c.h.b16 %v78
    %v1164 = vunpack.c.l.b16 %v79
    %v1165 = vunpack.c.h.b16 %v79
    %v1166 = vunpack.c.l.b16 %v80
    %v1167 = vunpack.c.h.b16 %v80
    %v1168 = vunpack.c.l.b16 %v81
    %v1169 = vunpack.c.h.b16 %v81
    %v1170 = vunpack.c.l.b16 %v82
    %v1171 = vunpack.c.h.b16 %v82
    %v1172 = vunpack.c.l.b16 %v83
    %v1173 = vunpack.c.h.b16 %v83
    %v1174 = vunpack.c.l.b16 %v84
    %v1175 = vunpack.c.h.b16 %v84
    %v1176 = vunpack.c.l.b16 %v85
    %v1177 = vunpack.c.h.b16 %v85
    %v1178 = vunpack.c.l.b16 %v86
    %v1179 = vunpack.c.h.b16 %v86
    %v1180 = vunpack.c.l.b16 %v87
    %v1181 = vunpack.c.h.b16 %v87
    %v1182 = vpack.c.b16 %v1150, %v1150
    %v1183 = vpack.c.b16 %v1151, %v1151
    %v1184 = vpack.c.b16 %v1152, %v1152
    %v1185 = vpack.c.b16 %v1153, %v1153
    %v1186 = vpack.c.b16 %v1154, %v1154
    %v1187 = vpack.c.b16 %v1155, %v1155
    %v1188 = vpack.c.b16 %v1156, %v1156
    %v1189 = vpack.c.b16 %v1157, %v1157
    %v1190 = vpack.c.b16 %v1158, %v1158
    %v1191 = vpack.c.b16 %v1159, %v1159
    %v1192 = vpack.c.b16 %v1160, %v1160
    %v1193 = vpack.c.b16 %v1161, %v1161
    %v1194 = vpack.c.b16 %v1162, %v1162
    %v1195 = vpack.c.b16 %v1163, %v1163
    %v1196 = vpack.c.b16 %v1164, %v1164
    %v1197 = vpack.c.b16 %v1165, %v1165
    %v1198 = vpack.c.b16 %v1166, %v1166
    %v1199 = vpack.c.b16 %v1167, %v1167
    %v1200 = vpack.c.b16 %v1168, %v1168
    %v1201 = vpack.c.b16 %v1169, %v1169
    %v1202 = vpack.c.b16 %v1170, %v1170
    %v1203 = vpack.c.b16 %v1171, %v1171
    %v1204 = vpack.c.b16 %v1172, %v1172
    %v1205 = vpack.c.b16 %v1173, %v1173
    %v1206 = vpack.c.b16 %v1174, %v1174
    %v1207 = vpack.c.b16 %v1175, %v1175
    %v1208 = vpack.c.b16 %v1176, %v1176
    %v1209 = vpack.c.b16 %v1177, %v1177
    %v1210 = vpack.c.b16 %v1178, %v1178
    %v1211 = vpack.c.b16 %v1179, %v1179
    %v1212 = vpack.c.b16 %v1180, %v1180
    %v1213 = vpack.c.b16 %v1181, %v1181
    %v2270 = vunpack.c.l.b16 %v88
    %v2271 = vunpack.c.h.b16 %v88
    %v2272 = vunpack.c.l.b16 %v89
    %v2273 = vunpack.c.h.b16 %v89
    %v2274 = vunpack.c.l.b16 %v90
    %v2275 = vunpack.c.h.b16 %v90
    %v2276 = vunpack.c.l.b16 %v91
    %v2277 = vunpack.c.h.b16 %v91
    %v2278 = vunpack.c.l.b16 %v92
    %v2279 = vunpack.c.h.b16 %v92
    %v2280 = vunpack.c.l.b16 %v93
    %v2281 = vunpack.c.h.b16 %v93
    %v2282 = vunpack.c.l.b16 %v94
    %v2283 = vunpack.c.h.b16 %v94
    %v2284 = vunpack.c.l.b16 %v95
    %v2285 = vunpack.c.h.b16 %v95
    %v2286 = vunpack.c.l.b16 %v96
    %v2287 = vunpack.c.h.b16 %v96
    %v2288 = vunpack.c.l.b16 %v97
    %v2289 = vunpack.c.h.b16 %v97
    %v2290 = vunpack.c.l.b16 %v98
    %v2291 = vunpack.c.h.b16 %v98
    %v2292 = vunpack.c.l.b16 %v99
    %v2293 = vunpack.c.h.b16 %v99
    %v2294 = vunpack.c.l.b16 %v100
    %v2295 = vunpack.c.h.b16 %v100
    %v2296 = vunpack.c.l.b16 %v101
    %v2297 = vunpack.c.h.b16 %v101
    %v2298 = vunpack.c.l.b16 %v102
    %v2299 = vunpack.c.h.b16 %v102
    %v2300 = vunpack.c.l.b16 %v103
    %v2301 = vunpack.c.h.b16 %v103
    %v2302 = vunpack.c.l.b16 %v104
    %v2303 = vunpack.c.h.b16 %v104
    %v2304 = vunpack.c.l.b16 %v105
    %v2305 = vunpack.c.h.b16 %v105
    %v2306 = vunpack.c.l.b16 %v106
    %v2307 = vunpack.c.h.b16 %v106
    %v2308 = vunpack.c.l.b16 %v107
    %v2309 = vunpack.c.h.b16 %v107
    %v2310 = vunpack.c.l.b16 %v108
    %v2311 = vunpack.c.h.b16 %v108
    %v2312 = vunpack.c.l.b16 %v109
    %v2313 = vunpack.c.h.b16 %v109
    %v2314 = vunpack.c.l.b16 %v110
    %v2315 = vunpack.c.h.b16 %v110
    %v2316 = vunpack.c.l.b16 %v111
    %v2317 = vunpack.c.h.b16 %v111
    %v2318 = vunpack.c.l.b16 %v112
    %v2319 = vunpack.c.h.b16 %v112
    %v2320 = vunpack.c.l.b16 %v113
    %v2321 = vunpack.c.h.b16 %v113
    %v2322 = vunpack.c.l.b16 %v114
    %v2323 = vunpack.c.h.b16 %v114
    %v2324 = vunpack.c.l.b16 %v115
    %v2325 = vunpack.c.h.b16 %v115
    %v2326 = vunpack.c.l.b16 %v116
    %v2327 = vunpack.c.h.b16 %v116
    %v2328 = vunpack.c.l.b16 %v117
    %v2329 = vunpack.c.h.b16 %v117
    %v2330 = vunpack.c.l.b16 %v118
    %v2331 = vunpack.c.h.b16 %v118
    %v2332 = vunpack.c.l.b16 %v119
    %v2333 = vunpack.c.h.b16 %v119
    %v2334 = vunpack.c.l.b16 %v120
    %v2335 = vunpack.c.h.b16 %v120
    %v2336 = vunpack.c.l.b16 %v121
    %v2337 = vunpack.c.h.b16 %v121
    %v2338 = vunpack.c.l.b16 %v122
    %v2339 = vunpack.c.h.b16 %v122
    %v2340 = vunpack.c.l.b16 %v123
    %v2341 = vunpack.c.h.b16 %v123
    %v2342 = vunpack.c.l.b16 %v124
    %v2343 = vunpack.c.h.b16 %v124
    %v2344 = vunpack.c.l.b16 %v125
    %v2345 = vunpack.c.h.b16 %v125
    %v2346 = vunpack.c.l.b16 %v126
    %v2347 = vunpack.c.h.b16 %v126
    %v2348 = vunpack.c.l.b16 %v127
    %v2349 = vunpack.c.h.b16 %v127
    %v2350 = vunpack.c.l.b16 %v128
    %v2351 = vunpack.c.h.b16 %v128
    %v2352 = vunpack.c.l.b16 %v129
    %v2353 = vunpack.c.h.b16 %v129
    %v2354 = vunpack.c.l.b16 %v130
    %v2355 = vunpack.c.h.b16 %v130
    %v2356 = vunpack.c.l.b16 %v131
    %v2357 = vunpack.c.h.b16 %v131
    %v2358 = vunpack.c.l.b16 %v132
    %v2359 = vunpack.c.h.b16 %v132
    %v2360 = vunpack.c.l.b16 %v133
    %v2361 = vunpack.c.h.b16 %v133
    %v2362 = vunpack.c.l.b16 %v134
    %v2363 = vunpack.c.h.b16 %v134
    %v2364 = vunpack.c.l.b16 %v135
    %v2365 = vunpack.c.h.b16 %v135
    %v2366 = vunpack.c.l.b16 %v136
    %v2367 = vunpack.c.h.b16 %v136
    %v2368 = vunpack.c.l.b16 %v137
    %v2369 = vunpack.c.h.b16 %v137
    %v2370 = vunpack.c.l.b16 %v138
    %v2371 = vunpack.c.h.b16 %v138
    %v2372 = vunpack.c.l.b16 %v139
    %v2373 = vunpack.c.h.b16 %v139
    %v2374 = vunpack.c.l.b16 %v140
    %v2375 = vunpack.c.h.b16 %v140
    %v2376 = vunpack.c.l.b16 %v141
    %v2377 = vunpack.c.h.b16 %v141
    %v2378 = vunpack.c.l.b16 %v142
    %v2379 = vunpack.c.h.b16 %v142
    %v2380 = vunpack.c.l.b16 %v143
    %v2381 = vunpack.c.h.b16 %v143
    %v2382 = vunpack.c.l.b16 %v144
    %v2383 = vunpack.c.h.b16 %v144
    %v2384 = vunpack.c.l.b16 %v145
    %v2385 = vunpack.c.h.b16 %v145
    %v2386 = vunpack.c.l.b16 %v146
    %v2387 = vunpack.c.h.b16 %v146
    %v2388 = vunpack.c.l.b16 %v147
    %v2389 = vunpack.c.h.b16 %v147
    %v2390 = vunpack.c.l.b16 %v148
    %v2391 = vunpack.c.h.b16 %v148
    %v2392 = vunpack.c.l.b16 %v149
    %v2393 = vunpack.c.h.b16 %v149
    %v2394 = vunpack.c.l.b16 %v150
    %v2395 = vunpack.c.h.b16 %v150
    %v2396 = vunpack.c.l.b16 %v151
    %v2397 = vunpack.c.h.b16 %v151
    %v2398 = vunpack.c.l.b16 %v152
    %v2399 = vunpack.c.h.b16 %v152
    %v2400 = vunpack.c.l.b16 %v153
    %v2401 = vunpack.c.h.b16 %v153
    %v2402 = vunpack.c.l.b16 %v154
    %v2403 = vunpack.c.h.b16 %v154
    %v2404 = vunpack.c.l.b16 %v155
    %v2405 = vunpack.c.h.b16 %v155
    %v2406 = vunpack.c.l.b16 %v156
    %v2407 = vunpack.c.h.b16 %v156
    %v2408 = vunpack.c.l.b16 %v157
    %v2409 = vunpack.c.h.b16 %v157
    %v2410 = vunpack.c.l.b16 %v158
    %v2411 = vunpack.c.h.b16 %v158
    %v2412 = vunpack.c.l.b16 %v159
    %v2413 = vunpack.c.h.b16 %v159
    %v2414 = vunpack.c.l.b16 %v160
    %v2415 = vunpack.c.h.b16 %v160
    %v2416 = vunpack.c.l.b16 %v161
    %v2417 = vunpack.c.h.b16 %v161
    %v2418 = vunpack.c.l.b16 %v162
    %v2419 = vunpack.c.h.b16 %v162
    %v2420 = vunpack.c.l.b16 %v163
    %v2421 = vunpack.c.h.b16 %v163
    %v2422 = vunpack.c.l.b16 %v164
    %v2423 = vunpack.c.h.b16 %v164
    %v2424 = vunpack.c.l.b16 %v165
    %v2425 = vunpack.c.h.b16 %v165
    %v2426 = vunpack.c.l.b16 %v166
    %v2427 = vunpack.c.h.b16 %v166
    %v2428 = vunpack.c.l.b16 %v167
    %v2429 = vunpack.c.h.b16 %v167
    %v2430 = vunpack.c.l.b16 %v168
    %v2431 = vunpack.c.h.b16 %v168
    %v2432 = vunpack.c.l.b16 %v169
    %v2433 = vunpack.c.h.b16 %v169
    %v2434 = vunpack.c.l.b16 %v170
    %v2435 = vunpack.c.h.b16 %v170
    %v2436 = vunpack.c.l.b16 %v171
    %v2437 = vunpack.c.h.b16 %v171
    %v2438 = vunpack.c.l.b16 %v172
    %v2439 = vunpack.c.h.b16 %v172
    %v2440 = vunpack.c.l.b16 %v173
    %v2441 = vunpack.c.h.b16 %v173
    %v2442 = vunpack.c.l.b16 %v174
    %v2443 = vunpack.c.h.b16 %v174
    %v2444 = vunpack.c.l.b16 %v175
    %v2445 = vunpack.c.h.b16 %v175
    %v2446 = vunpack.c.l.b16 %v176
    %v2447 = vunpack.c.h.b16 %v176
    %v2448 = vunpack.c.l.b16 %v177
    %v2449 = vunpack.c.h.b16 %v177
    %v2450 = vunpack.c.l.b16 %v178
    %v2451 = vunpack.c.h.b16 %v178
    %v2452 = vunpack.c.l.b16 %v179
    %v2453 = vunpack.c.h.b16 %v179
    %v2454 = vunpack.c.l.b16 %v180
    %v2455 = vunpack.c.h.b16 %v180
    %v2456 = vunpack.c.l.b16 %v181
    %v2457 = vunpack.c.h.b16 %v181
    %v2458 = vunpack.c.l.b16 %v182
    %v2459 = vunpack.c.h.b16 %v182
    %v2460 = vunpack.c.l.b16 %v183
    %v2461 = vunpack.c.h.b16 %v183
    %v2462 = vunpack.c.l.b16 %v184
    %v2463 = vunpack.c.h.b16 %v184
    %v2464 = vunpack.c.l.b16 %v185
    %v2465 = vunpack.c.h.b16 %v185
    %v2466 = vunpack.c.l.b16 %v186
    %v2467 = vunpack.c.h.b16 %v186
    %v2468 = vunpack.c.l.b16 %v187
    %v2469 = vunpack.c.h.b16 %v187
    %v2470 = vunpack.c.l.b16 %v188
    %v2471 = vunpack.c.h.b16 %v188
    %v2472 = vunpack.c.l.b16 %v189
    %v2473 = vunpack.c.h.b16 %v189
    %v2474 = vunpack.c.l.b16 %v190
    %v2475 = vunpack.c.h.b16 %v190
    %v2476 = vunpack.c.l.b16 %v191
    %v2477 = vunpack.c.h.b16 %v191
    %v2478 = vunpack.c.l.b16 %v192
    %v2479 = vunpack.c.h.b16 %v192
    %v2480 = vunpack.c.l.b16 %v193
    %v2481 = vunpack.c.h.b16 %v193
    %v2482 = vunpack.c.l.b16 %v194
    %v2483 = vunpack.c.h.b16 %v194
    %v2484 = vunpack.c.l.b16 %v195
    %v2485 = vunpack.c.h.b16 %v195
    %v2486 = vunpack.c.l.b16 %v196
    %v2487 = vunpack.c.h.b16 %v196
    %v2488 = vunpack.c.l.b16 %v197
    %v2489 = vunpack.c.h.b16 %v197
    %v2490 = vunpack.c.l.b16 %v198
    %v2491 = vunpack.c.h.b16 %v198
    %v2492 = vunpack.c.l.b16 %v199
    %v2493 = vunpack.c.h.b16 %v199
    %v2494 = vunpack.c.l.b16 %v200
    %v2495 = vunpack.c.h.b16 %v200
    %v2496 = vunpack.c.l.b16 %v201
    %v2497 = vunpack.c.h.b16 %v201
    %v2498 = vunpack.c.l.b16 %v202
    %v2499 = vunpack.c.h.b16 %v202
    %v2500 = vunpack.c.l.b16 %v203
    %v2501 = vunpack.c.h.b16 %v203
    %v2502 = vunpack.c.l.b16 %v204
    %v2503 = vunpack.c.h.b16 %v204
    %v2504 = vunpack.c.l.b16 %v205
    %v2505 = vunpack.c.h.b16 %v205
    %v2506 = vunpack.c.l.b16 %v206
    %v2507 = vunpack.c.h.b16 %v206
    %v2508 = vunpack.c.l.b16 %v207
    %v2509 = vunpack.c.h.b16 %v207
    %v2510 = vunpack.c.l.b16 %v208
    %v2511 = vunpack.c.h.b16 %v208
    %v2512 = vunpack.c.l.b16 %v209
    %v2513 = vunpack.c.h.b16 %v209
    %v2514 = vunpack.c.l.b16 %v210
    %v2515 = vunpack.c.h.b16 %v210
    %v2516 = vunpack.c.l.b16 %v211
    %v2517 = vunpack.c.h.b16 %v211
    %v2518 = vunpack.c.l.b16 %v212
    %v2519 = vunpack.c.h.b16 %v212
    %v2520 = vunpack.c.l.b16 %v213
    %v2521 = vunpack.c.h.b16 %v213
    %v2522 = vunpack.c.l.b16 %v214
    %v2523 = vunpack.c.h.b16 %v214
    %v2524 = vunpack.c.l.b16 %v215
    %v2525 = vunpack.c.h.b16 %v215
    %v2526 = vunpack.c.l.b16 %v216
    %v2527 = vunpack.c.h.b16 %v216
    %v2528 = vunpack.c.l.b16 %v217
    %v2529 = vunpack.c.h.b16 %v217
    %v2530 = vunpack.c.l.b16 %v218
    %v2531 = vunpack.c.h.b16 %v218
    %v2532 = vunpack.c.l.b16 %v219
    %v2533 = vunpack.c.h.b16 %v219
    %v2534 = vunpack.c.l.b16 %v220
    %v2535 = vunpack.c.h.b16 %v220
    %v2536 = vunpack.c.l.b16 %v221
    %v2537 = vunpack.c.h.b16 %v221
    %v2538 = vunpack.c.l.b16 %v222
    %v2539 = vunpack.c.h.b16 %v222
    %v2540 = vunpack.c.l.b16 %v223
    %v2541 = vunpack.c.h.b16 %v223
    %v2542 = vunpack.c.l.b16 %v224
    %v2543 = vunpack.c.h.b16 %v224
    %v2544 = vunpack.c.l.b16 %v225
    %v2545 = vunpack.c.h.b16 %v225
    %v2546 = vunpack.c.l.b16 %v226
    %v2547 = vunpack.c.h.b16 %v226
    %v2548 = vunpack.c.l.b16 %v227
    %v2549 = vunpack.c.h.b16 %v227
    %v2550 = vunpack.c.l.b16 %v228
    %v2551 = vunpack.c.h.b16 %v228
    %v2552 = vunpack.c.l.b16 %v229
    %v2553 = vunpack.c.h.b16 %v229
    %v2554 = vunpack.c.l.b16 %v230
    %v2555 = vunpack.c.h.b16 %v230
    %v2556 = vunpack.c.l.b16 %v231
    %v2557 = vunpack.c.h.b16 %v231
    %v2558 = vunpack.c.l.b16 %v232
    %v2559 = vunpack.c.h.b16 %v232
    %v2560 = vunpack.c.l.b16 %v233
    %v2561 = vunpack.c.h.b16 %v233
    %v2562 = vunpack.c.l.b16 %v234
    %v2563 = vunpack.c.h.b16 %v234
    %v2564 = vunpack.c.l.b16 %v235
    %v2565 = vunpack.c.h.b16 %v235
    %v2566 = vunpack.c.l.b16 %v236
    %v2567 = vunpack.c.h.b16 %v236
    %v2568 = vunpack.c.l.b16 %v237
    %v2569 = vunpack.c.h.b16 %v237
    %v2570 = vunpack.c.l.b16 %v238
    %v2571 = vunpack.c.h.b16 %v238
    %v2572 = vunpack.c.l.b16 %v239
    %v2573 = vunpack.c.h.b16 %v239
    %v2574 = vunpack.c.l.b16 %v240
    %v2575 = vunpack.c.h.b16 %v240
    %v2576 = vunpack.c.l.b16 %v241
    %v2577 = vunpack.c.h.b16 %v241
    %v2578 = vunpack.c.l.b16 %v242
    %v2579 = vunpack.c.h.b16 %v242
    %v2580 = vunpack.c.l.b16 %v243
    %v2581 = vunpack.c.h.b16 %v243
    %v2582 = vunpack.c.l.b16 %v244
    %v2583 = vunpack.c.h.b16 %v244
    %v2584 = vunpack.c.l.b16 %v245
    %v2585 = vunpack.c.h.b16 %v245
    %v2586 = vunpack.c.l.b16 %v246
    %v2587 = vunpack.c.h.b16 %v246
    %v2588 = vunpack.c.l.b16 %v247
    %v2589 = vunpack.c.h.b16 %v247
    %v2590 = vunpack.c.l.b16 %v248
    %v2591 = vunpack.c.h.b16 %v248
    %v2592 = vunpack.c.l.b16 %v249
    %v2593 = vunpack.c.h.b16 %v249
    %v2594 = vunpack.c.l.b16 %v250
    %v2595 = vunpack.c.h.b16 %v250
    %v2596 = vunpack.c.l.b16 %v251
    %v2597 = vunpack.c.h.b16 %v251
    %v2598 = vunpack.c.l.b16 %v252
    %v2599 = vunpack.c.h.b16 %v252
    %v2600 = vunpack.c.l.b16 %v253
    %v2601 = vunpack.c.h.b16 %v253
    %v2602 = vunpack.c.l.b16 %v254
    %v2603 = vunpack.c.h.b16 %v254
    %v2604 = vunpack.c.l.b16 %v255
    %v2605 = vunpack.c.h.b16 %v255
    %v2606 = vunpack.c.l.b16 %v256
    %v2607 = vunpack.c.h.b16 %v256
    %v2608 = vunpack.c.l.b16 %v257
    %v2609 = vunpack.c.h.b16 %v257
    %v2610 = vunpack.c.l.b16 %v258
    %v2611 = vunpack.c.h.b16 %v258
    %v2612 = vunpack.c.l.b16 %v259
    %v2613 = vunpack.c.h.b16 %v259
    %v2614 = vunpack.c.l.b16 %v260
    %v2615 = vunpack.c.h.b16 %v260
    %v2616 = vunpack.c.l.b16 %v261
    %v2617 = vunpack.c.h.b16 %v261
    %v2618 = vunpack.c.l.b16 %v262
    %v2619 = vunpack.c.h.b16 %v262
    %v2620 = vunpack.c.l.b16 %v263
    %v2621 = vunpack.c.h.b16 %v263
    %v2622 = vunpack.c.l.b16 %v264
    %v2623 = vunpack.c.h.b16 %v264
    %v2624 = vunpack.c.l.b16 %v265
    %v2625 = vunpack.c.h.b16 %v265
    %v2626 = vunpack.c.l.b16 %v266
    %v2627 = vunpack.c.h.b16 %v266
    %v2628 = vunpack.c.l.b16 %v267
    %v2629 = vunpack.c.h.b16 %v267
    %v2630 = vunpack.c.l.b16 %v268
    %v2631 = vunpack.c.h.b16 %v268
    %v2632 = vunpack.c.l.b16 %v269
    %v2633 = vunpack.c.h.b16 %v269
    %v2634 = vunpack.c.l.b16 %v270
    %v2635 = vunpack.c.h.b16 %v270
    %v2636 = vunpack.c.l.b16 %v271
    %v2637 = vunpack.c.h.b16 %v271
    %v2638 = vunpack.c.l.b16 %v272
    %v2639 = vunpack.c.h.b16 %v272
    %v2640 = vunpack.c.l.b16 %v273
    %v2641 = vunpack.c.h.b16 %v273
    %v2642 = vunpack.c.l.b16 %v274
    %v2643 = vunpack.c.h.b16 %v274
    %v2644 = vunpack.c.l.b16 %v275
    %v2645 = vunpack.c.h.b16 %v275
    %v2646 = vunpack.c.l.b16 %v276
    %v2647 = vunpack.c.h.b16 %v276
    %v2648 = vunpack.c.l.b16 %v277
    %v2649 = vunpack.c.h.b16 %v277
    %v2650 = vunpack.c.l.b16 %v278
    %v2651 = vunpack.c.h.b16 %v278
    %v2652 = vunpack.c.l.b16 %v279
    %v2653 = vunpack.c.h.b16 %v279
    %v2654 = vunpack.c.l.b16 %v280
    %v2655 = vunpack.c.h.b16 %v280
    %v2656 = vunpack.c.l.b16 %v281
    %v2657 = vunpack.c.h.b16 %v281
    %v2658 = vunpack.c.l.b16 %v282
    %v2659 = vunpack.c.h.b16 %v282
    %v2660 = vunpack.c.l.b16 %v283
    %v2661 = vunpack.c.h.b16 %v283
    %v2662 = vunpack.c.l.b16 %v284
    %v2663 = vunpack.c.h.b16 %v284
    %v2664 = vunpack.c.l.b16 %v285
    %v2665 = vunpack.c.h.b16 %v285
    %v2666 = vunpack.c.l.b16 %v286
    %v2667 = vunpack.c.h.b16 %v286
    %v2668 = vunpack.c.l.b16 %v287
    %v2669 = vunpack.c.h.b16 %v287
    %v2670 = vunpack.c.l.b16 %v288
    %v2671 = vunpack.c.h.b16 %v288
    %v2672 = vunpack.c.l.b16 %v289
    %v2673 = vunpack.c.h.b16 %v289
    %v2674 = vunpack.c.l.b16 %v290
    %v2675 = vunpack.c.h.b16 %v290
    %v2676 = vunpack.c.l.b16 %v291
    %v2677 = vunpack.c.h.b16 %v291
    %v2678 = vunpack.c.l.b16 %v292
    %v2679 = vunpack.c.h.b16 %v292
    %v2680 = vunpack.c.l.b16 %v293
    %v2681 = vunpack.c.h.b16 %v293
    %v2682 = vunpack.c.l.b16 %v294
    %v2683 = vunpack.c.h.b16 %v294
    %v2684 = vunpack.c.l.b16 %v295
    %v2685 = vunpack.c.h.b16 %v295
    %v2686 = vunpack.c.l.b16 %v296
    %v2687 = vunpack.c.h.b16 %v296
    %v2688 = vunpack.c.l.b16 %v297
    %v2689 = vunpack.c.h.b16 %v297
    %v2690 = vunpack.c.l.b16 %v298
    %v2691 = vunpack.c.h.b16 %v298
    %v2692 = vunpack.c.l.b16 %v299
    %v2693 = vunpack.c.h.b16 %v299
    %v2694 = vunpack.c.l.b16 %v300
    %v2695 = vunpack.c.h.b16 %v300
    %v2696 = vunpack.c.l.b16 %v301
    %v2697 = vunpack.c.h.b16 %v301
    %v2698 = vunpack.c.l.b16 %v302
    %v2699 = vunpack.c.h.b16 %v302
    %v2700 = vunpack.c.l.b16 %v303
    %v2701 = vunpack.c.h.b16 %v303
    %v2702 = vunpack.c.l.b16 %v304
    %v2703 = vunpack.c.h.b16 %v304
    %v2704 = vunpack.c.l.b16 %v305
    %v2705 = vunpack.c.h.b16 %v305
    %v2706 = vunpack.c.l.b16 %v306
    %v2707 = vunpack.c.h.b16 %v306
    %v2708 = vunpack.c.l.b16 %v307
    %v2709 = vunpack.c.h.b16 %v307
    %v2710 = vunpack.c.l.b16 %v308
    %v2711 = vunpack.c.h.b16 %v308
    %v2712 = vunpack.c.l.b16 %v309
    %v2713 = vunpack.c.h.b16 %v309
    %v2714 = vunpack.c.l.b16 %v310
    %v2715 = vunpack.c.h.b16 %v310
    %v2716 = vunpack.c.l.b16 %v311
    %v2717 = vunpack.c.h.b16 %v311
    %v2718 = vunpack.c.l.b16 %v312
    %v2719 = vunpack.c.h.b16 %v312
    %v2720 = vunpack.c.l.b16 %v313
    %v2721 = vunpack.c.h.b16 %v313
    %v2722 = vunpack.c.l.b16 %v314
    %v2723 = vunpack.c.h.b16 %v314
    %v2724 = vunpack.c.l.b16 %v315
    %v2725 = vunpack.c.h.b16 %v315
    %v2726 = vunpack.c.l.b16 %v316
    %v2727 = vunpack.c.h.b16 %v316
    %v2728 = vunpack.c.l.b16 %v317
    %v2729 = vunpack.c.h.b16 %v317
    %v2730 = vunpack.c.l.b16 %v318
    %v2731 = vunpack.c.h.b16 %v318
    %v2732 = vunpack.c.l.b16 %v319
    %v2733 = vunpack.c.h.b16 %v319
    %v2734 = vunpack.c.l.b16 %v320
    %v2735 = vunpack.c.h.b16 %v320
    %v2736 = vunpack.c.l.b16 %v321
    %v2737 = vunpack.c.h.b16 %v321
    %v2738 = vunpack.c.l.b16 %v322
    %v2739 = vunpack.c.h.b16 %v322
    %v2740 = vunpack.c.l.b16 %v323
    %v2741 = vunpack.c.h.b16 %v323
    %v2742 = vunpack.c.l.b16 %v324
    %v2743 = vunpack.c.h.b16 %v324
    %v2744 = vunpack.c.l.b16 %v325
    %v2745 = vunpack.c.h.b16 %v325
    %v2746 = vunpack.c.l.b16 %v326
    %v2747 = vunpack.c.h.b16 %v326
    %v2748 = vunpack.c.l.b16 %v327
    %v2749 = vunpack.c.h.b16 %v327
    %v2750 = vunpack.c.l.b16 %v328
    %v2751 = vunpack.c.h.b16 %v328
    %v2752 = vunpack.c.l.b16 %v329
    %v2753 = vunpack.c.h.b16 %v329
    %v2754 = vunpack.c.l.b16 %v330
    %v2755 = vunpack.c.h.b16 %v330
    %v2756 = vunpack.c.l.b16 %v331
    %v2757 = vunpack.c.h.b16 %v331
    %v2758 = vunpack.c.l.b16 %v332
    %v2759 = vunpack.c.h.b16 %v332
    %v2760 = vunpack.c.l.b16 %v333
    %v2761 = vunpack.c.h.b16 %v333
    %v2762 = vunpack.c.l.b16 %v334
    %v2763 = vunpack.c.h.b16 %v334
    %v2764 = vunpack.c.l.b16 %v335
    %v2765 = vunpack.c.h.b16 %v335
    %v2766 = vunpack.c.l.b16 %v336
    %v2767 = vunpack.c.h.b16 %v336
    %v2768 = vunpack.c.l.b16 %v337
    %v2769 = vunpack.c.h.b16 %v337
    %v2770 = vunpack.c.l.b16 %v338
    %v2771 = vunpack.c.h.b16 %v338
    %v2772 = vunpack.c.l.b16 %v339
    %v2773 = vunpack.c.h.b16 %v339
    %v2774 = vunpack.c.l.b16 %v340
    %v2775 = vunpack.c.h.b16 %v340
    %v2776 = vunpack.c.l.b16 %v341
    %v2777 = vunpack.c.h.b16 %v341
    %v2778 = vunpack.c.l.b16 %v342
    %v2779 = vunpack.c.h.b16 %v342
    %v2780 = vunpack.c.l.b16 %v343
    %v2781 = vunpack.c.h.b16 %v343
    %v2782 = vunpack.c.l.b16 %v344
    %v2783 = vunpack.c.h.b16 %v344
    %v2784 = vunpack.c.l.b16 %v345
    %v2785 = vunpack.c.h.b16 %v345
    %v2786 = vunpack.c.l.b16 %v346
    %v2787 = vunpack.c.h.b16 %v346
    %v2788 = vunpack.c.l.b16 %v347
    %v2789 = vunpack.c.h.b16 %v347
    %v2790 = vunpack.c.l.b16 %v348
    %v2791 = vunpack.c.h.b16 %v348
    %v2792 = vunpack.c.l.b16 %v349
    %v2793 = vunpack.c.h.b16 %v349
    %v2794 = vunpack.c.l.b16 %v350
    %v2795 = vunpack.c.h.b16 %v350
    %v2796 = vunpack.c.l.b16 %v351
    %v2797 = vunpack.c.h.b16 %v351
    %v2798 = vunpack.c.l.b16 %v352
    %v2799 = vunpack.c.h.b16 %v352
    %v2800 = vunpack.c.l.b16 %v353
    %v2801 = vunpack.c.h.b16 %v353
    %v2802 = vunpack.c.l.b16 %v354
    %v2803 = vunpack.c.h.b16 %v354
    %v2804 = vunpack.c.l.b16 %v355
    %v2805 = vunpack.c.h.b16 %v355
    %v2806 = vunpack.c.l.b16 %v356
    %v2807 = vunpack.c.h.b16 %v356
    %v2808 = vunpack.c.l.b16 %v357
    %v2809 = vunpack.c.h.b16 %v357
    %v2810 = vunpack.c.l.b16 %v358
    %v2811 = vunpack.c.h.b16 %v358
    %v2812 = vunpack.c.l.b16 %v359
    %v2813 = vunpack.c.h.b16 %v359
    %v2814 = vunpack.c.l.b16 %v360
    %v2815 = vunpack.c.h.b16 %v360
    %v2816 = vunpack.c.l.b16 %v361
    %v2817 = vunpack.c.h.b16 %v361
    %v2818 = vunpack.c.l.b16 %v362
    %v2819 = vunpack.c.h.b16 %v362
    %v2820 = vunpack.c.l.b16 %v363
    %v2821 = vunpack.c.h.b16 %v363
    %v2822 = vunpack.c.l.b16 %v364
    %v2823 = vunpack.c.h.b16 %v364
    %v2824 = vunpack.c.l.b16 %v365
    %v2825 = vunpack.c.h.b16 %v365
    %v2826 = vunpack.c.l.b16 %v366
    %v2827 = vunpack.c.h.b16 %v366
    %v2828 = vunpack.c.l.b16 %v367
    %v2829 = vunpack.c.h.b16 %v367
    %v2830 = vunpack.c.l.b16 %v368
    %v2831 = vunpack.c.h.b16 %v368
    %v2832 = vunpack.c.l.b16 %v369
    %v2833 = vunpack.c.h.b16 %v369
    %v2834 = vunpack.c.l.b16 %v370
    %v2835 = vunpack.c.h.b16 %v370
    %v2836 = vunpack.c.l.b16 %v371
    %v2837 = vunpack.c.h.b16 %v371
    %v2838 = vunpack.c.l.b16 %v372
    %v2839 = vunpack.c.h.b16 %v372
    %v2840 = vunpack.c.l.b16 %v373
    %v2841 = vunpack.c.h.b16 %v373
    %v2842 = vunpack.c.l.b16 %v374
    %v2843 = vunpack.c.h.b16 %v374
    %v2844 = vunpack.c.l.b16 %v375
    %v2845 = vunpack.c.h.b16 %v375
    %v2846 = vunpack.c.l.b16 %v376
    %v2847 = vunpack.c.h.b16 %v376
    %v2848 = vunpack.c.l.b16 %v377
    %v2849 = vunpack.c.h.b16 %v377
    %v2850 = vunpack.c.l.b16 %v378
    %v2851 = vunpack.c.h.b16 %v378
    %v2852 = vunpack.c.l.b16 %v379
    %v2853 = vunpack.c.h.b16 %v379
    %v2854 = vunpack.c.l.b16 %v380
    %v2855 = vunpack.c.h.b16 %v380
    %v2856 = vunpack.c.l.b16 %v381
    %v2857 = vunpack.c.h.b16 %v381
    %v2858 = vunpack.c.l.b16 %v382
    %v2859 = vunpack.c.h.b16 %v382
    %v2860 = vunpack.c.l.b16 %v383
    %v2861 = vunpack.c.h.b16 %v383
    %v2862 = vunpack.c.l.b16 %v384
    %v2863 = vunpack.c.h.b16 %v384
    %v2864 = vunpack.c.l.b16 %v385
    %v2865 = vunpack.c.h.b16 %v385
    %v2866 = vunpack.c.l.b16 %v386
    %v2867 = vunpack.c.h.b16 %v386
    %v2868 = vunpack.c.l.b16 %v387
    %v2869 = vunpack.c.h.b16 %v387
    %v2870 = vunpack.c.l.b16 %v388
    %v2871 = vunpack.c.h.b16 %v388
    %v2872 = vunpack.c.l.b16 %v389
    %v2873 = vunpack.c.h.b16 %v389
    %v2874 = vunpack.c.l.b16 %v390
    %v2875 = vunpack.c.h.b16 %v390
    %v2876 = vunpack.c.l.b16 %v391
    %v2877 = vunpack.c.h.b16 %v391
    %v2878 = vunpack.c.l.b16 %v392
    %v2879 = vunpack.c.h.b16 %v392
    %v2880 = vunpack.c.l.b16 %v393
    %v2881 = vunpack.c.h.b16 %v393
    %v2882 = vunpack.c.l.b16 %v394
    %v2883 = vunpack.c.h.b16 %v394
    %v2884 = vunpack.c.l.b16 %v395
    %v2885 = vunpack.c.h.b16 %v395
    %v2886 = vunpack.c.l.b16 %v396
    %v2887 = vunpack.c.h.b16 %v396
    %v2888 = vunpack.c.l.b16 %v397
    %v2889 = vunpack.c.h.b16 %v397
    %v2890 = vunpack.c.l.b16 %v398
    %v2891 = vunpack.c.h.b16 %v398
    %v2892 = vunpack.c.l.b16 %v399
    %v2893 = vunpack.c.h.b16 %v399
    %v2894 = vunpack.c.l.b16 %v400
    %v2895 = vunpack.c.h.b16 %v400
    %v2896 = vunpack.c.l.b16 %v401
    %v2897 = vunpack.c.h.b16 %v401
    %v2898 = vunpack.c.l.b16 %v402
    %v2899 = vunpack.c.h.b16 %v402
    %v2900 = vunpack.c.l.b16 %v403
    %v2901 = vunpack.c.h.b16 %v403
    %v2902 = vunpack.c.l.b16 %v404
    %v2903 = vunpack.c.h.b16 %v404
    %v2904 = vunpack.c.l.b16 %v405
    %v2905 = vunpack.c.h.b16 %v405
    %v2906 = vunpack.c.l.b16 %v406
    %v2907 = vunpack.c.h.b16 %v406
    %v2908 = vunpack.c.l.b16 %v407
    %v2909 = vunpack.c.h.b16 %v407
    %v2910 = vunpack.c.l.b16 %v408
    %v2911 = vunpack.c.h.b16 %v408
    %v2912 = vunpack.c.l.b16 %v409
    %v2913 = vunpack.c.h.b16 %v409
    %v2914 = vunpack.c.l.b16 %v410
    %v2915 = vunpack.c.h.b16 %v410
    %v2916 = vunpack.c.l.b16 %v411
    %v2917 = vunpack.c.h.b16 %v411
    %v2918 = vunpack.c.l.b16 %v412
    %v2919 = vunpack.c.h.b16 %v412
    %v2920 = vunpack.c.l.b16 %v413
    %v2921 = vunpack.c.h.b16 %v413
    %v2922 = vunpack.c.l.b16 %v414
    %v2923 = vunpack.c.h.b16 %v414
    %v2924 = vunpack.c.l.b16 %v415
    %v2925 = vunpack.c.h.b16 %v415
    %v2926 = vunpack.c.l.b16 %v416
    %v2927 = vunpack.c.h.b16 %v416
    %v2928 = vunpack.c.l.b16 %v417
    %v2929 = vunpack.c.h.b16 %v417
    %v2930 = vunpack.c.l.b16 %v418
    %v2931 = vunpack.c.h.b16 %v418
    %v2932 = vunpack.c.l.b16 %v419
    %v2933 = vunpack.c.h.b16 %v419
    %v2934 = vunpack.c.l.b16 %v420
    %v2935 = vunpack.c.h.b16 %v420
    %v2936 = vunpack.c.l.b16 %v421
    %v2937 = vunpack.c.h.b16 %v421
    %v2938 = vunpack.c.l.b16 %v422
    %v2939 = vunpack.c.h.b16 %v422
    %v2940 = vunpack.c.l.b16 %v423
    %v2941 = vunpack.c.h.b16 %v423
    %v2942 = vunpack.c.l.b16 %v424
    %v2943 = vunpack.c.h.b16 %v424
    %v2944 = vunpack.c.l.b16 %v425
    %v2945 = vunpack.c.h.b16 %v425
    %v2946 = vunpack.c.l.b16 %v426
    %v2947 = vunpack.c.h.b16 %v426
    %v2948 = vunpack.c.l.b16 %v427
    %v2949 = vunpack.c.h.b16 %v427
    %v2950 = vunpack.c.l.b16 %v428
    %v2951 = vunpack.c.h.b16 %v428
    %v2952 = vunpack.c.l.b16 %v429
    %v2953 = vunpack.c.h.b16 %v429
    %v2954 = vunpack.c.l.b16 %v430
    %v2955 = vunpack.c.h.b16 %v430
    %v2956 = vunpack.c.l.b16 %v431
    %v2957 = vunpack.c.h.b16 %v431
    %v2958 = vunpack.c.l.b16 %v432
    %v2959 = vunpack.c.h.b16 %v432
    %v2960 = vunpack.c.l.b16 %v433
    %v2961 = vunpack.c.h.b16 %v433
    %v2962 = vunpack.c.l.b16 %v434
    %v2963 = vunpack.c.h.b16 %v434
    %v2964 = vunpack.c.l.b16 %v435
    %v2965 = vunpack.c.h.b16 %v435
    %v2966 = vunpack.c.l.b16 %v436
    %v2967 = vunpack.c.h.b16 %v436
    %v2968 = vunpack.c.l.b16 %v437
    %v2969 = vunpack.c.h.b16 %v437
    %v2970 = vunpack.c.l.b16 %v438
    %v2971 = vunpack.c.h.b16 %v438
    %v2972 = vunpack.c.l.b16 %v439
    %v2973 = vunpack.c.h.b16 %v439
    %v2974 = vunpack.c.l.b16 %v440
    %v2975 = vunpack.c.h.b16 %v440
    %v2976 = vunpack.c.l.b16 %v441
    %v2977 = vunpack.c.h.b16 %v441
    %v2978 = vunpack.c.l.b16 %v442
    %v2979 = vunpack.c.h.b16 %v442
    %v2980 = vunpack.c.l.b16 %v443
    %v2981 = vunpack.c.h.b16 %v443
    %v2982 = vunpack.c.l.b16 %v444
    %v2983 = vunpack.c.h.b16 %v444
    %v2984 = vunpack.c.l.b16 %v445
    %v2985 = vunpack.c.h.b16 %v445
    %v2986 = vunpack.c.l.b16 %v446
    %v2987 = vunpack.c.h.b16 %v446
    %v2988 = vunpack.c.l.b16 %v447
    %v2989 = vunpack.c.h.b16 %v447
    %v2990 = vunpack.c.l.b16 %v448
    %v2991 = vunpack.c.h.b16 %v448
    %v2992 = vunpack.c.l.b16 %v449
    %v2993 = vunpack.c.h.b16 %v449
    %v2994 = vunpack.c.l.b16 %v450
    %v2995 = vunpack.c.h.b16 %v450
    %v2996 = vunpack.c.l.b16 %v451
    %v2997 = vunpack.c.h.b16 %v451
    %v2998 = vunpack.c.l.b16 %v452
    %v2999 = vunpack.c.h.b16 %v452
    %v3000 = vunpack.c.l.b16 %v453
    %v3001 = vunpack.c.h.b16 %v453
    %v3002 = vunpack.c.l.b16 %v454
    %v3003 = vunpack.c.h.b16 %v454
    %v3004 = vunpack.c.l.b16 %v455
    %v3005 = vunpack.c.h.b16 %v455
    %v3006 = vunpack.c.l.b16 %v456
    %v3007 = vunpack.c.h.b16 %v456
    %v3008 = vunpack.c.l.b16 %v457
    %v3009 = vunpack.c.h.b16 %v457
    %v3010 = vunpack.c.l.b16 %v458
    %v3011 = vunpack.c.h.b16 %v458
    %v3012 = vunpack.c.l.b16 %v459
    %v3013 = vunpack.c.h.b16 %v459
    %v3014 = vunpack.c.l.b16 %v460
    %v3015 = vunpack.c.h.b16 %v460
    %v3016 = vunpack.c.l.b16 %v461
    %v3017 = vunpack.c.h.b16 %v461
    %v3018 = vunpack.c.l.b16 %v462
    %v3019 = vunpack.c.h.b16 %v462
    %v3020 = vunpack.c.l.b16 %v463
    %v3021 = vunpack.c.h.b16 %v463
    %v3022 = vunpack.c.l.b16 %v464
    %v3023 = vunpack.c.h.b16 %v464
    %v3024 = vunpack.c.l.b16 %v465
    %v3025 = vunpack.c.h.b16 %v465
    %v3026 = vunpack.c.l.b16 %v466
    %v3027 = vunpack.c.h.b16 %v466
    %v3028 = vunpack.c.l.b16 %v467
    %v3029 = vunpack.c.h.b16 %v467
    %v3030 = vunpack.c.l.b16 %v468
    %v3031 = vunpack.c.h.b16 %v468
    %v3032 = vunpack.c.l.b16 %v469
    %v3033 = vunpack.c.h.b16 %v469
    %v3034 = vunpack.c.l.b16 %v470
    %v3035 = vunpack.c.h.b16 %v470
    %v3036 = vunpack.c.l.b16 %v471
    %v3037 = vunpack.c.h.b16 %v471
    %v3038 = vunpack.c.l.b16 %v472
    %v3039 = vunpack.c.h.b16 %v472
    %v3040 = vunpack.c.l.b16 %v473
    %v3041 = vunpack.c.h.b16 %v473
    %v3042 = vunpack.c.l.b16 %v474
    %v3043 = vunpack.c.h.b16 %v474
    %v3044 = vunpack.c.l.b16 %v475
    %v3045 = vunpack.c.h.b16 %v475
    %v3046 = vunpack.c.l.b16 %v476
    %v3047 = vunpack.c.h.b16 %v476
    %v3048 = vunpack.c.l.b16 %v477
    %v3049 = vunpack.c.h.b16 %v477
    %v3050 = vunpack.c.l.b16 %v478
    %v3051 = vunpack.c.h.b16 %v478
    %v3052 = vunpack.c.l.b16 %v479
    %v3053 = vunpack.c.h.b16 %v479
    %v3054 = vunpack.c.l.b16 %v480
    %v3055 = vunpack.c.h.b16 %v480
    %v3056 = vunpack.c.l.b16 %v481
    %v3057 = vunpack.c.h.b16 %v481
    %v3058 = vunpack.c.l.b16 %v482
    %v3059 = vunpack.c.h.b16 %v482
    %v3060 = vunpack.c.l.b16 %v483
    %v3061 = vunpack.c.h.b16 %v483
    %v3062 = vunpack.c.l.b16 %v484
    %v3063 = vunpack.c.h.b16 %v484
    %v3064 = vunpack.c.l.b16 %v485
    %v3065 = vunpack.c.h.b16 %v485
    %v3066 = vunpack.c.l.b16 %v486
    %v3067 = vunpack.c.h.b16 %v486
    %v3068 = vunpack.c.l.b16 %v487
    %v3069 = vunpack.c.h.b16 %v487
    %v3070 = vunpack.c.l.b16 %v488
    %v3071 = vunpack.c.h.b16 %v488
    %v3072 = vunpack.c.l.b16 %v489
    %v3073 = vunpack.c.h.b16 %v489
    %v3074 = vunpack.c.l.b16 %v490
    %v3075 = vunpack.c.h.b16 %v490
    %v3076 = vunpack.c.l.b16 %v491
    %v3077 = vunpack.c.h.b16 %v491
    %v3078 = vunpack.c.l.b16 %v492
    %v3079 = vunpack.c.h.b16 %v492
    %v3080 = vunpack.c.l.b16 %v493
    %v3081 = vunpack.c.h.b16 %v493
    %v3082 = vunpack.c.l.b16 %v494
    %v3083 = vunpack.c.h.b16 %v494
    %v3084 = vunpack.c.l.b16 %v495
    %v3085 = vunpack.c.h.b16 %v495
    %v3086 = vunpack.c.l.b16 %v496
    %v3087 = vunpack.c.h.b16 %v496
    %v3088 = vunpack.c.l.b16 %v497
    %v3089 = vunpack.c.h.b16 %v497
    %v3090 = vunpack.c.l.b16 %v498
    %v3091 = vunpack.c.h.b16 %v498
    %v3092 = vunpack.c.l.b16 %v499
    %v3093 = vunpack.c.h.b16 %v499
    %v3094 = vunpack.c.l.b16 %v500
    %v3095 = vunpack.c.h.b16 %v500
    %v3096 = vunpack.c.l.b16 %v501
    %v3097 = vunpack.c.h.b16 %v501
    %v3098 = vunpack.c.l.b16 %v502
    %v3099 = vunpack.c.h.b16 %v502
    %v3100 = vunpack.c.l.b16 %v503
    %v3101 = vunpack.c.h.b16 %v503
    %v3102 = vunpack.c.l.b16 %v504
    %v3103 = vunpack.c.h.b16 %v504
    %v3104 = vunpack.c.l.b16 %v505
    %v3105 = vunpack.c.h.b16 %v505
    %v3106 = vunpack.c.l.b16 %v506
    %v3107 = vunpack.c.h.b16 %v506
    %v3108 = vunpack.c.l.b16 %v507
    %v3109 = vunpack.c.h.b16 %v507
    %v3110 = vunpack.c.l.b16 %v508
    %v3111 = vunpack.c.h.b16 %v508
    %v3112 = vunpack.c.l.b16 %v509
    %v3113 = vunpack.c.h.b16 %v509
    %v3114 = vunpack.c.l.b16 %v510
    %v3115 = vunpack.c.h.b16 %v510
    %v3116 = vunpack.c.l.b16 %v511
    %v3117 = vunpack.c.h.b16 %v511
    %v3118 = vunpack.c.l.b16 %v512
    %v3119 = vunpack.c.h.b16 %v512
    %v3120 = vunpack.c.l.b16 %v513
    %v3121 = vunpack.c.h.b16 %v513
    %v3122 = vunpack.c.l.b16 %v514
    %v3123 = vunpack.c.h.b16 %v514
    %v3124 = vunpack.c.l.b16 %v515
    %v3125 = vunpack.c.h.b16 %v515
    %v3126 = vunpack.c.l.b16 %v516
    %v3127 = vunpack.c.h.b16 %v516
    %v3128 = vunpack.c.l.b16 %v517
    %v3129 = vunpack.c.h.b16 %v517
    %v3130 = vunpack.c.l.b16 %v518
    %v3131 = vunpack.c.h.b16 %v518
    %v3132 = vunpack.c.l.b16 %v519
    %v3133 = vunpack.c.h.b16 %v519
    %v3134 = vunpack.c.l.b16 %v520
    %v3135 = vunpack.c.h.b16 %v520
    %v3136 = vunpack.c.l.b16 %v521
    %v3137 = vunpack.c.h.b16 %v521
    %v3138 = vunpack.c.l.b16 %v522
    %v3139 = vunpack.c.h.b16 %v522
    %v3140 = vunpack.c.l.b16 %v523
    %v3141 = vunpack.c.h.b16 %v523
    %v3142 = vunpack.c.l.b16 %v524
    %v3143 = vunpack.c.h.b16 %v524
    %v3144 = vunpack.c.l.b16 %v525
    %v3145 = vunpack.c.h.b16 %v525
    %v3146 = vunpack.c.l.b16 %v526
    %v3147 = vunpack.c.h.b16 %v526
    %v3148 = vunpack.c.l.b16 %v527
    %v3149 = vunpack.c.h.b16 %v527
    %v3150 = vunpack.c.l.b16 %v528
    %v3151 = vunpack.c.h.b16 %v528
    %v3152 = vunpack.c.l.b16 %v529
    %v3153 = vunpack.c.h.b16 %v529
    %v3154 = vunpack.c.l.b16 %v530
    %v3155 = vunpack.c.h.b16 %v530
    %v3156 = vunpack.c.l.b16 %v531
    %v3157 = vunpack.c.h.b16 %v531
    %v3158 = vunpack.c.l.b16 %v532
    %v3159 = vunpack.c.h.b16 %v532
    %v3160 = vunpack.c.l.b16 %v533
    %v3161 = vunpack.c.h.b16 %v533
    %v3162 = vunpack.c.l.b16 %v534
    %v3163 = vunpack.c.h.b16 %v534
    %v3164 = vunpack.c.l.b16 %v535
    %v3165 = vunpack.c.h.b16 %v535
    %v3166 = vunpack.c.l.b16 %v536
    %v3167 = vunpack.c.h.b16 %v536
    %v3168 = vunpack.c.l.b16 %v537
    %v3169 = vunpack.c.h.b16 %v537
    %v3170 = vunpack.c.l.b16 %v538
    %v3171 = vunpack.c.h.b16 %v538
    %v3172 = vunpack.c.l.b16 %v539
    %v3173 = vunpack.c.h.b16 %v539
    %v3174 = vunpack.c.l.b16 %v540
    %v3175 = vunpack.c.h.b16 %v540
    %v3176 = vunpack.c.l.b16 %v541
    %v3177 = vunpack.c.h.b16 %v541
    %v3178 = vunpack.c.l.b16 %v542
    %v3179 = vunpack.c.h.b16 %v542
    %v3180 = vunpack.c.l.b16 %v543
    %v3181 = vunpack.c.h.b16 %v543
    %v3182 = vunpack.c.l.b16 %v544
    %v3183 = vunpack.c.h.b16 %v544
    %v3184 = vunpack.c.l.b16 %v545
    %v3185 = vunpack.c.h.b16 %v545
    %v3186 = vunpack.c.l.b16 %v546
    %v3187 = vunpack.c.h.b16 %v546
    %v3188 = vunpack.c.l.b16 %v547
    %v3189 = vunpack.c.h.b16 %v547
    %v3190 = vunpack.c.l.b16 %v548
    %v3191 = vunpack.c.h.b16 %v548
    %v3192 = vunpack.c.l.b16 %v549
    %v3193 = vunpack.c.h.b16 %v549
    %v3194 = vunpack.c.l.b16 %v550
    %v3195 = vunpack.c.h.b16 %v550
    %v3196 = vunpack.c.l.b16 %v551
    %v3197 = vunpack.c.h.b16 %v551
    %v3198 = vunpack.c.l.b16 %v552
    %v3199 = vunpack.c.h.b16 %v552
    %v3200 = vunpack.c.l.b16 %v553
    %v3201 = vunpack.c.h.b16 %v553
    %v3202 = vunpack.c.l.b16 %v554
    %v3203 = vunpack.c.h.b16 %v554
    %v3204 = vunpack.c.l.b16 %v555
    %v3205 = vunpack.c.h.b16 %v555
    %v3206 = vunpack.c.l.b16 %v556
    %v3207 = vunpack.c.h.b16 %v556
    %v3208 = vunpack.c.l.b16 %v557
    %v3209 = vunpack.c.h.b16 %v557
    %v3210 = vunpack.c.l.b16 %v558
    %v3211 = vunpack.c.h.b16 %v558
    %v3212 = vunpack.c.l.b16 %v559
    %v3213 = vunpack.c.h.b16 %v559
    %v3214 = vunpack.c.l.b16 %v560
    %v3215 = vunpack.c.h.b16 %v560
    %v3216 = vunpack.c.l.b16 %v561
    %v3217 = vunpack.c.h.b16 %v561
    %v3218 = vunpack.c.l.b16 %v562
    %v3219 = vunpack.c.h.b16 %v562
    %v3220 = vunpack.c.l.b16 %v563
    %v3221 = vunpack.c.h.b16 %v563
    %v3222 = vunpack.c.l.b16 %v564
    %v3223 = vunpack.c.h.b16 %v564
    %v3224 = vunpack.c.l.b16 %v565
    %v3225 = vunpack.c.h.b16 %v565
    %v3226 = vunpack.c.l.b16 %v566
    %v3227 = vunpack.c.h.b16 %v566
    %v3228 = vunpack.c.l.b16 %v567
    %v3229 = vunpack.c.h.b16 %v567
    %v3230 = vunpack.c.l.b16 %v568
    %v3231 = vunpack.c.h.b16 %v568
    %v3232 = vunpack.c.l.b16 %v569
    %v3233 = vunpack.c.h.b16 %v569
    %v3234 = vunpack.c.l.b16 %v570
    %v3235 = vunpack.c.h.b16 %v570
    %v3236 = vunpack.c.l.b16 %v571
    %v3237 = vunpack.c.h.b16 %v571
    %v3238 = vunpack.c.l.b16 %v572
    %v3239 = vunpack.c.h.b16 %v572
    %v3240 = vunpack.c.l.b16 %v573
    %v3241 = vunpack.c.h.b16 %v573
    %v3242 = vunpack.c.l.b16 %v574
    %v3243 = vunpack.c.h.b16 %v574
    %v3244 = vunpack.c.l.b16 %v575
    %v3245 = vunpack.c.h.b16 %v575
    %v3246 = vunpack.c.l.b16 %v576
    %v3247 = vunpack.c.h.b16 %v576
    %v3248 = vunpack.c.l.b16 %v577
    %v3249 = vunpack.c.h.b16 %v577
    %v3250 = vunpack.c.l.b16 %v578
    %v3251 = vunpack.c.h.b16 %v578
    %v3252 = vunpack.c.l.b16 %v579
    %v3253 = vunpack.c.h.b16 %v579
    %v3254 = vunpack.c.l.b16 %v580
    %v3255 = vunpack.c.h.b16 %v580
    %v3256 = vunpack.c.l.b16 %v581
    %v3257 = vunpack.c.h.b16 %v581
    %v3258 = vunpack.c.l.b16 %v582
    %v3259 = vunpack.c.h.b16 %v582
    %v3260 = vunpack.c.l.b16 %v583
    %v3261 = vunpack.c.h.b16 %v583
    %v3262 = vunpack.c.l.b16 %v584
    %v3263 = vunpack.c.h.b16 %v584
    %v3264 = vunpack.c.l.b16 %v585
    %v3265 = vunpack.c.h.b16 %v585
    %v3266 = vunpack.c.l.b16 %v586
    %v3267 = vunpack.c.h.b16 %v586
    %v3268 = vunpack.c.l.b16 %v587
    %v3269 = vunpack.c.h.b16 %v587
    %v3270 = vunpack.c.l.b16 %v588
    %v3271 = vunpack.c.h.b16 %v588
    %v3272 = vunpack.c.l.b16 %v589
    %v3273 = vunpack.c.h.b16 %v589
    %v3274 = vunpack.c.l.b16 %v590
    %v3275 = vunpack.c.h.b16 %v590
    %v3276 = vunpack.c.l.b16 %v591
    %v3277 = vunpack.c.h.b16 %v591
    %v3278 = vunpack.c.l.b16 %v592
    %v3279 = vunpack.c.h.b16 %v592
    %v3280 = vunpack.c.l.b16 %v593
    %v3281 = vunpack.c.h.b16 %v593
    %v3282 = vunpack.c.l.b16 %v594
    %v3283 = vunpack.c.h.b16 %v594
    %v3284 = vunpack.c.l.b16 %v595
    %v3285 = vunpack.c.h.b16 %v595
    %v3286 = vunpack.c.l.b16 %v596
    %v3287 = vunpack.c.h.b16 %v596
    %v3288 = vunpack.c.l.b16 %v597
    %v3289 = vunpack.c.h.b16 %v597
    %v3290 = vunpack.c.l.b16 %v598
    %v3291 = vunpack.c.h.b16 %v598
    %v3292 = vunpack.c.l.b16 %v599
    %v3293 = vunpack.c.h.b16 %v599
    %v3294 = vunpack.c.l.b16 %v600
    %v3295 = vunpack.c.h.b16 %v600
    %v3296 = vunpack.c.l.b16 %v601
    %v3297 = vunpack.c.h.b16 %v601
    %v3298 = vunpack.c.l.b16 %v602
    %v3299 = vunpack.c.h.b16 %v602
    %v3300 = vunpack.c.l.b16 %v603
    %v3301 = vunpack.c.h.b16 %v603
    %v3302 = vunpack.c.l.b16 %v604
    %v3303 = vunpack.c.h.b16 %v604
    %v3304 = vunpack.c.l.b16 %v605
    %v3305 = vunpack.c.h.b16 %v605
    %v3306 = vunpack.c.l.b16 %v606
    %v3307 = vunpack.c.h.b16 %v606
    %v3308 = vunpack.c.l.b16 %v607
    %v3309 = vunpack.c.h.b16 %v607
    %v3310 = vunpack.c.l.b16 %v608
    %v3311 = vunpack.c.h.b16 %v608
    %v3312 = vunpack.c.l.b16 %v609
    %v3313 = vunpack.c.h.b16 %v609
    %v3314 = vunpack.c.l.b16 %v610
    %v3315 = vunpack.c.h.b16 %v610
    %v3316 = vunpack.c.l.b16 %v611
    %v3317 = vunpack.c.h.b16 %v611
    %v3318 = vunpack.c.l.b16 %v612
    %v3319 = vunpack.c.h.b16 %v612
    %v3320 = vunpack.c.l.b16 %v613
    %v3321 = vunpack.c.h.b16 %v613
    %v3322 = vunpack.c.l.b16 %v614
    %v3323 = vunpack.c.h.b16 %v614
    %v3324 = vunpack.c.l.b16 %v615
    %v3325 = vunpack.c.h.b16 %v615
    %v3326 = vunpack.c.l.b16 %v616
    %v3327 = vunpack.c.h.b16 %v616
    %v3328 = vunpack.c.l.b16 %v617
    %v3329 = vunpack.c.h.b16 %v617
    %v3330 = vunpack.c.l.b16 %v618
    %v3331 = vunpack.c.h.b16 %v618
    %v3332 = vunpack.c.l.b16 %v619
    %v3333 = vunpack.c.h.b16 %v619
    %v3334 = vunpack.c.l.b16 %v620
    %v3335 = vunpack.c.h.b16 %v620
    %v3336 = vunpack.c.l.b16 %v621
    %v3337 = vunpack.c.h.b16 %v621
    %v3338 = vunpack.c.l.b16 %v622
    %v3339 = vunpack.c.h.b16 %v622
    %v3340 = vunpack.c.l.b16 %v623
    %v3341 = vunpack.c.h.b16 %v623
    %v3342 = vunpack.c.l.b16 %v624
    %v3343 = vunpack.c.h.b16 %v624
    %v3344 = vunpack.c.l.b16 %v625
    %v3345 = vunpack.c.h.b16 %v625
    %v3346 = vunpack.c.l.b16 %v626
    %v3347 = vunpack.c.h.b16 %v626
    %v3348 = vunpack.c.l.b16 %v627
    %v3349 = vunpack.c.h.b16 %v627
    %v3350 = vunpack.c.l.b16 %v628
    %v3351 = vunpack.c.h.b16 %v628
    %v3352 = vunpack.c.l.b16 %v629
    %v3353 = vunpack.c.h.b16 %v629
    %v3354 = vunpack.c.l.b16 %v630
    %v3355 = vunpack.c.h.b16 %v630
    %v3356 = vunpack.c.l.b16 %v631
    %v3357 = vunpack.c.h.b16 %v631
    %v3358 = vunpack.c.l.b16 %v632
    %v3359 = vunpack.c.h.b16 %v632
    %v3360 = vunpack.c.l.b16 %v633
    %v3361 = vunpack.c.h.b16 %v633
    %v3362 = vunpack.c.l.b16 %v634
    %v3363 = vunpack.c.h.b16 %v634
    %v3364 = vunpack.c.l.b16 %v635
    %v3365 = vunpack.c.h.b16 %v635
    %v3366 = vunpack.c.l.b16 %v636
    %v3367 = vunpack.c.h.b16 %v636
    %v3368 = vunpack.c.l.b16 %v637
    %v3369 = vunpack.c.h.b16 %v637
    %v3370 = vunpack.c.l.b16 %v638
    %v3371 = vunpack.c.h.b16 %v638
    %v3372 = vunpack.c.l.b16 %v639
    %v3373 = vunpack.c.h.b16 %v639
    %v3374 = vunpack.c.l.b16 %v640
    %v3375 = vunpack.c.h.b16 %v640
    %v3376 = vunpack.c.l.b16 %v641
    %v3377 = vunpack.c.h.b16 %v641
    %v3378 = vunpack.c.l.b16 %v642
    %v3379 = vunpack.c.h.b16 %v642
    %v3380 = vunpack.c.l.b16 %v643
    %v3381 = vunpack.c.h.b16 %v643
    %v3382 = vunpack.c.l.b16 %v644
    %v3383 = vunpack.c.h.b16 %v644
    %v3384 = vunpack.c.l.b16 %v645
    %v3385 = vunpack.c.h.b16 %v645
    %v3386 = vunpack.c.l.b16 %v646
    %v3387 = vunpack.c.h.b16 %v646
    %v3388 = vunpack.c.l.b16 %v647
    %v3389 = vunpack.c.h.b16 %v647
    %v3390 = vunpack.c.l.b16 %v648
    %v3391 = vunpack.c.h.b16 %v648
    %v3392 = vunpack.c.l.b16 %v649
    %v3393 = vunpack.c.h.b16 %v649
    %v3394 = vunpack.c.l.b16 %v650
    %v3395 = vunpack.c.h.b16 %v650
    %v3396 = vunpack.c.l.b16 %v651
    %v3397 = vunpack.c.h.b16 %v651
    %v3398 = vunpack.c.l.b16 %v652
    %v3399 = vunpack.c.h.b16 %v652
    %v3400 = vunpack.c.l.b16 %v653
    %v3401 = vunpack.c.h.b16 %v653
    %v3402 = vunpack.c.l.b16 %v654
    %v3403 = vunpack.c.h.b16 %v654
    %v3404 = vunpack.c.l.b16 %v655
    %v3405 = vunpack.c.h.b16 %v655
    %v3406 = vunpack.c.l.b16 %v656
    %v3407 = vunpack.c.h.b16 %v656
    %v3408 = vunpack.c.l.b16 %v657
    %v3409 = vunpack.c.h.b16 %v657
    %v3410 = vunpack.c.l.b16 %v658
    %v3411 = vunpack.c.h.b16 %v658
    %v3412 = vunpack.c.l.b16 %v659
    %v3413 = vunpack.c.h.b16 %v659
    %v3414 = vunpack.c.l.b16 %v660
    %v3415 = vunpack.c.h.b16 %v660
    %v3416 = vunpack.c.l.b16 %v661
    %v3417 = vunpack.c.h.b16 %v661
    %v3418 = vunpack.c.l.b16 %v662
    %v3419 = vunpack.c.h.b16 %v662
    %v3420 = vunpack.c.l.b16 %v663
    %v3421 = vunpack.c.h.b16 %v663
    %v3422 = vunpack.c.l.b16 %v664
    %v3423 = vunpack.c.h.b16 %v664
    %v3424 = vunpack.c.l.b16 %v665
    %v3425 = vunpack.c.h.b16 %v665
    %v3426 = vunpack.c.l.b16 %v666
    %v3427 = vunpack.c.h.b16 %v666
    %v3428 = vunpack.c.l.b16 %v667
    %v3429 = vunpack.c.h.b16 %v667
    %v3430 = vunpack.c.l.b16 %v668
    %v3431 = vunpack.c.h.b16 %v668
    %v3432 = vunpack.c.l.b16 %v669
    %v3433 = vunpack.c.h.b16 %v669
    %v3434 = vunpack.c.l.b16 %v670
    %v3435 = vunpack.c.h.b16 %v670
    %v3436 = vunpack.c.l.b16 %v671
    %v3437 = vunpack.c.h.b16 %v671
    %v3438 = vunpack.c.l.b16 %v672
    %v3439 = vunpack.c.h.b16 %v672
    %v3440 = vunpack.c.l.b16 %v673
    %v3441 = vunpack.c.h.b16 %v673
    %v3442 = vunpack.c.l.b16 %v674
    %v3443 = vunpack.c.h.b16 %v674
    %v3444 = vunpack.c.l.b16 %v675
    %v3445 = vunpack.c.h.b16 %v675
    %v3446 = vunpack.c.l.b16 %v676
    %v3447 = vunpack.c.h.b16 %v676
    %v3448 = vunpack.c.l.b16 %v677
    %v3449 = vunpack.c.h.b16 %v677
    %v3450 = vunpack.c.l.b16 %v678
    %v3451 = vunpack.c.h.b16 %v678
    %v3452 = vunpack.c.l.b16 %v679
    %v3453 = vunpack.c.h.b16 %v679
    %v3454 = vunpack.c.l.b16 %v680
    %v3455 = vunpack.c.h.b16 %v680
    %v3456 = vunpack.c.l.b16 %v681
    %v3457 = vunpack.c.h.b16 %v681
    %v3458 = vunpack.c.l.b16 %v682
    %v3459 = vunpack.c.h.b16 %v682
    %v3460 = vunpack.c.l.b16 %v683
    %v3461 = vunpack.c.h.b16 %v683
    %v3462 = vunpack.c.l.b16 %v684
    %v3463 = vunpack.c.h.b16 %v684
    %v3464 = vunpack.c.l.b16 %v685
    %v3465 = vunpack.c.h.b16 %v685
    %v3466 = vunpack.c.l.b16 %v686
    %v3467 = vunpack.c.h.b16 %v686
    %v3468 = vunpack.c.l.b16 %v687
    %v3469 = vunpack.c.h.b16 %v687
    %v3470 = vunpack.c.l.b16 %v688
    %v3471 = vunpack.c.h.b16 %v688
    %v3472 = vunpack.c.l.b16 %v689
    %v3473 = vunpack.c.h.b16 %v689
    %v3474 = vunpack.c.l.b16 %v690
    %v3475 = vunpack.c.h.b16 %v690
    %v3476 = vunpack.c.l.b16 %v691
    %v3477 = vunpack.c.h.b16 %v691
    %v3478 = vunpack.c.l.b16 %v692
    %v3479 = vunpack.c.h.b16 %v692
    %v3480 = vunpack.c.l.b16 %v693
    %v3481 = vunpack.c.h.b16 %v693
    %v3482 = vunpack.c.l.b16 %v694
    %v3483 = vunpack.c.h.b16 %v694
    %v3484 = vunpack.c.l.b16 %v695
    %v3485 = vunpack.c.h.b16 %v695
    %v3486 = vunpack.c.l.b16 %v696
    %v3487 = vunpack.c.h.b16 %v696
    %v3488 = vunpack.c.l.b16 %v697
    %v3489 = vunpack.c.h.b16 %v697
    %v3490 = vunpack.c.l.b16 %v698
    %v3491 = vunpack.c.h.b16 %v698
    %v3492 = vunpack.c.l.b16 %v699
    %v3493 = vunpack.c.h.b16 %v699
    %v3494 = vunpack.c.l.b16 %v700
    %v3495 = vunpack.c.h.b16 %v700
    %v3496 = vunpack.c.l.b16 %v701
    %v3497 = vunpack.c.h.b16 %v701
    %v3498 = vunpack.c.l.b16 %v702
    %v3499 = vunpack.c.h.b16 %v702
    %v3500 = vunpack.c.l.b16 %v703
    %v3501 = vunpack.c.h.b16 %v703
    %v3502 = vunpack.c.l.b16 %v704
    %v3503 = vunpack.c.h.b16 %v704
    %v3504 = vunpack.c.l.b16 %v705
    %v3505 = vunpack.c.h.b16 %v705
    %v3506 = vunpack.c.l.b16 %v706
    %v3507 = vunpack.c.h.b16 %v706
    %v3508 = vunpack.c.l.b16 %v707
    %v3509 = vunpack.c.h.b16 %v707
    %v3510 = vunpack.c.l.b16 %v708
    %v3511 = vunpack.c.h.b16 %v708
    %v3512 = vunpack.c.l.b16 %v709
    %v3513 = vunpack.c.h.b16 %v709
    %v3514 = vunpack.c.l.b16 %v710
    %v3515 = vunpack.c.h.b16 %v710
    %v3516 = vunpack.c.l.b16 %v711
    %v3517 = vunpack.c.h.b16 %v711
    %v3518 = vunpack.c.l.b16 %v712
    %v3519 = vunpack.c.h.b16 %v712
    %v3520 = vunpack.c.l.b16 %v713
    %v3521 = vunpack.c.h.b16 %v713
    %v3522 = vunpack.c.l.b16 %v714
    %v3523 = vunpack.c.h.b16 %v714
    %v3524 = vunpack.c.l.b16 %v715
    %v3525 = vunpack.c.h.b16 %v715
    %v3526 = vunpack.c.l.b16 %v716
    %v3527 = vunpack.c.h.b16 %v716
    %v3528 = vunpack.c.l.b16 %v717
    %v3529 = vunpack.c.h.b16 %v717
    %v3530 = vunpack.c.l.b16 %v718
    %v3531 = vunpack.c.h.b16 %v718
    %v3532 = vunpack.c.l.b16 %v719
    %v3533 = vunpack.c.h.b16 %v719
    %v3534 = vunpack.c.l.b16 %v720
    %v3535 = vunpack.c.h.b16 %v720
    %v3536 = vunpack.c.l.b16 %v721
    %v3537 = vunpack.c.h.b16 %v721
    %v3538 = vunpack.c.l.b16 %v722
    %v3539 = vunpack.c.h.b16 %v722
    %v3540 = vunpack.c.l.b16 %v723
    %v3541 = vunpack.c.h.b16 %v723
    %v3542 = vunpack.c.l.b16 %v724
    %v3543 = vunpack.c.h.b16 %v724
    %v3544 = vunpack.c.l.b16 %v725
    %v3545 = vunpack.c.h.b16 %v725
    %v3546 = vunpack.c.l.b16 %v726
    %v3547 = vunpack.c.h.b16 %v726
    %v3548 = vunpack.c.l.b16 %v727
    %v3549 = vunpack.c.h.b16 %v727
    %v3550 = vunpack.c.l.b16 %v728
    %v3551 = vunpack.c.h.b16 %v728
    %v3552 = vunpack.c.l.b16 %v729
    %v3553 = vunpack.c.h.b16 %v729
    %v3554 = vunpack.c.l.b16 %v730
    %v3555 = vunpack.c.h.b16 %v730
    %v3556 = vunpack.c.l.b16 %v731
    %v3557 = vunpack.c.h.b16 %v731
    %v3558 = vunpack.c.l.b16 %v732
    %v3559 = vunpack.c.h.b16 %v732
    %v3560 = vunpack.c.l.b16 %v733
    %v3561 = vunpack.c.h.b16 %v733
    %v3562 = vunpack.c.l.b16 %v734
    %v3563 = vunpack.c.h.b16 %v734
    %v3564 = vunpack.c.l.b16 %v735
    %v3565 = vunpack.c.h.b16 %v735
    %v3566 = vunpack.c.l.b16 %v736
    %v3567 = vunpack.c.h.b16 %v736
    %v3568 = vunpack.c.l.b16 %v737
    %v3569 = vunpack.c.h.b16 %v737
    %v3570 = vunpack.c.l.b16 %v738
    %v3571 = vunpack.c.h.b16 %v738
    %v3572 = vunpack.c.l.b16 %v739
    %v3573 = vunpack.c.h.b16 %v739
    %v3574 = vunpack.c.l.b16 %v740
    %v3575 = vunpack.c.h.b16 %v740
    %v3576 = vunpack.c.l.b16 %v741
    %v3577 = vunpack.c.h.b16 %v741
    %v3578 = vunpack.c.l.b16 %v742
    %v3579 = vunpack.c.h.b16 %v742
    %v3580 = vunpack.c.l.b16 %v743
    %v3581 = vunpack.c.h.b16 %v743
    %v3582 = vunpack.c.l.b16 %v744
    %v3583 = vunpack.c.h.b16 %v744
    %v3584 = vunpack.c.l.b16 %v745
    %v3585 = vunpack.c.h.b16 %v745
    %v3586 = vunpack.c.l.b16 %v746
    %v3587 = vunpack.c.h.b16 %v746
    %v3588 = vunpack.c.l.b16 %v747
    %v3589 = vunpack.c.h.b16 %v747
    %v3590 = vunpack.c.l.b16 %v748
    %v3591 = vunpack.c.h.b16 %v748
    %v3592 = vunpack.c.l.b16 %v749
    %v3593 = vunpack.c.h.b16 %v749
    %v3594 = vunpack.c.l.b16 %v750
    %v3595 = vunpack.c.h.b16 %v750
    %v3596 = vunpack.c.l.b16 %v751
    %v3597 = vunpack.c.h.b16 %v751
    %v3598 = vunpack.c.l.b16 %v752
    %v3599 = vunpack.c.h.b16 %v752
    %v3600 = vunpack.c.l.b16 %v753
    %v3601 = vunpack.c.h.b16 %v753
    %v3602 = vunpack.c.l.b16 %v754
    %v3603 = vunpack.c.h.b16 %v754
    %v3604 = vunpack.c.l.b16 %v755
    %v3605 = vunpack.c.h.b16 %v755
    %v3606 = vunpack.c.l.b16 %v756
    %v3607 = vunpack.c.h.b16 %v756
    %v3608 = vunpack.c.l.b16 %v757
    %v3609 = vunpack.c.h.b16 %v757
    %v3610 = vunpack.c.l.b16 %v758
    %v3611 = vunpack.c.h.b16 %v758
    %v3612 = vunpack.c.l.b16 %v759
    %v3613 = vunpack.c.h.b16 %v759
    %v3614 = vunpack.c.l.b16 %v760
    %v3615 = vunpack.c.h.b16 %v760
    %v3616 = vunpack.c.l.b16 %v761
    %v3617 = vunpack.c.h.b16 %v761
    %v3618 = vunpack.c.l.b16 %v762
    %v3619 = vunpack.c.h.b16 %v762
    %v3620 = vunpack.c.l.b16 %v763
    %v3621 = vunpack.c.h.b16 %v763
    %v3622 = vunpack.c.l.b16 %v764
    %v3623 = vunpack.c.h.b16 %v764
    %v3624 = vunpack.c.l.b16 %v765
    %v3625 = vunpack.c.h.b16 %v765
    %v3626 = vunpack.c.l.b16 %v766
    %v3627 = vunpack.c.h.b16 %v766
    %v3628 = vunpack.c.l.b16 %v767
    %v3629 = vunpack.c.h.b16 %v767
    %v3630 = vunpack.c.l.b16 %v768
    %v3631 = vunpack.c.h.b16 %v768
    %v3632 = vunpack.c.l.b16 %v769
    %v3633 = vunpack.c.h.b16 %v769
    %v3634 = vunpack.c.l.b16 %v770
    %v3635 = vunpack.c.h.b16 %v770
    %v3636 = vunpack.c.l.b16 %v771
    %v3637 = vunpack.c.h.b16 %v771
    %v3638 = vunpack.c.l.b16 %v772
    %v3639 = vunpack.c.h.b16 %v772
    %v3640 = vunpack.c.l.b16 %v773
    %v3641 = vunpack.c.h.b16 %v773
    %v3642 = vunpack.c.l.b16 %v774
    %v3643 = vunpack.c.h.b16 %v774
    %v3644 = vunpack.c.l.b16 %v775
    %v3645 = vunpack.c.h.b16 %v775
    %v3646 = vunpack.c.l.b16 %v776
    %v3647 = vunpack.c.h.b16 %v776
    %v3648 = vunpack.c.l.b16 %v777
    %v3649 = vunpack.c.h.b16 %v777
    %v3650 = vunpack.c.l.b16 %v778
    %v3651 = vunpack.c.h.b16 %v778
    %v3652 = vunpack.c.l.b16 %v779
    %v3653 = vunpack.c.h.b16 %v779
    %v3654 = vunpack.c.l.b16 %v780
    %v3655 = vunpack.c.h.b16 %v780
    %v3656 = vunpack.c.l.b16 %v781
    %v3657 = vunpack.c.h.b16 %v781
    %v3658 = vunpack.c.l.b16 %v782
    %v3659 = vunpack.c.h.b16 %v782
    %v3660 = vunpack.c.l.b16 %v783
    %v3661 = vunpack.c.h.b16 %v783
    %v3662 = vunpack.c.l.b16 %v784
    %v3663 = vunpack.c.h.b16 %v784
    %v3664 = vunpack.c.l.b16 %v785
    %v3665 = vunpack.c.h.b16 %v785
    %v3666 = vunpack.c.l.b16 %v786
    %v3667 = vunpack.c.h.b16 %v786
    %v3668 = vunpack.c.l.b16 %v787
    %v3669 = vunpack.c.h.b16 %v787
    %v3670 = vunpack.c.l.b16 %v788
    %v3671 = vunpack.c.h.b16 %v788
    %v3672 = vunpack.c.l.b16 %v789
    %v3673 = vunpack.c.h.b16 %v789
    %v3674 = vunpack.c.l.b16 %v790
    %v3675 = vunpack.c.h.b16 %v790
    %v3676 = vunpack.c.l.b16 %v791
    %v3677 = vunpack.c.h.b16 %v791
    %v3678 = vunpack.c.l.b16 %v792
    %v3679 = vunpack.c.h.b16 %v792
    %v3680 = vunpack.c.l.b16 %v793
    %v3681 = vunpack.c.h.b16 %v793
    %v3682 = vunpack.c.l.b16 %v794
    %v3683 = vunpack.c.h.b16 %v794
    %v3684 = vunpack.c.l.b16 %v795
    %v3685 = vunpack.c.h.b16 %v795
    %v3686 = vunpack.c.l.b16 %v796
    %v3687 = vunpack.c.h.b16 %v796
    %v3688 = vunpack.c.l.b16 %v797
    %v3689 = vunpack.c.h.b16 %v797
    %v3690 = vunpack.c.l.b16 %v798
    %v3691 = vunpack.c.h.b16 %v798
    %v3692 = vunpack.c.l.b16 %v799
    %v3693 = vunpack.c.h.b16 %v799
    %v3694 = vunpack.c.l.b16 %v800
    %v3695 = vunpack.c.h.b16 %v800
    %v3696 = vunpack.c.l.b16 %v801
    %v3697 = vunpack.c.h.b16 %v801
    %v3698 = vunpack.c.l.b16 %v802
    %v3699 = vunpack.c.h.b16 %v802
    %v3700 = vunpack.c.l.b16 %v803
    %v3701 = vunpack.c.h.b16 %v803
    %v3702 = vunpack.c.l.b16 %v804
    %v3703 = vunpack.c.h.b16 %v804
    %v3704 = vunpack.c.l.b16 %v805
    %v3705 = vunpack.c.h.b16 %v805
    %v3706 = vunpack.c.l.b16 %v806
    %v3707 = vunpack.c.h.b16 %v806
    %v3708 = vunpack.c.l.b16 %v807
    %v3709 = vunpack.c.h.b16 %v807
    %v3710 = vunpack.c.l.b16 %v808
    %v3711 = vunpack.c.h.b16 %v808
    %v3712 = vunpack.c.l.b16 %v809
    %v3713 = vunpack.c.h.b16 %v809
    %v3714 = vunpack.c.l.b16 %v810
    %v3715 = vunpack.c.h.b16 %v810
    %v3716 = vunpack.c.l.b16 %v811
    %v3717 = vunpack.c.h.b16 %v811
    %v3718 = vunpack.c.l.b16 %v812
    %v3719 = vunpack.c.h.b16 %v812
    %v3720 = vunpack.c.l.b16 %v813
    %v3721 = vunpack.c.h.b16 %v813
    %v3722 = vunpack.c.l.b16 %v814
    %v3723 = vunpack.c.h.b16 %v814
    %v3724 = vunpack.c.l.b16 %v815
    %v3725 = vunpack.c.h.b16 %v815
    %v3726 = vunpack.c.l.b16 %v816
    %v3727 = vunpack.c.h.b16 %v816
    %v3728 = vunpack.c.l.b16 %v817
    %v3729 = vunpack.c.h.b16 %v817
    %v3730 = vunpack.c.l.b16 %v818
    %v3731 = vunpack.c.h.b16 %v818
    %v3732 = vunpack.c.l.b16 %v819
    %v3733 = vunpack.c.h.b16 %v819
    %v3734 = vunpack.c.l.b16 %v820
    %v3735 = vunpack.c.h.b16 %v820
    %v3736 = vunpack.c.l.b16 %v821
    %v3737 = vunpack.c.h.b16 %v821
    %v3738 = vunpack.c.l.b16 %v822
    %v3739 = vunpack.c.h.b16 %v822
    %v3740 = vunpack.c.l.b16 %v823
    %v3741 = vunpack.c.h.b16 %v823
    %v3742 = vunpack.c.l.b16 %v824
    %v3743 = vunpack.c.h.b16 %v824
    %v3744 = vunpack.c.l.b16 %v825
    %v3745 = vunpack.c.h.b16 %v825
    %v3746 = vunpack.c.l.b16 %v826
    %v3747 = vunpack.c.h.b16 %v826
    %v3748 = vunpack.c.l.b16 %v827
    %v3749 = vunpack.c.h.b16 %v827
    %v3750 = vunpack.c.l.b16 %v828
    %v3751 = vunpack.c.h.b16 %v828
    %v3752 = vunpack.c.l.b16 %v829
    %v3753 = vunpack.c.h.b16 %v829
    %v3754 = vunpack.c.l.b16 %v830
    %v3755 = vunpack.c.h.b16 %v830
    %v3756 = vunpack.c.l.b16 %v831
    %v3757 = vunpack.c.h.b16 %v831
    %v3758 = vunpack.c.l.b16 %v832
    %v3759 = vunpack.c.h.b16 %v832
    %v3760 = vunpack.c.l.b16 %v833
    %v3761 = vunpack.c.h.b16 %v833
    %v3762 = vunpack.c.l.b16 %v834
    %v3763 = vunpack.c.h.b16 %v834
    %v3764 = vunpack.c.l.b16 %v835
    %v3765 = vunpack.c.h.b16 %v835
    %v3766 = vunpack.c.l.b16 %v836
    %v3767 = vunpack.c.h.b16 %v836
    %v3768 = vunpack.c.l.b16 %v837
    %v3769 = vunpack.c.h.b16 %v837
    %v3770 = vunpack.c.l.b16 %v838
    %v3771 = vunpack.c.h.b16 %v838
    %v3772 = vunpack.c.l.b16 %v839
    %v3773 = vunpack.c.h.b16 %v839
    %v3774 = vunpack.c.l.b16 %v840
    %v3775 = vunpack.c.h.b16 %v840
    %v3776 = vunpack.c.l.b16 %v841
    %v3777 = vunpack.c.h.b16 %v841
    %v3778 = vunpack.c.l.b16 %v842
    %v3779 = vunpack.c.h.b16 %v842
    %v3780 = vunpack.c.l.b16 %v843
    %v3781 = vunpack.c.h.b16 %v843
    %v3782 = vunpack.c.l.b16 %v844
    %v3783 = vunpack.c.h.b16 %v844
    %v3784 = vunpack.c.l.b16 %v845
    %v3785 = vunpack.c.h.b16 %v845
    %v3786 = vunpack.c.l.b16 %v846
    %v3787 = vunpack.c.h.b16 %v846
    %v3788 = vunpack.c.l.b16 %v847
    %v3789 = vunpack.c.h.b16 %v847
    %v3790 = vunpack.c.l.b16 %v848
    %v3791 = vunpack.c.h.b16 %v848
    %v3792 = vunpack.c.l.b16 %v849
    %v3793 = vunpack.c.h.b16 %v849
    %v3794 = vunpack.c.l.b16 %v850
    %v3795 = vunpack.c.h.b16 %v850
    %v3796 = vunpack.c.l.b16 %v851
    %v3797 = vunpack.c.h.b16 %v851
    %v3798 = vunpack.c.l.b16 %v852
    %v3799 = vunpack.c.h.b16 %v852
    %v3800 = vunpack.c.l.b16 %v853
    %v3801 = vunpack.c.h.b16 %v853
    %v3802 = vunpack.c.l.b16 %v854
    %v3803 = vunpack.c.h.b16 %v854
    %v3804 = vunpack.c.l.b16 %v855
    %v3805 = vunpack.c.h.b16 %v855
    %v3806 = vunpack.c.l.b16 %v856
    %v3807 = vunpack.c.h.b16 %v856
    %v3808 = vunpack.c.l.b16 %v857
    %v3809 = vunpack.c.h.b16 %v857
    %v3810 = vunpack.c.l.b16 %v858
    %v3811 = vunpack.c.h.b16 %v858
    %v3812 = vunpack.c.l.b16 %v859
    %v3813 = vunpack.c.h.b16 %v859
    %v3814 = vunpack.c.l.b16 %v860
    %v3815 = vunpack.c.h.b16 %v860
    %v3816 = vunpack.c.l.b16 %v861
    %v3817 = vunpack.c.h.b16 %v861
    %v3818 = vunpack.c.l.b16 %v862
    %v3819 = vunpack.c.h.b16 %v862
    %v3820 = vunpack.c.l.b16 %v863
    %v3821 = vunpack.c.h.b16 %v863
    %v3822 = vunpack.c.l.b16 %v864
    %v3823 = vunpack.c.h.b16 %v864
    %v3824 = vunpack.c.l.b16 %v865
    %v3825 = vunpack.c.h.b16 %v865
    %v3826 = vunpack.c.l.b16 %v866
    %v3827 = vunpack.c.h.b16 %v866
    %v3828 = vunpack.c.l.b16 %v867
    %v3829 = vunpack.c.h.b16 %v867
    %v3830 = vunpack.c.l.b16 %v868
    %v3831 = vunpack.c.h.b16 %v868
    %v3832 = vunpack.c.l.b16 %v869
    %v3833 = vunpack.c.h.b16 %v869
    %v3834 = vunpack.c.l.b16 %v870
    %v3835 = vunpack.c.h.b16 %v870
    %v3836 = vunpack.c.l.b16 %v871
    %v3837 = vunpack.c.h.b16 %v871
    %v3838 = vunpack.c.l.b16 %v872
    %v3839 = vunpack.c.h.b16 %v872
    %v3840 = vunpack.c.l.b16 %v873
    %v3841 = vunpack.c.h.b16 %v873
    %v3842 = vunpack.c.l.b16 %v874
    %v3843 = vunpack.c.h.b16 %v874
    %v3844 = vunpack.c.l.b16 %v875
    %v3845 = vunpack.c.h.b16 %v875
    %v3846 = vunpack.c.l.b16 %v876
    %v3847 = vunpack.c.h.b16 %v876
    %v3848 = vunpack.c.l.b16 %v877
    %v3849 = vunpack.c.h.b16 %v877
    %v3850 = vunpack.c.l.b16 %v878
    %v3851 = vunpack.c.h.b16 %v878
    %v3852 = vunpack.c.l.b16 %v879
    %v3853 = vunpack.c.h.b16 %v879
    %v3854 = vunpack.c.l.b16 %v880
    %v3855 = vunpack.c.h.b16 %v880
    %v3856 = vunpack.c.l.b16 %v881
    %v3857 = vunpack.c.h.b16 %v881
    %v3858 = vunpack.c.l.b16 %v882
    %v3859 = vunpack.c.h.b16 %v882
    %v3860 = vunpack.c.l.b16 %v883
    %v3861 = vunpack.c.h.b16 %v883
    %v3862 = vunpack.c.l.b16 %v884
    %v3863 = vunpack.c.h.b16 %v884
    %v3864 = vunpack.c.l.b16 %v885
    %v3865 = vunpack.c.h.b16 %v885
    %v3866 = vunpack.c.l.b16 %v886
    %v3867 = vunpack.c.h.b16 %v886
    %v3868 = vunpack.c.l.b16 %v887
    %v3869 = vunpack.c.h.b16 %v887
    %v3870 = vunpack.c.l.b16 %v888
    %v3871 = vunpack.c.h.b16 %v888
    %v3872 = vunpack.c.l.b16 %v889
    %v3873 = vunpack.c.h.b16 %v889
    %v3874 = vunpack.c.l.b16 %v890
    %v3875 = vunpack.c.h.b16 %v890
    %v3876 = vunpack.c.l.b16 %v891
    %v3877 = vunpack.c.h.b16 %v891
    %v3878 = vunpack.c.l.b16 %v892
    %v3879 = vunpack.c.h.b16 %v892
    %v3880 = vunpack.c.l.b16 %v893
    %v3881 = vunpack.c.h.b16 %v893
    %v3882 = vunpack.c.l.b16 %v894
    %v3883 = vunpack.c.h.b16 %v894
    %v3884 = vunpack.c.l.b16 %v895
    %v3885 = vunpack.c.h.b16 %v895
    %v3886 = vunpack.c.l.b16 %v896
    %v3887 = vunpack.c.h.b16 %v896
    %v3888 = vunpack.c.l.b16 %v897
    %v3889 = vunpack.c.h.b16 %v897
    %v3890 = vunpack.c.l.b16 %v898
    %v3891 = vunpack.c.h.b16 %v898
    %v3892 = vunpack.c.l.b16 %v899
    %v3893 = vunpack.c.h.b16 %v899
    %v3894 = vunpack.c.l.b16 %v900
    %v3895 = vunpack.c.h.b16 %v900
    %v3896 = vunpack.c.l.b16 %v901
    %v3897 = vunpack.c.h.b16 %v901
    %v3898 = vunpack.c.l.b16 %v902
    %v3899 = vunpack.c.h.b16 %v902
    %v3900 = vunpack.c.l.b16 %v903
    %v3901 = vunpack.c.h.b16 %v903
    %v3902 = vunpack.c.l.b16 %v904
    %v3903 = vunpack.c.h.b16 %v904
    %v3904 = vunpack.c.l.b16 %v905
    %v3905 = vunpack.c.h.b16 %v905
    %v3906 = vunpack.c.l.b16 %v906
    %v3907 = vunpack.c.h.b16 %v906
    %v3908 = vunpack.c.l.b16 %v907
    %v3909 = vunpack.c.h.b16 %v907
    %v3910 = vunpack.c.l.b16 %v908
    %v3911 = vunpack.c.h.b16 %v908
    %v3912 = vunpack.c.l.b16 %v909
    %v3913 = vunpack.c.h.b16 %v909
    %v3914 = vunpack.c.l.b16 %v910
    %v3915 = vunpack.c.h.b16 %v910
    %v3916 = vunpack.c.l.b16 %v911
    %v3917 = vunpack.c.h.b16 %v911
    %v3918 = vunpack.c.l.b16 %v912
    %v3919 = vunpack.c.h.b16 %v912
    %v3920 = vunpack.c.l.b16 %v913
    %v3921 = vunpack.c.h.b16 %v913
    %v3922 = vunpack.c.l.b16 %v914
    %v3923 = vunpack.c.h.b16 %v914
    %v3924 = vunpack.c.l.b16 %v915
    %v3925 = vunpack.c.h.b16 %v915
    %v3926 = vunpack.c.l.b16 %v916
    %v3927 = vunpack.c.h.b16 %v916
    %v3928 = vunpack.c.l.b16 %v917
    %v3929 = vunpack.c.h.b16 %v917
    %v3930 = vunpack.c.l.b16 %v918
    %v3931 = vunpack.c.h.b16 %v918
    %v3932 = vunpack.c.l.b16 %v919
    %v3933 = vunpack.c.h.b16 %v919
    %v3934 = vunpack.c.l.b16 %v920
    %v3935 = vunpack.c.h.b16 %v920
    %v3936 = vunpack.c.l.b16 %v921
    %v3937 = vunpack.c.h.b16 %v921
    %v3938 = vunpack.c.l.b16 %v922
    %v3939 = vunpack.c.h.b16 %v922
    %v3940 = vunpack.c.l.b16 %v923
    %v3941 = vunpack.c.h.b16 %v923
    %v3942 = vunpack.c.l.b16 %v924
    %v3943 = vunpack.c.h.b16 %v924
    %v3944 = vunpack.c.l.b16 %v925
    %v3945 = vunpack.c.h.b16 %v925
    %v3946 = vunpack.c.l.b16 %v926
    %v3947 = vunpack.c.h.b16 %v926
    %v3948 = vunpack.c.l.b16 %v927
    %v3949 = vunpack.c.h.b16 %v927
    %v3950 = vunpack.c.l.b16 %v928
    %v3951 = vunpack.c.h.b16 %v928
    %v3952 = vunpack.c.l.b16 %v929
    %v3953 = vunpack.c.h.b16 %v929
    %v3954 = vunpack.c.l.b16 %v930
    %v3955 = vunpack.c.h.b16 %v930
    %v3956 = vunpack.c.l.b16 %v931
    %v3957 = vunpack.c.h.b16 %v931
    %v3958 = vunpack.c.l.b16 %v932
    %v3959 = vunpack.c.h.b16 %v932
    %v3960 = vunpack.c.l.b16 %v933
    %v3961 = vunpack.c.h.b16 %v933
    %v3962 = vunpack.c.l.b16 %v934
    %v3963 = vunpack.c.h.b16 %v934
    %v3964 = vunpack.c.l.b16 %v935
    %v3965 = vunpack.c.h.b16 %v935
    %v3966 = vunpack.c.l.b16 %v936
    %v3967 = vunpack.c.h.b16 %v936
    %v3968 = vunpack.c.l.b16 %v937
    %v3969 = vunpack.c.h.b16 %v937
    %v3970 = vunpack.c.l.b16 %v938
    %v3971 = vunpack.c.h.b16 %v938
    %v3972 = vunpack.c.l.b16 %v939
    %v3973 = vunpack.c.h.b16 %v939
    %v3974 = vunpack.c.l.b16 %v940
    %v3975 = vunpack.c.h.b16 %v940
    %v3976 = vunpack.c.l.b16 %v941
    %v3977 = vunpack.c.h.b16 %v941
    %v3978 = vunpack.c.l.b16 %v942
    %v3979 = vunpack.c.h.b16 %v942
    %v3980 = vunpack.c.l.b16 %v943
    %v3981 = vunpack.c.h.b16 %v943
    %v3982 = vunpack.c.l.b16 %v944
    %v3983 = vunpack.c.h.b16 %v944
    %v3984 = vunpack.c.l.b16 %v945
    %v3985 = vunpack.c.h.b16 %v945
    %v3986 = vunpack.c.l.b16 %v946
    %v3987 = vunpack.c.h.b16 %v946
    %v3988 = vunpack.c.l.b16 %v947
    %v3989 = vunpack.c.h.b16 %v947
    %v3990 = vunpack.c.l.b16 %v948
    %v3991 = vunpack.c.h.b16 %v948
    %v3992 = vunpack.c.l.b16 %v949
    %v3993 = vunpack.c.h.b16 %v949
    %v3994 = vunpack.c.l.b16 %v950
    %v3995 = vunpack.c.h.b16 %v950
    %v3996 = vunpack.c.l.b16 %v951
    %v3997 = vunpack.c.h.b16 %v951
    %v3998 = vunpack.c.l.b16 %v952
    %v3999 = vunpack.c.h.b16 %v952
    %v4000 = vunpack.c.l.b16 %v953
    %v4001 = vunpack.c.h.b16 %v953
    %v4002 = vunpack.c.l.b16 %v954
    %v4003 = vunpack.c.h.b16 %v954
    %v4004 = vunpack.c.l.b16 %v955
    %v4005 = vunpack.c.h.b16 %v955
    %v4006 = vunpack.c.l.b16 %v956
    %v4007 = vunpack.c.h.b16 %v956
    %v4008 = vunpack.c.l.b16 %v957
    %v4009 = vunpack.c.h.b16 %v957
    %v4010 = vunpack.c.l.b16 %v958
    %v4011 = vunpack.c.h.b16 %v958
    %v4012 = vunpack.c.l.b16 %v959
    %v4013 = vunpack.c.h.b16 %v959
    %v4014 = vunpack.c.l.b16 %v960
    %v4015 = vunpack.c.h.b16 %v960
    %v4016 = vunpack.c.l.b16 %v961
    %v4017 = vunpack.c.h.b16 %v961
    %v4018 = vunpack.c.l.b16 %v962
    %v4019 = vunpack.c.h.b16 %v962
    %v4020 = vunpack.c.l.b16 %v963
    %v4021 = vunpack.c.h.b16 %v963
    %v4022 = vunpack.c.l.b16 %v964
    %v4023 = vunpack.c.h.b16 %v964
    %v4024 = vunpack.c.l.b16 %v965
    %v4025 = vunpack.c.h.b16 %v965
    %v4026 = vunpack.c.l.b16 %v966
    %v4027 = vunpack.c.h.b16 %v966
    %v4028 = vunpack.c.l.b16 %v967
    %v4029 = vunpack.c.h.b16 %v967
    %v4030 = vunpack.c.l.b16 %v968
    %v4031 = vunpack.c.h.b16 %v968
    %v4032 = vunpack.c.l.b16 %v969
    %v4033 = vunpack.c.h.b16 %v969
    %v4034 = vunpack.c.l.b16 %v970
    %v4035 = vunpack.c.h.b16 %v970
    %v4036 = vunpack.c.l.b16 %v971
    %v4037 = vunpack.c.h.b16 %v971
    %v4038 = vunpack.c.l.b16 %v972
    %v4039 = vunpack.c.h.b16 %v972
    %v4040 = vunpack.c.l.b16 %v973
    %v4041 = vunpack.c.h.b16 %v973
    %v4042 = vunpack.c.l.b16 %v974
    %v4043 = vunpack.c.h.b16 %v974
    %v4044 = vunpack.c.l.b16 %v975
    %v4045 = vunpack.c.h.b16 %v975
    %v4046 = vunpack.c.l.b16 %v976
    %v4047 = vunpack.c.h.b16 %v976
    %v4048 = vunpack.c.l.b16 %v977
    %v4049 = vunpack.c.h.b16 %v977
    %v4050 = vunpack.c.l.b16 %v978
    %v4051 = vunpack.c.h.b16 %v978
    %v4052 = vunpack.c.l.b16 %v979
    %v4053 = vunpack.c.h.b16 %v979
    %v4054 = vunpack.c.l.b16 %v980
    %v4055 = vunpack.c.h.b16 %v980
    %v4056 = vunpack.c.l.b16 %v981
    %v4057 = vunpack.c.h.b16 %v981
    %v4058 = vunpack.c.l.b16 %v982
    %v4059 = vunpack.c.h.b16 %v982
    %v4060 = vunpack.c.l.b16 %v983
    %v4061 = vunpack.c.h.b16 %v983
    %v4062 = vunpack.c.l.b16 %v984
    %v4063 = vunpack.c.h.b16 %v984
    %v4064 = vunpack.c.l.b16 %v985
    %v4065 = vunpack.c.h.b16 %v985
    %v4066 = vunpack.c.l.b16 %v986
    %v4067 = vunpack.c.h.b16 %v986
    %v4068 = vunpack.c.l.b16 %v987
    %v4069 = vunpack.c.h.b16 %v987
    %v4070 = vunpack.c.l.b16 %v988
    %v4071 = vunpack.c.h.b16 %v988
    %v4072 = vunpack.c.l.b16 %v989
    %v4073 = vunpack.c.h.b16 %v989
    %v4074 = vunpack.c.l.b16 %v990
    %v4075 = vunpack.c.h.b16 %v990
    %v4076 = vunpack.c.l.b16 %v991
    %v4077 = vunpack.c.h.b16 %v991
    %v4078 = vunpack.c.l.b16 %v992
    %v4079 = vunpack.c.h.b16 %v992
    %v4080 = vunpack.c.l.b16 %v993
    %v4081 = vunpack.c.h.b16 %v993
    %v4082 = vunpack.c.l.b16 %v994
    %v4083 = vunpack.c.h.b16 %v994
    %v4084 = vunpack.c.l.b16 %v995
    %v4085 = vunpack.c.h.b16 %v995
    %v4086 = vunpack.c.l.b16 %v996
    %v4087 = vunpack.c.h.b16 %v996
    %v4088 = vunpack.c.l.b16 %v997
    %v4089 = vunpack.c.h.b16 %v997
    %v4090 = vunpack.c.l.b16 %v998
    %v4091 = vunpack.c.h.b16 %v998
    %v4092 = vunpack.c.l.b16 %v999
    %v4093 = vunpack.c.h.b16 %v999
    %v4094 = vunpack.c.l.b16 %v1000
    %v4095 = vunpack.c.h.b16 %v1000
    %v4096 = vunpack.c.l.b16 %v1001
    %v4097 = vunpack.c.h.b16 %v1001
    %v4098 = vunpack.c.l.b16 %v1002
    %v4099 = vunpack.c.h.b16 %v1002
    %v4100 = vunpack.c.l.b16 %v1003
    %v4101 = vunpack.c.h.b16 %v1003
    %v4102 = vunpack.c.l.b16 %v1004
    %v4103 = vunpack.c.h.b16 %v1004
    %v4104 = vunpack.c.l.b16 %v1005
    %v4105 = vunpack.c.h.b16 %v1005
    %v4106 = vunpack.c.l.b16 %v1006
    %v4107 = vunpack.c.h.b16 %v1006
    %v4108 = vunpack.c.l.b16 %v1007
    %v4109 = vunpack.c.h.b16 %v1007
    %v4110 = vunpack.c.l.b16 %v1008
    %v4111 = vunpack.c.h.b16 %v1008
    %v4112 = vunpack.c.l.b16 %v1009
    %v4113 = vunpack.c.h.b16 %v1009
    %v4114 = vunpack.c.l.b16 %v1010
    %v4115 = vunpack.c.h.b16 %v1010
    %v4116 = vunpack.c.l.b16 %v1011
    %v4117 = vunpack.c.h.b16 %v1011
    %v4118 = vunpack.c.l.b16 %v1012
    %v4119 = vunpack.c.h.b16 %v1012
    %v4120 = vunpack.c.l.b16 %v1013
    %v4121 = vunpack.c.h.b16 %v1013
    %v4122 = vunpack.c.l.b16 %v1014
    %v4123 = vunpack.c.h.b16 %v1014
    %v4124 = vunpack.c.l.b16 %v1015
    %v4125 = vunpack.c.h.b16 %v1015
    %v4126 = vunpack.c.l.b16 %v1016
    %v4127 = vunpack.c.h.b16 %v1016
    %v4128 = vunpack.c.l.b16 %v1017
    %v4129 = vunpack.c.h.b16 %v1017
    %v4130 = vunpack.c.l.b16 %v1018
    %v4131 = vunpack.c.h.b16 %v1018
    %v4132 = vunpack.c.l.b16 %v1019
    %v4133 = vunpack.c.h.b16 %v1019
    %v4134 = vunpack.c.l.b16 %v1020
    %v4135 = vunpack.c.h.b16 %v1020
    %v4136 = vunpack.c.l.b16 %v1021
    %v4137 = vunpack.c.h.b16 %v1021
    %v4138 = vunpack.c.l.b16 %v1022
    %v4139 = vunpack.c.h.b16 %v1022
    %v4140 = vunpack.c.l.b16 %v1023
    %v4141 = vunpack.c.h.b16 %v1023
    %v4142 = vunpack.c.l.b16 %v1024
    %v4143 = vunpack.c.h.b16 %v1024
    %v4144 = vunpack.c.l.b16 %v1025
    %v4145 = vunpack.c.h.b16 %v1025
    %v4146 = vunpack.c.l.b16 %v1026
    %v4147 = vunpack.c.h.b16 %v1026
    %v4148 = vunpack.c.l.b16 %v1027
    %v4149 = vunpack.c.h.b16 %v1027
    %v4150 = vunpack.c.l.b16 %v1028
    %v4151 = vunpack.c.h.b16 %v1028
    %v4152 = vunpack.c.l.b16 %v1029
    %v4153 = vunpack.c.h.b16 %v1029
    %v4154 = vunpack.c.l.b16 %v1030
    %v4155 = vunpack.c.h.b16 %v1030
    %v4156 = vunpack.c.l.b16 %v1031
    %v4157 = vunpack.c.h.b16 %v1031
    %v4158 = vunpack.c.l.b16 %v1032
    %v4159 = vunpack.c.h.b16 %v1032
    %v4160 = vunpack.c.l.b16 %v1033
    %v4161 = vunpack.c.h.b16 %v1033
    %v4162 = vunpack.c.l.b16 %v1034
    %v4163 = vunpack.c.h.b16 %v1034
    %v4164 = vunpack.c.l.b16 %v1035
    %v4165 = vunpack.c.h.b16 %v1035
    %v4166 = vunpack.c.l.b16 %v1036
    %v4167 = vunpack.c.h.b16 %v1036
    %v4168 = vunpack.c.l.b16 %v1037
    %v4169 = vunpack.c.h.b16 %v1037
    %v4170 = vunpack.c.l.b16 %v1038
    %v4171 = vunpack.c.h.b16 %v1038
    %v4172 = vunpack.c.l.b16 %v1039
    %v4173 = vunpack.c.h.b16 %v1039
    %v4174 = vunpack.c.l.b16 %v1040
    %v4175 = vunpack.c.h.b16 %v1040
    %v4176 = vunpack.c.l.b16 %v1041
    %v4177 = vunpack.c.h.b16 %v1041
    %v4178 = vunpack.c.l.b16 %v1042
    %v4179 = vunpack.c.h.b16 %v1042
    %v4180 = vunpack.c.l.b16 %v1043
    %v4181 = vunpack.c.h.b16 %v1043
    %v4182 = vunpack.c.l.b16 %v1044
    %v4183 = vunpack.c.h.b16 %v1044
    %v4184 = vunpack.c.l.b16 %v1045
    %v4185 = vunpack.c.h.b16 %v1045
    %v4186 = vunpack.c.l.b16 %v1046
    %v4187 = vunpack.c.h.b16 %v1046
    %v4188 = vunpack.c.l.b16 %v1047
    %v4189 = vunpack.c.h.b16 %v1047
    %v4190 = vunpack.c.l.b16 %v1048
    %v4191 = vunpack.c.h.b16 %v1048
    %v4192 = vunpack.c.l.b16 %v1049
    %v4193 = vunpack.c.h.b16 %v1049
    %v4194 = vunpack.c.l.b16 %v1050
    %v4195 = vunpack.c.h.b16 %v1050
    %v4196 = vunpack.c.l.b16 %v1051
    %v4197 = vunpack.c.h.b16 %v1051
    %v4198 = vunpack.c.l.b16 %v1052
    %v4199 = vunpack.c.h.b16 %v1052
    %v4200 = vunpack.c.l.b16 %v1053
    %v4201 = vunpack.c.h.b16 %v1053
    %v4202 = vunpack.c.l.b16 %v1054
    %v4203 = vunpack.c.h.b16 %v1054
    %v4204 = vunpack.c.l.b16 %v1055
    %v4205 = vunpack.c.h.b16 %v1055
    %v4206 = vunpack.c.l.b16 %v1056
    %v4207 = vunpack.c.h.b16 %v1056
    %v4208 = vunpack.c.l.b16 %v1057
    %v4209 = vunpack.c.h.b16 %v1057
    %v4210 = vunpack.c.l.b16 %v1058
    %v4211 = vunpack.c.h.b16 %v1058
    %v4212 = vunpack.c.l.b16 %v1059
    %v4213 = vunpack.c.h.b16 %v1059
    %v4214 = vunpack.c.l.b16 %v1060
    %v4215 = vunpack.c.h.b16 %v1060
    %v4216 = vunpack.c.l.b16 %v1061
    %v4217 = vunpack.c.h.b16 %v1061
    %v4218 = vunpack.c.l.b16 %v1062
    %v4219 = vunpack.c.h.b16 %v1062
    %v4220 = vunpack.c.l.b16 %v1063
    %v4221 = vunpack.c.h.b16 %v1063
    %v4222 = vunpack.c.l.b16 %v1064
    %v4223 = vunpack.c.h.b16 %v1064
    %v4224 = vunpack.c.l.b16 %v1065
    %v4225 = vunpack.c.h.b16 %v1065
    %v4226 = vunpack.c.l.b16 %v1066
    %v4227 = vunpack.c.h.b16 %v1066
    %v4228 = vunpack.c.l.b16 %v1067
    %v4229 = vunpack.c.h.b16 %v1067
    %v4230 = vunpack.c.l.b16 %v1068
    %v4231 = vunpack.c.h.b16 %v1068
    %v4232 = vunpack.c.l.b16 %v1069
    %v4233 = vunpack.c.h.b16 %v1069
    %v4234 = vunpack.c.l.b16 %v1070
    %v4235 = vunpack.c.h.b16 %v1070
    %v4236 = vunpack.c.l.b16 %v1071
    %v4237 = vunpack.c.h.b16 %v1071
    %v4238 = vunpack.c.l.b16 %v1072
    %v4239 = vunpack.c.h.b16 %v1072
    %v4240 = vunpack.c.l.b16 %v1073
    %v4241 = vunpack.c.h.b16 %v1073
    %v4242 = vunpack.c.l.b16 %v1074
    %v4243 = vunpack.c.h.b16 %v1074
    %v4244 = vunpack.c.l.b16 %v1075
    %v4245 = vunpack.c.h.b16 %v1075
    %v4246 = vunpack.c.l.b16 %v1076
    %v4247 = vunpack.c.h.b16 %v1076
    %v4248 = vunpack.c.l.b16 %v1077
    %v4249 = vunpack.c.h.b16 %v1077
    %v4250 = vunpack.c.l.b16 %v1078
    %v4251 = vunpack.c.h.b16 %v1078
    %v4252 = vunpack.c.l.b16 %v1079
    %v4253 = vunpack.c.h.b16 %v1079
    %v4254 = vunpack.c.l.b16 %v1080
    %v4255 = vunpack.c.h.b16 %v1080
    %v4256 = vunpack.c.l.b16 %v1081
    %v4257 = vunpack.c.h.b16 %v1081
    %v4258 = vunpack.c.l.b16 %v1082
    %v4259 = vunpack.c.h.b16 %v1082
    %v4260 = vunpack.c.l.b16 %v1083
    %v4261 = vunpack.c.h.b16 %v1083
    %v4262 = vunpack.c.l.b16 %v1084
    %v4263 = vunpack.c.h.b16 %v1084
    %v4264 = vunpack.c.l.b16 %v1085
    %v4265 = vunpack.c.h.b16 %v1085
    %v4266 = vunpack.c.l.b16 %v1086
    %v4267 = vunpack.c.h.b16 %v1086
    %v4268 = vunpack.c.l.b16 %v1087
    %v4269 = vunpack.c.h.b16 %v1087
    %v4270 = vunpack.c.l.b16 %v1088
    %v4271 = vunpack.c.h.b16 %v1088
    %v4272 = vunpack.c.l.b16 %v1089
    %v4273 = vunpack.c.h.b16 %v1089
    %v4274 = vunpack.c.l.b16 %v1090
    %v4275 = vunpack.c.h.b16 %v1090
    %v4276 = vunpack.c.l.b16 %v1091
    %v4277 = vunpack.c.h.b16 %v1091
    %v4278 = vunpack.c.l.b16 %v1092
    %v4279 = vunpack.c.h.b16 %v1092
    %v4280 = vunpack.c.l.b16 %v1093
    %v4281 = vunpack.c.h.b16 %v1093
    %v4282 = vunpack.c.l.b16 %v1094
    %v4283 = vunpack.c.h.b16 %v1094
    %v4284 = vunpack.c.l.b16 %v1095
    %v4285 = vunpack.c.h.b16 %v1095
    %v4286 = vunpack.c.l.b16 %v1096
    %v4287 = vunpack.c.h.b16 %v1096
    %v4288 = vunpack.c.l.b16 %v1097
    %v4289 = vunpack.c.h.b16 %v1097
    %v4290 = vunpack.c.l.b16 %v1098
    %v4291 = vunpack.c.h.b16 %v1098
    %v4292 = vunpack.c.l.b16 %v1099
    %v4293 = vunpack.c.h.b16 %v1099
    %v4294 = vunpack.c.l.b16 %v1100
    %v4295 = vunpack.c.h.b16 %v1100
    %v4296 = vunpack.c.l.b16 %v1101
    %v4297 = vunpack.c.h.b16 %v1101
    %v4298 = vunpack.c.l.b16 %v1102
    %v4299 = vunpack.c.h.b16 %v1102
    %v4300 = vunpack.c.l.b16 %v1103
    %v4301 = vunpack.c.h.b16 %v1103
    %v4302 = vunpack.c.l.b16 %v1104
    %v4303 = vunpack.c.h.b16 %v1104
    %v4304 = vunpack.c.l.b16 %v1105
    %v4305 = vunpack.c.h.b16 %v1105
    %v4306 = vunpack.c.l.b16 %v1106
    %v4307 = vunpack.c.h.b16 %v1106
    %v4308 = vunpack.c.l.b16 %v1107
    %v4309 = vunpack.c.h.b16 %v1107
    %v4310 = vunpack.c.l.b16 %v1108
    %v4311 = vunpack.c.h.b16 %v1108
    %v4312 = vunpack.c.l.b16 %v1109
    %v4313 = vunpack.c.h.b16 %v1109
    %v4314 = vunpack.c.l.b16 %v1110
    %v4315 = vunpack.c.h.b16 %v1110
    %v4316 = vunpack.c.l.b16 %v1111
    %v4317 = vunpack.c.h.b16 %v1111
    %v4318 = vpack.c.b16 %v2274, %v2270
    %v4319 = vpack.c.b16 %v2275, %v2271
    %v4320 = vpack.c.b16 %v2276, %v2272
    %v4321 = vpack.c.b16 %v2277, %v2273
    %v4322 = vpack.c.b16 %v2282, %v2278
    %v4323 = vpack.c.b16 %v2283, %v2279
    %v4324 = vpack.c.b16 %v2284, %v2280
    %v4325 = vpack.c.b16 %v2285, %v2281
    %v4326 = vpack.c.b16 %v2290, %v2286
    %v4327 = vpack.c.b16 %v2291, %v2287
    %v4328 = vpack.c.b16 %v2292, %v2288
    %v4329 = vpack.c.b16 %v2293, %v2289
    %v4330 = vpack.c.b16 %v2298, %v2294
    %v4331 = vpack.c.b16 %v2299, %v2295
    %v4332 = vpack.c.b16 %v2300, %v2296
    %v4333 = vpack.c.b16 %v2301, %v2297
    %v4334 = vpack.c.b16 %v2306, %v2302
    %v4335 = vpack.c.b16 %v2307, %v2303
    %v4336 = vpack.c.b16 %v2308, %v2304
    %v4337 = vpack.c.b16 %v2309, %v2305
    %v4338 = vpack.c.b16 %v2314, %v2310
    %v4339 = vpack.c.b16 %v2315, %v2311
    %v4340 = vpack.c.b16 %v2316, %v2312
    %v4341 = vpack.c.b16 %v2317, %v2313
    %v4342 = vpack.c.b16 %v2322, %v2318
    %v4343 = vpack.c.b16 %v2323, %v2319
    %v4344 = vpack.c.b16 %v2324, %v2320
    %v4345 = vpack.c.b16 %v2325, %v2321
    %v4346 = vpack.c.b16 %v2330, %v2326
    %v4347 = vpack.c.b16 %v2331, %v2327
    %v4348 = vpack.c.b16 %v2332, %v2328
    %v4349 = vpack.c.b16 %v2333, %v2329
    %v4350 = vpack.c.b16 %v2338, %v2334
    %v4351 = vpack.c.b16 %v2339, %v2335
    %v4352 = vpack.c.b16 %v2340, %v2336
    %v4353 = vpack.c.b16 %v2341, %v2337
    %v4354 = vpack.c.b16 %v2346, %v2342
    %v4355 = vpack.c.b16 %v2347, %v2343
    %v4356 = vpack.c.b16 %v2348, %v2344
    %v4357 = vpack.c.b16 %v2349, %v2345
    %v4358 = vpack.c.b16 %v2354, %v2350
    %v4359 = vpack.c.b16 %v2355, %v2351
    %v4360 = vpack.c.b16 %v2356, %v2352
    %v4361 = vpack.c.b16 %v2357, %v2353
    %v4362 = vpack.c.b16 %v2362, %v2358
    %v4363 = vpack.c.b16 %v2363, %v2359
    %v4364 = vpack.c.b16 %v2364, %v2360
    %v4365 = vpack.c.b16 %v2365, %v2361
    %v4366 = vpack.c.b16 %v2370, %v2366
    %v4367 = vpack.c.b16 %v2371, %v2367
    %v4368 = vpack.c.b16 %v2372, %v2368
    %v4369 = vpack.c.b16 %v2373, %v2369
    %v4370 = vpack.c.b16 %v2378, %v2374
    %v4371 = vpack.c.b16 %v2379, %v2375
    %v4372 = vpack.c.b16 %v2380, %v2376
    %v4373 = vpack.c.b16 %v2381, %v2377
    %v4374 = vpack.c.b16 %v2386, %v2382
    %v4375 = vpack.c.b16 %v2387, %v2383
    %v4376 = vpack.c.b16 %v2388, %v2384
    %v4377 = vpack.c.b16 %v2389, %v2385
    %v4378 = vpack.c.b16 %v2394, %v2390
    %v4379 = vpack.c.b16 %v2395, %v2391
    %v4380 = vpack.c.b16 %v2396, %v2392
    %v4381 = vpack.c.b16 %v2397, %v2393
    %v4382 = vpack.c.b16 %v2402, %v2398
    %v4383 = vpack.c.b16 %v2403, %v2399
    %v4384 = vpack.c.b16 %v2404, %v2400
    %v4385 = vpack.c.b16 %v2405, %v2401
    %v4386 = vpack.c.b16 %v2410, %v2406
    %v4387 = vpack.c.b16 %v2411, %v2407
    %v4388 = vpack.c.b16 %v2412, %v2408
    %v4389 = vpack.c.b16 %v2413, %v2409
    %v4390 = vpack.c.b16 %v2418, %v2414
    %v4391 = vpack.c.b16 %v2419, %v2415
    %v4392 = vpack.c.b16 %v2420, %v2416
    %v4393 = vpack.c.b16 %v2421, %v2417
    %v4394 = vpack.c.b16 %v2426, %v2422
    %v4395 = vpack.c.b16 %v2427, %v2423
    %v4396 = vpack.c.b16 %v2428, %v2424
    %v4397 = vpack.c.b16 %v2429, %v2425
    %v4398 = vpack.c.b16 %v2434, %v2430
    %v4399 = vpack.c.b16 %v2435, %v2431
    %v4400 = vpack.c.b16 %v2436, %v2432
    %v4401 = vpack.c.b16 %v2437, %v2433
    %v4402 = vpack.c.b16 %v2442, %v2438
    %v4403 = vpack.c.b16 %v2443, %v2439
    %v4404 = vpack.c.b16 %v2444, %v2440
    %v4405 = vpack.c.b16 %v2445, %v2441
    %v4406 = vpack.c.b16 %v2450, %v2446
    %v4407 = vpack.c.b16 %v2451, %v2447
    %v4408 = vpack.c.b16 %v2452, %v2448
    %v4409 = vpack.c.b16 %v2453, %v2449
    %v4410 = vpack.c.b16 %v2458, %v2454
    %v4411 = vpack.c.b16 %v2459, %v2455
    %v4412 = vpack.c.b16 %v2460, %v2456
    %v4413 = vpack.c.b16 %v2461, %v2457
    %v4414 = vpack.c.b16 %v2466, %v2462
    %v4415 = vpack.c.b16 %v2467, %v2463
    %v4416 = vpack.c.b16 %v2468, %v2464
    %v4417 = vpack.c.b16 %v2469, %v2465
    %v4418 = vpack.c.b16 %v2474, %v2470
    %v4419 = vpack.c.b16 %v2475, %v2471
    %v4420 = vpack.c.b16 %v2476, %v2472
    %v4421 = vpack.c.b16 %v2477, %v2473
    %v4422 = vpack.c.b16 %v2482, %v2478
    %v4423 = vpack.c.b16 %v2483, %v2479
    %v4424 = vpack.c.b16 %v2484, %v2480
    %v4425 = vpack.c.b16 %v2485, %v2481
    %v4426 = vpack.c.b16 %v2490, %v2486
    %v4427 = vpack.c.b16 %v2491, %v2487
    %v4428 = vpack.c.b16 %v2492, %v2488
    %v4429 = vpack.c.b16 %v2493, %v2489
    %v4430 = vpack.c.b16 %v2498, %v2494
    %v4431 = vpack.c.b16 %v2499, %v2495
    %v4432 = vpack.c.b16 %v2500, %v2496
    %v4433 = vpack.c.b16 %v2501, %v2497
    %v4434 = vpack.c.b16 %v2506, %v2502
    %v4435 = vpack.c.b16 %v2507, %v2503
    %v4436 = vpack.c.b16 %v2508, %v2504
    %v4437 = vpack.c.b16 %v2509, %v2505
    %v4438 = vpack.c.b16 %v2514, %v2510
    %v4439 = vpack.c.b16 %v2515, %v2511
    %v4440 = vpack.c.b16 %v2516, %v2512
    %v4441 = vpack.c.b16 %v2517, %v2513
    %v4442 = vpack.c.b16 %v2522, %v2518
    %v4443 = vpack.c.b16 %v2523, %v2519
    %v4444 = vpack.c.b16 %v2524, %v2520
    %v4445 = vpack.c.b16 %v2525, %v2521
    %v4446 = vpack.c.b16 %v2530, %v2526
    %v4447 = vpack.c.b16 %v2531, %v2527
    %v4448 = vpack.c.b16 %v2532, %v2528
    %v4449 = vpack.c.b16 %v2533, %v2529
    %v4450 = vpack.c.b16 %v2538, %v2534
    %v4451 = vpack.c.b16 %v2539, %v2535
    %v4452 = vpack.c.b16 %v2540, %v2536
    %v4453 = vpack.c.b16 %v2541, %v2537
    %v4454 = vpack.c.b16 %v2546, %v2542
    %v4455 = vpack.c.b16 %v2547, %v2543
    %v4456 = vpack.c.b16 %v2548, %v2544
    %v4457 = vpack.c.b16 %v2549, %v2545
    %v4458 = vpack.c.b16 %v2554, %v2550
    %v4459 = vpack.c.b16 %v2555, %v2551
    %v4460 = vpack.c.b16 %v2556, %v2552
    %v4461 = vpack.c.b16 %v2557, %v2553
    %v4462 = vpack.c.b16 %v2562, %v2558
    %v4463 = vpack.c.b16 %v2563, %v2559
    %v4464 = vpack.c.b16 %v2564, %v2560
    %v4465 = vpack.c.b16 %v2565, %v2561
    %v4466 = vpack.c.b16 %v2570, %v2566
    %v4467 = vpack.c.b16 %v2571, %v2567
    %v4468 = vpack.c.b16 %v2572, %v2568
    %v4469 = vpack.c.b16 %v2573, %v2569
    %v4470 = vpack.c.b16 %v2578, %v2574
    %v4471 = vpack.c.b16 %v2579, %v2575
    %v4472 = vpack.c.b16 %v2580, %v2576
    %v4473 = vpack.c.b16 %v2581, %v2577
    %v4474 = vpack.c.b16 %v2586, %v2582
    %v4475 = vpack.c.b16 %v2587, %v2583
    %v4476 = vpack.c.b16 %v2588, %v2584
    %v4477 = vpack.c.b16 %v2589, %v2585
    %v4478 = vpack.c.b16 %v2594, %v2590
    %v4479 = vpack.c.b16 %v2595, %v2591
    %v4480 = vpack.c.b16 %v2596, %v2592
    %v4481 = vpack.c.b16 %v2597, %v2593
    %v4482 = vpack.c.b16 %v2602, %v2598
    %v4483 = vpack.c.b16 %v2603, %v2599
    %v4484 = vpack.c.b16 %v2604, %v2600
    %v4485 = vpack.c.b16 %v2605, %v2601
    %v4486 = vpack.c.b16 %v2610, %v2606
    %v4487 = vpack.c.b16 %v2611, %v2607
    %v4488 = vpack.c.b16 %v2612, %v2608
    %v4489 = vpack.c.b16 %v2613, %v2609
    %v4490 = vpack.c.b16 %v2618, %v2614
    %v4491 = vpack.c.b16 %v2619, %v2615
    %v4492 = vpack.c.b16 %v2620, %v2616
    %v4493 = vpack.c.b16 %v2621, %v2617
    %v4494 = vpack.c.b16 %v2626, %v2622
    %v4495 = vpack.c.b16 %v2627, %v2623
    %v4496 = vpack.c.b16 %v2628, %v2624
    %v4497 = vpack.c.b16 %v2629, %v2625
    %v4498 = vpack.c.b16 %v2634, %v2630
    %v4499 = vpack.c.b16 %v2635, %v2631
    %v4500 = vpack.c.b16 %v2636, %v2632
    %v4501 = vpack.c.b16 %v2637, %v2633
    %v4502 = vpack.c.b16 %v2642, %v2638
    %v4503 = vpack.c.b16 %v2643, %v2639
    %v4504 = vpack.c.b16 %v2644, %v2640
    %v4505 = vpack.c.b16 %v2645, %v2641
    %v4506 = vpack.c.b16 %v2650, %v2646
    %v4507 = vpack.c.b16 %v2651, %v2647
    %v4508 = vpack.c.b16 %v2652, %v2648
    %v4509 = vpack.c.b16 %v2653, %v2649
    %v4510 = vpack.c.b16 %v2658, %v2654
    %v4511 = vpack.c.b16 %v2659, %v2655
    %v4512 = vpack.c.b16 %v2660, %v2656
    %v4513 = vpack.c.b16 %v2661, %v2657
    %v4514 = vpack.c.b16 %v2666, %v2662
    %v4515 = vpack.c.b16 %v2667, %v2663
    %v4516 = vpack.c.b16 %v2668, %v2664
    %v4517 = vpack.c.b16 %v2669, %v2665
    %v4518 = vpack.c.b16 %v2674, %v2670
    %v4519 = vpack.c.b16 %v2675, %v2671
    %v4520 = vpack.c.b16 %v2676, %v2672
    %v4521 = vpack.c.b16 %v2677, %v2673
    %v4522 = vpack.c.b16 %v2682, %v2678
    %v4523 = vpack.c.b16 %v2683, %v2679
    %v4524 = vpack.c.b16 %v2684, %v2680
    %v4525 = vpack.c.b16 %v2685, %v2681
    %v4526 = vpack.c.b16 %v2690, %v2686
    %v4527 = vpack.c.b16 %v2691, %v2687
    %v4528 = vpack.c.b16 %v2692, %v2688
    %v4529 = vpack.c.b16 %v2693, %v2689
    %v4530 = vpack.c.b16 %v2698, %v2694
    %v4531 = vpack.c.b16 %v2699, %v2695
    %v4532 = vpack.c.b16 %v2700, %v2696
    %v4533 = vpack.c.b16 %v2701, %v2697
    %v4534 = vpack.c.b16 %v2706, %v2702
    %v4535 = vpack.c.b16 %v2707, %v2703
    %v4536 = vpack.c.b16 %v2708, %v2704
    %v4537 = vpack.c.b16 %v2709, %v2705
    %v4538 = vpack.c.b16 %v2714, %v2710
    %v4539 = vpack.c.b16 %v2715, %v2711
    %v4540 = vpack.c.b16 %v2716, %v2712
    %v4541 = vpack.c.b16 %v2717, %v2713
    %v4542 = vpack.c.b16 %v2722, %v2718
    %v4543 = vpack.c.b16 %v2723, %v2719
    %v4544 = vpack.c.b16 %v2724, %v2720
    %v4545 = vpack.c.b16 %v2725, %v2721
    %v4546 = vpack.c.b16 %v2730, %v2726
    %v4547 = vpack.c.b16 %v2731, %v2727
    %v4548 = vpack.c.b16 %v2732, %v2728
    %v4549 = vpack.c.b16 %v2733, %v2729
    %v4550 = vpack.c.b16 %v2738, %v2734
    %v4551 = vpack.c.b16 %v2739, %v2735
    %v4552 = vpack.c.b16 %v2740, %v2736
    %v4553 = vpack.c.b16 %v2741, %v2737
    %v4554 = vpack.c.b16 %v2746, %v2742
    %v4555 = vpack.c.b16 %v2747, %v2743
    %v4556 = vpack.c.b16 %v2748, %v2744
    %v4557 = vpack.c.b16 %v2749, %v2745
    %v4558 = vpack.c.b16 %v2754, %v2750
    %v4559 = vpack.c.b16 %v2755, %v2751
    %v4560 = vpack.c.b16 %v2756, %v2752
    %v4561 = vpack.c.b16 %v2757, %v2753
    %v4562 = vpack.c.b16 %v2762, %v2758
    %v4563 = vpack.c.b16 %v2763, %v2759
    %v4564 = vpack.c.b16 %v2764, %v2760
    %v4565 = vpack.c.b16 %v2765, %v2761
    %v4566 = vpack.c.b16 %v2770, %v2766
    %v4567 = vpack.c.b16 %v2771, %v2767
    %v4568 = vpack.c.b16 %v2772, %v2768
    %v4569 = vpack.c.b16 %v2773, %v2769
    %v4570 = vpack.c.b16 %v2778, %v2774
    %v4571 = vpack.c.b16 %v2779, %v2775
    %v4572 = vpack.c.b16 %v2780, %v2776
    %v4573 = vpack.c.b16 %v2781, %v2777
    %v4574 = vpack.c.b16 %v2786, %v2782
    %v4575 = vpack.c.b16 %v2787, %v2783
    %v4576 = vpack.c.b16 %v2788, %v2784
    %v4577 = vpack.c.b16 %v2789, %v2785
    %v4578 = vpack.c.b16 %v2794, %v2790
    %v4579 = vpack.c.b16 %v2795, %v2791
    %v4580 = vpack.c.b16 %v2796, %v2792
    %v4581 = vpack.c.b16 %v2797, %v2793
    %v4582 = vpack.c.b16 %v2802, %v2798
    %v4583 = vpack.c.b16 %v2803, %v2799
    %v4584 = vpack.c.b16 %v2804, %v2800
    %v4585 = vpack.c.b16 %v2805, %v2801
    %v4586 = vpack.c.b16 %v2810, %v2806
    %v4587 = vpack.c.b16 %v2811, %v2807
    %v4588 = vpack.c.b16 %v2812, %v2808
    %v4589 = vpack.c.b16 %v2813, %v2809
    %v4590 = vpack.c.b16 %v2818, %v2814
    %v4591 = vpack.c.b16 %v2819, %v2815
    %v4592 = vpack.c.b16 %v2820, %v2816
    %v4593 = vpack.c.b16 %v2821, %v2817
    %v4594 = vpack.c.b16 %v2826, %v2822
    %v4595 = vpack.c.b16 %v2827, %v2823
    %v4596 = vpack.c.b16 %v2828, %v2824
    %v4597 = vpack.c.b16 %v2829, %v2825
    %v4598 = vpack.c.b16 %v2834, %v2830
    %v4599 = vpack.c.b16 %v2835, %v2831
    %v4600 = vpack.c.b16 %v2836, %v2832
    %v4601 = vpack.c.b16 %v2837, %v2833
    %v4602 = vpack.c.b16 %v2842, %v2838
    %v4603 = vpack.c.b16 %v2843, %v2839
    %v4604 = vpack.c.b16 %v2844, %v2840
    %v4605 = vpack.c.b16 %v2845, %v2841
    %v4606 = vpack.c.b16 %v2850, %v2846
    %v4607 = vpack.c.b16 %v2851, %v2847
    %v4608 = vpack.c.b16 %v2852, %v2848
    %v4609 = vpack.c.b16 %v2853, %v2849
    %v4610 = vpack.c.b16 %v2858, %v2854
    %v4611 = vpack.c.b16 %v2859, %v2855
    %v4612 = vpack.c.b16 %v2860, %v2856
    %v4613 = vpack.c.b16 %v2861, %v2857
    %v4614 = vpack.c.b16 %v2866, %v2862
    %v4615 = vpack.c.b16 %v2867, %v2863
    %v4616 = vpack.c.b16 %v2868, %v2864
    %v4617 = vpack.c.b16 %v2869, %v2865
    %v4618 = vpack.c.b16 %v2874, %v2870
    %v4619 = vpack.c.b16 %v2875, %v2871
    %v4620 = vpack.c.b16 %v2876, %v2872
    %v4621 = vpack.c.b16 %v2877, %v2873
    %v4622 = vpack.c.b16 %v2882, %v2878
    %v4623 = vpack.c.b16 %v2883, %v2879
    %v4624 = vpack.c.b16 %v2884, %v2880
    %v4625 = vpack.c.b16 %v2885, %v2881
    %v4626 = vpack.c.b16 %v2890, %v2886
    %v4627 = vpack.c.b16 %v2891, %v2887
    %v4628 = vpack.c.b16 %v2892, %v2888
    %v4629 = vpack.c.b16 %v2893, %v2889
    %v4630 = vpack.c.b16 %v2898, %v2894
    %v4631 = vpack.c.b16 %v2899, %v2895
    %v4632 = vpack.c.b16 %v2900, %v2896
    %v4633 = vpack.c.b16 %v2901, %v2897
    %v4634 = vpack.c.b16 %v2906, %v2902
    %v4635 = vpack.c.b16 %v2907, %v2903
    %v4636 = vpack.c.b16 %v2908, %v2904
    %v4637 = vpack.c.b16 %v2909, %v2905
    %v4638 = vpack.c.b16 %v2914, %v2910
    %v4639 = vpack.c.b16 %v2915, %v2911
    %v4640 = vpack.c.b16 %v2916, %v2912
    %v4641 = vpack.c.b16 %v2917, %v2913
    %v4642 = vpack.c.b16 %v2922, %v2918
    %v4643 = vpack.c.b16 %v2923, %v2919
    %v4644 = vpack.c.b16 %v2924, %v2920
    %v4645 = vpack.c.b16 %v2925, %v2921
    %v4646 = vpack.c.b16 %v2930, %v2926
    %v4647 = vpack.c.b16 %v2931, %v2927
    %v4648 = vpack.c.b16 %v2932, %v2928
    %v4649 = vpack.c.b16 %v2933, %v2929
    %v4650 = vpack.c.b16 %v2938, %v2934
    %v4651 = vpack.c.b16 %v2939, %v2935
    %v4652 = vpack.c.b16 %v2940, %v2936
    %v4653 = vpack.c.b16 %v2941, %v2937
    %v4654 = vpack.c.b16 %v2946, %v2942
    %v4655 = vpack.c.b16 %v2947, %v2943
    %v4656 = vpack.c.b16 %v2948, %v2944
    %v4657 = vpack.c.b16 %v2949, %v2945
    %v4658 = vpack.c.b16 %v2954, %v2950
    %v4659 = vpack.c.b16 %v2955, %v2951
    %v4660 = vpack.c.b16 %v2956, %v2952
    %v4661 = vpack.c.b16 %v2957, %v2953
    %v4662 = vpack.c.b16 %v2962, %v2958
    %v4663 = vpack.c.b16 %v2963, %v2959
    %v4664 = vpack.c.b16 %v2964, %v2960
    %v4665 = vpack.c.b16 %v2965, %v2961
    %v4666 = vpack.c.b16 %v2970, %v2966
    %v4667 = vpack.c.b16 %v2971, %v2967
    %v4668 = vpack.c.b16 %v2972, %v2968
    %v4669 = vpack.c.b16 %v2973, %v2969
    %v4670 = vpack.c.b16 %v2978, %v2974
    %v4671 = vpack.c.b16 %v2979, %v2975
    %v4672 = vpack.c.b16 %v2980, %v2976
    %v4673 = vpack.c.b16 %v2981, %v2977
    %v4674 = vpack.c.b16 %v2986, %v2982
    %v4675 = vpack.c.b16 %v2987, %v2983
    %v4676 = vpack.c.b16 %v2988, %v2984
    %v4677 = vpack.c.b16 %v2989, %v2985
    %v4678 = vpack.c.b16 %v2994, %v2990
    %v4679 = vpack.c.b16 %v2995, %v2991
    %v4680 = vpack.c.b16 %v2996, %v2992
    %v4681 = vpack.c.b16 %v2997, %v2993
    %v4682 = vpack.c.b16 %v3002, %v2998
    %v4683 = vpack.c.b16 %v3003, %v2999
    %v4684 = vpack.c.b16 %v3004, %v3000
    %v4685 = vpack.c.b16 %v3005, %v3001
    %v4686 = vpack.c.b16 %v3010, %v3006
    %v4687 = vpack.c.b16 %v3011, %v3007
    %v4688 = vpack.c.b16 %v3012, %v3008
    %v4689 = vpack.c.b16 %v3013, %v3009
    %v4690 = vpack.c.b16 %v3018, %v3014
    %v4691 = vpack.c.b16 %v3019, %v3015
    %v4692 = vpack.c.b16 %v3020, %v3016
    %v4693 = vpack.c.b16 %v3021, %v3017
    %v4694 = vpack.c.b16 %v3026, %v3022
    %v4695 = vpack.c.b16 %v3027, %v3023
    %v4696 = vpack.c.b16 %v3028, %v3024
    %v4697 = vpack.c.b16 %v3029, %v3025
    %v4698 = vpack.c.b16 %v3034, %v3030
    %v4699 = vpack.c.b16 %v3035, %v3031
    %v4700 = vpack.c.b16 %v3036, %v3032
    %v4701 = vpack.c.b16 %v3037, %v3033
    %v4702 = vpack.c.b16 %v3042, %v3038
    %v4703 = vpack.c.b16 %v3043, %v3039
    %v4704 = vpack.c.b16 %v3044, %v3040
    %v4705 = vpack.c.b16 %v3045, %v3041
    %v4706 = vpack.c.b16 %v3050, %v3046
    %v4707 = vpack.c.b16 %v3051, %v3047
    %v4708 = vpack.c.b16 %v3052, %v3048
    %v4709 = vpack.c.b16 %v3053, %v3049
    %v4710 = vpack.c.b16 %v3058, %v3054
    %v4711 = vpack.c.b16 %v3059, %v3055
    %v4712 = vpack.c.b16 %v3060, %v3056
    %v4713 = vpack.c.b16 %v3061, %v3057
    %v4714 = vpack.c.b16 %v3066, %v3062
    %v4715 = vpack.c.b16 %v3067, %v3063
    %v4716 = vpack.c.b16 %v3068, %v3064
    %v4717 = vpack.c.b16 %v3069, %v3065
    %v4718 = vpack.c.b16 %v3074, %v3070
    %v4719 = vpack.c.b16 %v3075, %v3071
    %v4720 = vpack.c.b16 %v3076, %v3072
    %v4721 = vpack.c.b16 %v3077, %v3073
    %v4722 = vpack.c.b16 %v3082, %v3078
    %v4723 = vpack.c.b16 %v3083, %v3079
    %v4724 = vpack.c.b16 %v3084, %v3080
    %v4725 = vpack.c.b16 %v3085, %v3081
    %v4726 = vpack.c.b16 %v3090, %v3086
    %v4727 = vpack.c.b16 %v3091, %v3087
    %v4728 = vpack.c.b16 %v3092, %v3088
    %v4729 = vpack.c.b16 %v3093, %v3089
    %v4730 = vpack.c.b16 %v3098, %v3094
    %v4731 = vpack.c.b16 %v3099, %v3095
    %v4732 = vpack.c.b16 %v3100, %v3096
    %v4733 = vpack.c.b16 %v3101, %v3097
    %v4734 = vpack.c.b16 %v3106, %v3102
    %v4735 = vpack.c.b16 %v3107, %v3103
    %v4736 = vpack.c.b16 %v3108, %v3104
    %v4737 = vpack.c.b16 %v3109, %v3105
    %v4738 = vpack.c.b16 %v3114, %v3110
    %v4739 = vpack.c.b16 %v3115, %v3111
    %v4740 = vpack.c.b16 %v3116, %v3112
    %v4741 = vpack.c.b16 %v3117, %v3113
    %v4742 = vpack.c.b16 %v3122, %v3118
    %v4743 = vpack.c.b16 %v3123, %v3119
    %v4744 = vpack.c.b16 %v3124, %v3120
    %v4745 = vpack.c.b16 %v3125, %v3121
    %v4746 = vpack.c.b16 %v3130, %v3126
    %v4747 = vpack.c.b16 %v3131, %v3127
    %v4748 = vpack.c.b16 %v3132, %v3128
    %v4749 = vpack.c.b16 %v3133, %v3129
    %v4750 = vpack.c.b16 %v3138, %v3134
    %v4751 = vpack.c.b16 %v3139, %v3135
    %v4752 = vpack.c.b16 %v3140, %v3136
    %v4753 = vpack.c.b16 %v3141, %v3137
    %v4754 = vpack.c.b16 %v3146, %v3142
    %v4755 = vpack.c.b16 %v3147, %v3143
    %v4756 = vpack.c.b16 %v3148, %v3144
    %v4757 = vpack.c.b16 %v3149, %v3145
    %v4758 = vpack.c.b16 %v3154, %v3150
    %v4759 = vpack.c.b16 %v3155, %v3151
    %v4760 = vpack.c.b16 %v3156, %v3152
    %v4761 = vpack.c.b16 %v3157, %v3153
    %v4762 = vpack.c.b16 %v3162, %v3158
    %v4763 = vpack.c.b16 %v3163, %v3159
    %v4764 = vpack.c.b16 %v3164, %v3160
    %v4765 = vpack.c.b16 %v3165, %v3161
    %v4766 = vpack.c.b16 %v3170, %v3166
    %v4767 = vpack.c.b16 %v3171, %v3167
    %v4768 = vpack.c.b16 %v3172, %v3168
    %v4769 = vpack.c.b16 %v3173, %v3169
    %v4770 = vpack.c.b16 %v3178, %v3174
    %v4771 = vpack.c.b16 %v3179, %v3175
    %v4772 = vpack.c.b16 %v3180, %v3176
    %v4773 = vpack.c.b16 %v3181, %v3177
    %v4774 = vpack.c.b16 %v3186, %v3182
    %v4775 = vpack.c.b16 %v3187, %v3183
    %v4776 = vpack.c.b16 %v3188, %v3184
    %v4777 = vpack.c.b16 %v3189, %v3185
    %v4778 = vpack.c.b16 %v3194, %v3190
    %v4779 = vpack.c.b16 %v3195, %v3191
    %v4780 = vpack.c.b16 %v3196, %v3192
    %v4781 = vpack.c.b16 %v3197, %v3193
    %v4782 = vpack.c.b16 %v3202, %v3198
    %v4783 = vpack.c.b16 %v3203, %v3199
    %v4784 = vpack.c.b16 %v3204, %v3200
    %v4785 = vpack.c.b16 %v3205, %v3201
    %v4786 = vpack.c.b16 %v3210, %v3206
    %v4787 = vpack.c.b16 %v3211, %v3207
    %v4788 = vpack.c.b16 %v3212, %v3208
    %v4789 = vpack.c.b16 %v3213, %v3209
    %v4790 = vpack.c.b16 %v3218, %v3214
    %v4791 = vpack.c.b16 %v3219, %v3215
    %v4792 = vpack.c.b16 %v3220, %v3216
    %v4793 = vpack.c.b16 %v3221, %v3217
    %v4794 = vpack.c.b16 %v3226, %v3222
    %v4795 = vpack.c.b16 %v3227, %v3223
    %v4796 = vpack.c.b16 %v3228, %v3224
    %v4797 = vpack.c.b16 %v3229, %v3225
    %v4798 = vpack.c.b16 %v3234, %v3230
    %v4799 = vpack.c.b16 %v3235, %v3231
    %v4800 = vpack.c.b16 %v3236, %v3232
    %v4801 = vpack.c.b16 %v3237, %v3233
    %v4802 = vpack.c.b16 %v3242, %v3238
    %v4803 = vpack.c.b16 %v3243, %v3239
    %v4804 = vpack.c.b16 %v3244, %v3240
    %v4805 = vpack.c.b16 %v3245, %v3241
    %v4806 = vpack.c.b16 %v3250, %v3246
    %v4807 = vpack.c.b16 %v3251, %v3247
    %v4808 = vpack.c.b16 %v3252, %v3248
    %v4809 = vpack.c.b16 %v3253, %v3249
    %v4810 = vpack.c.b16 %v3258, %v3254
    %v4811 = vpack.c.b16 %v3259, %v3255
    %v4812 = vpack.c.b16 %v3260, %v3256
    %v4813 = vpack.c.b16 %v3261, %v3257
    %v4814 = vpack.c.b16 %v3266, %v3262
    %v4815 = vpack.c.b16 %v3267, %v3263
    %v4816 = vpack.c.b16 %v3268, %v3264
    %v4817 = vpack.c.b16 %v3269, %v3265
    %v4818 = vpack.c.b16 %v3274, %v3270
    %v4819 = vpack.c.b16 %v3275, %v3271
    %v4820 = vpack.c.b16 %v3276, %v3272
    %v4821 = vpack.c.b16 %v3277, %v3273
    %v4822 = vpack.c.b16 %v3282, %v3278
    %v4823 = vpack.c.b16 %v3283, %v3279
    %v4824 = vpack.c.b16 %v3284, %v3280
    %v4825 = vpack.c.b16 %v3285, %v3281
    %v4826 = vpack.c.b16 %v3290, %v3286
    %v4827 = vpack.c.b16 %v3291, %v3287
    %v4828 = vpack.c.b16 %v3292, %v3288
    %v4829 = vpack.c.b16 %v3293, %v3289
    %v4830 = vpack.c.b16 %v3298, %v3294
    %v4831 = vpack.c.b16 %v3299, %v3295
    %v4832 = vpack.c.b16 %v3300, %v3296
    %v4833 = vpack.c.b16 %v3301, %v3297
    %v4834 = vpack.c.b16 %v3306, %v3302
    %v4835 = vpack.c.b16 %v3307, %v3303
    %v4836 = vpack.c.b16 %v3308, %v3304
    %v4837 = vpack.c.b16 %v3309, %v3305
    %v4838 = vpack.c.b16 %v3314, %v3310
    %v4839 = vpack.c.b16 %v3315, %v3311
    %v4840 = vpack.c.b16 %v3316, %v3312
    %v4841 = vpack.c.b16 %v3317, %v3313
    %v4842 = vpack.c.b16 %v3322, %v3318
    %v4843 = vpack.c.b16 %v3323, %v3319
    %v4844 = vpack.c.b16 %v3324, %v3320
    %v4845 = vpack.c.b16 %v3325, %v3321
    %v4846 = vpack.c.b16 %v3330, %v3326
    %v4847 = vpack.c.b16 %v3331, %v3327
    %v4848 = vpack.c.b16 %v3332, %v3328
    %v4849 = vpack.c.b16 %v3333, %v3329
    %v4850 = vpack.c.b16 %v3338, %v3334
    %v4851 = vpack.c.b16 %v3339, %v3335
    %v4852 = vpack.c.b16 %v3340, %v3336
    %v4853 = vpack.c.b16 %v3341, %v3337
    %v4854 = vpack.c.b16 %v3346, %v3342
    %v4855 = vpack.c.b16 %v3347, %v3343
    %v4856 = vpack.c.b16 %v3348, %v3344
    %v4857 = vpack.c.b16 %v3349, %v3345
    %v4858 = vpack.c.b16 %v3354, %v3350
    %v4859 = vpack.c.b16 %v3355, %v3351
    %v4860 = vpack.c.b16 %v3356, %v3352
    %v4861 = vpack.c.b16 %v3357, %v3353
    %v4862 = vpack.c.b16 %v3362, %v3358
    %v4863 = vpack.c.b16 %v3363, %v3359
    %v4864 = vpack.c.b16 %v3364, %v3360
    %v4865 = vpack.c.b16 %v3365, %v3361
    %v4866 = vpack.c.b16 %v3370, %v3366
    %v4867 = vpack.c.b16 %v3371, %v3367
    %v4868 = vpack.c.b16 %v3372, %v3368
    %v4869 = vpack.c.b16 %v3373, %v3369
    %v4870 = vpack.c.b16 %v3378, %v3374
    %v4871 = vpack.c.b16 %v3379, %v3375
    %v4872 = vpack.c.b16 %v3380, %v3376
    %v4873 = vpack.c.b16 %v3381, %v3377
    %v4874 = vpack.c.b16 %v3386, %v3382
    %v4875 = vpack.c.b16 %v3387, %v3383
    %v4876 = vpack.c.b16 %v3388, %v3384
    %v4877 = vpack.c.b16 %v3389, %v3385
    %v4878 = vpack.c.b16 %v3394, %v3390
    %v4879 = vpack.c.b16 %v3395, %v3391
    %v4880 = vpack.c.b16 %v3396, %v3392
    %v4881 = vpack.c.b16 %v3397, %v3393
    %v4882 = vpack.c.b16 %v3402, %v3398
    %v4883 = vpack.c.b16 %v3403, %v3399
    %v4884 = vpack.c.b16 %v3404, %v3400
    %v4885 = vpack.c.b16 %v3405, %v3401
    %v4886 = vpack.c.b16 %v3410, %v3406
    %v4887 = vpack.c.b16 %v3411, %v3407
    %v4888 = vpack.c.b16 %v3412, %v3408
    %v4889 = vpack.c.b16 %v3413, %v3409
    %v4890 = vpack.c.b16 %v3418, %v3414
    %v4891 = vpack.c.b16 %v3419, %v3415
    %v4892 = vpack.c.b16 %v3420, %v3416
    %v4893 = vpack.c.b16 %v3421, %v3417
    %v4894 = vpack.c.b16 %v3426, %v3422
    %v4895 = vpack.c.b16 %v3427, %v3423
    %v4896 = vpack.c.b16 %v3428, %v3424
    %v4897 = vpack.c.b16 %v3429, %v3425
    %v4898 = vpack.c.b16 %v3434, %v3430
    %v4899 = vpack.c.b16 %v3435, %v3431
    %v4900 = vpack.c.b16 %v3436, %v3432
    %v4901 = vpack.c.b16 %v3437, %v3433
    %v4902 = vpack.c.b16 %v3442, %v3438
    %v4903 = vpack.c.b16 %v3443, %v3439
    %v4904 = vpack.c.b16 %v3444, %v3440
    %v4905 = vpack.c.b16 %v3445, %v3441
    %v4906 = vpack.c.b16 %v3450, %v3446
    %v4907 = vpack.c.b16 %v3451, %v3447
    %v4908 = vpack.c.b16 %v3452, %v3448
    %v4909 = vpack.c.b16 %v3453, %v3449
    %v4910 = vpack.c.b16 %v3458, %v3454
    %v4911 = vpack.c.b16 %v3459, %v3455
    %v4912 = vpack.c.b16 %v3460, %v3456
    %v4913 = vpack.c.b16 %v3461, %v3457
    %v4914 = vpack.c.b16 %v3466, %v3462
    %v4915 = vpack.c.b16 %v3467, %v3463
    %v4916 = vpack.c.b16 %v3468, %v3464
    %v4917 = vpack.c.b16 %v3469, %v3465
    %v4918 = vpack.c.b16 %v3474, %v3470
    %v4919 = vpack.c.b16 %v3475, %v3471
    %v4920 = vpack.c.b16 %v3476, %v3472
    %v4921 = vpack.c.b16 %v3477, %v3473
    %v4922 = vpack.c.b16 %v3482, %v3478
    %v4923 = vpack.c.b16 %v3483, %v3479
    %v4924 = vpack.c.b16 %v3484, %v3480
    %v4925 = vpack.c.b16 %v3485, %v3481
    %v4926 = vpack.c.b16 %v3490, %v3486
    %v4927 = vpack.c.b16 %v3491, %v3487
    %v4928 = vpack.c.b16 %v3492, %v3488
    %v4929 = vpack.c.b16 %v3493, %v3489
    %v4930 = vpack.c.b16 %v3498, %v3494
    %v4931 = vpack.c.b16 %v3499, %v3495
    %v4932 = vpack.c.b16 %v3500, %v3496
    %v4933 = vpack.c.b16 %v3501, %v3497
    %v4934 = vpack.c.b16 %v3506, %v3502
    %v4935 = vpack.c.b16 %v3507, %v3503
    %v4936 = vpack.c.b16 %v3508, %v3504
    %v4937 = vpack.c.b16 %v3509, %v3505
    %v4938 = vpack.c.b16 %v3514, %v3510
    %v4939 = vpack.c.b16 %v3515, %v3511
    %v4940 = vpack.c.b16 %v3516, %v3512
    %v4941 = vpack.c.b16 %v3517, %v3513
    %v4942 = vpack.c.b16 %v3522, %v3518
    %v4943 = vpack.c.b16 %v3523, %v3519
    %v4944 = vpack.c.b16 %v3524, %v3520
    %v4945 = vpack.c.b16 %v3525, %v3521
    %v4946 = vpack.c.b16 %v3530, %v3526
    %v4947 = vpack.c.b16 %v3531, %v3527
    %v4948 = vpack.c.b16 %v3532, %v3528
    %v4949 = vpack.c.b16 %v3533, %v3529
    %v4950 = vpack.c.b16 %v3538, %v3534
    %v4951 = vpack.c.b16 %v3539, %v3535
    %v4952 = vpack.c.b16 %v3540, %v3536
    %v4953 = vpack.c.b16 %v3541, %v3537
    %v4954 = vpack.c.b16 %v3546, %v3542
    %v4955 = vpack.c.b16 %v3547, %v3543
    %v4956 = vpack.c.b16 %v3548, %v3544
    %v4957 = vpack.c.b16 %v3549, %v3545
    %v4958 = vpack.c.b16 %v3554, %v3550
    %v4959 = vpack.c.b16 %v3555, %v3551
    %v4960 = vpack.c.b16 %v3556, %v3552
    %v4961 = vpack.c.b16 %v3557, %v3553
    %v4962 = vpack.c.b16 %v3562, %v3558
    %v4963 = vpack.c.b16 %v3563, %v3559
    %v4964 = vpack.c.b16 %v3564, %v3560
    %v4965 = vpack.c.b16 %v3565, %v3561
    %v4966 = vpack.c.b16 %v3570, %v3566
    %v4967 = vpack.c.b16 %v3571, %v3567
    %v4968 = vpack.c.b16 %v3572, %v3568
    %v4969 = vpack.c.b16 %v3573, %v3569
    %v4970 = vpack.c.b16 %v3578, %v3574
    %v4971 = vpack.c.b16 %v3579, %v3575
    %v4972 = vpack.c.b16 %v3580, %v3576
    %v4973 = vpack.c.b16 %v3581, %v3577
    %v4974 = vpack.c.b16 %v3586, %v3582
    %v4975 = vpack.c.b16 %v3587, %v3583
    %v4976 = vpack.c.b16 %v3588, %v3584
    %v4977 = vpack.c.b16 %v3589, %v3585
    %v4978 = vpack.c.b16 %v3594, %v3590
    %v4979 = vpack.c.b16 %v3595, %v3591
    %v4980 = vpack.c.b16 %v3596, %v3592
    %v4981 = vpack.c.b16 %v3597, %v3593
    %v4982 = vpack.c.b16 %v3602, %v3598
    %v4983 = vpack.c.b16 %v3603, %v3599
    %v4984 = vpack.c.b16 %v3604, %v3600
    %v4985 = vpack.c.b16 %v3605, %v3601
    %v4986 = vpack.c.b16 %v3610, %v3606
    %v4987 = vpack.c.b16 %v3611, %v3607
    %v4988 = vpack.c.b16 %v3612, %v3608
    %v4989 = vpack.c.b16 %v3613, %v3609
    %v4990 = vpack.c.b16 %v3618, %v3614
    %v4991 = vpack.c.b16 %v3619, %v3615
    %v4992 = vpack.c.b16 %v3620, %v3616
    %v4993 = vpack.c.b16 %v3621, %v3617
    %v4994 = vpack.c.b16 %v3626, %v3622
    %v4995 = vpack.c.b16 %v3627, %v3623
    %v4996 = vpack.c.b16 %v3628, %v3624
    %v4997 = vpack.c.b16 %v3629, %v3625
    %v4998 = vpack.c.b16 %v3634, %v3630
    %v4999 = vpack.c.b16 %v3635, %v3631
    %v5000 = vpack.c.b16 %v3636, %v3632
    %v5001 = vpack.c.b16 %v3637, %v3633
    %v5002 = vpack.c.b16 %v3642, %v3638
    %v5003 = vpack.c.b16 %v3643, %v3639
    %v5004 = vpack.c.b16 %v3644, %v3640
    %v5005 = vpack.c.b16 %v3645, %v3641
    %v5006 = vpack.c.b16 %v3650, %v3646
    %v5007 = vpack.c.b16 %v3651, %v3647
    %v5008 = vpack.c.b16 %v3652, %v3648
    %v5009 = vpack.c.b16 %v3653, %v3649
    %v5010 = vpack.c.b16 %v3658, %v3654
    %v5011 = vpack.c.b16 %v3659, %v3655
    %v5012 = vpack.c.b16 %v3660, %v3656
    %v5013 = vpack.c.b16 %v3661, %v3657
    %v5014 = vpack.c.b16 %v3666, %v3662
    %v5015 = vpack.c.b16 %v3667, %v3663
    %v5016 = vpack.c.b16 %v3668, %v3664
    %v5017 = vpack.c.b16 %v3669, %v3665
    %v5018 = vpack.c.b16 %v3674, %v3670
    %v5019 = vpack.c.b16 %v3675, %v3671
    %v5020 = vpack.c.b16 %v3676, %v3672
    %v5021 = vpack.c.b16 %v3677, %v3673
    %v5022 = vpack.c.b16 %v3682, %v3678
    %v5023 = vpack.c.b16 %v3683, %v3679
    %v5024 = vpack.c.b16 %v3684, %v3680
    %v5025 = vpack.c.b16 %v3685, %v3681
    %v5026 = vpack.c.b16 %v3690, %v3686
    %v5027 = vpack.c.b16 %v3691, %v3687
    %v5028 = vpack.c.b16 %v3692, %v3688
    %v5029 = vpack.c.b16 %v3693, %v3689
    %v5030 = vpack.c.b16 %v3698, %v3694
    %v5031 = vpack.c.b16 %v3699, %v3695
    %v5032 = vpack.c.b16 %v3700, %v3696
    %v5033 = vpack.c.b16 %v3701, %v3697
    %v5034 = vpack.c.b16 %v3706, %v3702
    %v5035 = vpack.c.b16 %v3707, %v3703
    %v5036 = vpack.c.b16 %v3708, %v3704
    %v5037 = vpack.c.b16 %v3709, %v3705
    %v5038 = vpack.c.b16 %v3714, %v3710
    %v5039 = vpack.c.b16 %v3715, %v3711
    %v5040 = vpack.c.b16 %v3716, %v3712
    %v5041 = vpack.c.b16 %v3717, %v3713
    %v5042 = vpack.c.b16 %v3722, %v3718
    %v5043 = vpack.c.b16 %v3723, %v3719
    %v5044 = vpack.c.b16 %v3724, %v3720
    %v5045 = vpack.c.b16 %v3725, %v3721
    %v5046 = vpack.c.b16 %v3730, %v3726
    %v5047 = vpack.c.b16 %v3731, %v3727
    %v5048 = vpack.c.b16 %v3732, %v3728
    %v5049 = vpack.c.b16 %v3733, %v3729
    %v5050 = vpack.c.b16 %v3738, %v3734
    %v5051 = vpack.c.b16 %v3739, %v3735
    %v5052 = vpack.c.b16 %v3740, %v3736
    %v5053 = vpack.c.b16 %v3741, %v3737
    %v5054 = vpack.c.b16 %v3746, %v3742
    %v5055 = vpack.c.b16 %v3747, %v3743
    %v5056 = vpack.c.b16 %v3748, %v3744
    %v5057 = vpack.c.b16 %v3749, %v3745
    %v5058 = vpack.c.b16 %v3754, %v3750
    %v5059 = vpack.c.b16 %v3755, %v3751
    %v5060 = vpack.c.b16 %v3756, %v3752
    %v5061 = vpack.c.b16 %v3757, %v3753
    %v5062 = vpack.c.b16 %v3762, %v3758
    %v5063 = vpack.c.b16 %v3763, %v3759
    %v5064 = vpack.c.b16 %v3764, %v3760
    %v5065 = vpack.c.b16 %v3765, %v3761
    %v5066 = vpack.c.b16 %v3770, %v3766
    %v5067 = vpack.c.b16 %v3771, %v3767
    %v5068 = vpack.c.b16 %v3772, %v3768
    %v5069 = vpack.c.b16 %v3773, %v3769
    %v5070 = vpack.c.b16 %v3778, %v3774
    %v5071 = vpack.c.b16 %v3779, %v3775
    %v5072 = vpack.c.b16 %v3780, %v3776
    %v5073 = vpack.c.b16 %v3781, %v3777
    %v5074 = vpack.c.b16 %v3786, %v3782
    %v5075 = vpack.c.b16 %v3787, %v3783
    %v5076 = vpack.c.b16 %v3788, %v3784
    %v5077 = vpack.c.b16 %v3789, %v3785
    %v5078 = vpack.c.b16 %v3794, %v3790
    %v5079 = vpack.c.b16 %v3795, %v3791
    %v5080 = vpack.c.b16 %v3796, %v3792
    %v5081 = vpack.c.b16 %v3797, %v3793
    %v5082 = vpack.c.b16 %v3802, %v3798
    %v5083 = vpack.c.b16 %v3803, %v3799
    %v5084 = vpack.c.b16 %v3804, %v3800
    %v5085 = vpack.c.b16 %v3805, %v3801
    %v5086 = vpack.c.b16 %v3810, %v3806
    %v5087 = vpack.c.b16 %v3811, %v3807
    %v5088 = vpack.c.b16 %v3812, %v3808
    %v5089 = vpack.c.b16 %v3813, %v3809
    %v5090 = vpack.c.b16 %v3818, %v3814
    %v5091 = vpack.c.b16 %v3819, %v3815
    %v5092 = vpack.c.b16 %v3820, %v3816
    %v5093 = vpack.c.b16 %v3821, %v3817
    %v5094 = vpack.c.b16 %v3826, %v3822
    %v5095 = vpack.c.b16 %v3827, %v3823
    %v5096 = vpack.c.b16 %v3828, %v3824
    %v5097 = vpack.c.b16 %v3829, %v3825
    %v5098 = vpack.c.b16 %v3834, %v3830
    %v5099 = vpack.c.b16 %v3835, %v3831
    %v5100 = vpack.c.b16 %v3836, %v3832
    %v5101 = vpack.c.b16 %v3837, %v3833
    %v5102 = vpack.c.b16 %v3842, %v3838
    %v5103 = vpack.c.b16 %v3843, %v3839
    %v5104 = vpack.c.b16 %v3844, %v3840
    %v5105 = vpack.c.b16 %v3845, %v3841
    %v5106 = vpack.c.b16 %v3850, %v3846
    %v5107 = vpack.c.b16 %v3851, %v3847
    %v5108 = vpack.c.b16 %v3852, %v3848
    %v5109 = vpack.c.b16 %v3853, %v3849
    %v5110 = vpack.c.b16 %v3858, %v3854
    %v5111 = vpack.c.b16 %v3859, %v3855
    %v5112 = vpack.c.b16 %v3860, %v3856
    %v5113 = vpack.c.b16 %v3861, %v3857
    %v5114 = vpack.c.b16 %v3866, %v3862
    %v5115 = vpack.c.b16 %v3867, %v3863
    %v5116 = vpack.c.b16 %v3868, %v3864
    %v5117 = vpack.c.b16 %v3869, %v3865
    %v5118 = vpack.c.b16 %v3874, %v3870
    %v5119 = vpack.c.b16 %v3875, %v3871
    %v5120 = vpack.c.b16 %v3876, %v3872
    %v5121 = vpack.c.b16 %v3877, %v3873
    %v5122 = vpack.c.b16 %v3882, %v3878
    %v5123 = vpack.c.b16 %v3883, %v3879
    %v5124 = vpack.c.b16 %v3884, %v3880
    %v5125 = vpack.c.b16 %v3885, %v3881
    %v5126 = vpack.c.b16 %v3890, %v3886
    %v5127 = vpack.c.b16 %v3891, %v3887
    %v5128 = vpack.c.b16 %v3892, %v3888
    %v5129 = vpack.c.b16 %v3893, %v3889
    %v5130 = vpack.c.b16 %v3898, %v3894
    %v5131 = vpack.c.b16 %v3899, %v3895
    %v5132 = vpack.c.b16 %v3900, %v3896
    %v5133 = vpack.c.b16 %v3901, %v3897
    %v5134 = vpack.c.b16 %v3906, %v3902
    %v5135 = vpack.c.b16 %v3907, %v3903
    %v5136 = vpack.c.b16 %v3908, %v3904
    %v5137 = vpack.c.b16 %v3909, %v3905
    %v5138 = vpack.c.b16 %v3914, %v3910
    %v5139 = vpack.c.b16 %v3915, %v3911
    %v5140 = vpack.c.b16 %v3916, %v3912
    %v5141 = vpack.c.b16 %v3917, %v3913
    %v5142 = vpack.c.b16 %v3922, %v3918
    %v5143 = vpack.c.b16 %v3923, %v3919
    %v5144 = vpack.c.b16 %v3924, %v3920
    %v5145 = vpack.c.b16 %v3925, %v3921
    %v5146 = vpack.c.b16 %v3930, %v3926
    %v5147 = vpack.c.b16 %v3931, %v3927
    %v5148 = vpack.c.b16 %v3932, %v3928
    %v5149 = vpack.c.b16 %v3933, %v3929
    %v5150 = vpack.c.b16 %v3938, %v3934
    %v5151 = vpack.c.b16 %v3939, %v3935
    %v5152 = vpack.c.b16 %v3940, %v3936
    %v5153 = vpack.c.b16 %v3941, %v3937
    %v5154 = vpack.c.b16 %v3946, %v3942
    %v5155 = vpack.c.b16 %v3947, %v3943
    %v5156 = vpack.c.b16 %v3948, %v3944
    %v5157 = vpack.c.b16 %v3949, %v3945
    %v5158 = vpack.c.b16 %v3954, %v3950
    %v5159 = vpack.c.b16 %v3955, %v3951
    %v5160 = vpack.c.b16 %v3956, %v3952
    %v5161 = vpack.c.b16 %v3957, %v3953
    %v5162 = vpack.c.b16 %v3962, %v3958
    %v5163 = vpack.c.b16 %v3963, %v3959
    %v5164 = vpack.c.b16 %v3964, %v3960
    %v5165 = vpack.c.b16 %v3965, %v3961
    %v5166 = vpack.c.b16 %v3970, %v3966
    %v5167 = vpack.c.b16 %v3971, %v3967
    %v5168 = vpack.c.b16 %v3972, %v3968
    %v5169 = vpack.c.b16 %v3973, %v3969
    %v5170 = vpack.c.b16 %v3978, %v3974
    %v5171 = vpack.c.b16 %v3979, %v3975
    %v5172 = vpack.c.b16 %v3980, %v3976
    %v5173 = vpack.c.b16 %v3981, %v3977
    %v5174 = vpack.c.b16 %v3986, %v3982
    %v5175 = vpack.c.b16 %v3987, %v3983
    %v5176 = vpack.c.b16 %v3988, %v3984
    %v5177 = vpack.c.b16 %v3989, %v3985
    %v5178 = vpack.c.b16 %v3994, %v3990
    %v5179 = vpack.c.b16 %v3995, %v3991
    %v5180 = vpack.c.b16 %v3996, %v3992
    %v5181 = vpack.c.b16 %v3997, %v3993
    %v5182 = vpack.c.b16 %v4002, %v3998
    %v5183 = vpack.c.b16 %v4003, %v3999
    %v5184 = vpack.c.b16 %v4004, %v4000
    %v5185 = vpack.c.b16 %v4005, %v4001
    %v5186 = vpack.c.b16 %v4010, %v4006
    %v5187 = vpack.c.b16 %v4011, %v4007
    %v5188 = vpack.c.b16 %v4012, %v4008
    %v5189 = vpack.c.b16 %v4013, %v4009
    %v5190 = vpack.c.b16 %v4018, %v4014
    %v5191 = vpack.c.b16 %v4019, %v4015
    %v5192 = vpack.c.b16 %v4020, %v4016
    %v5193 = vpack.c.b16 %v4021, %v4017
    %v5194 = vpack.c.b16 %v4026, %v4022
    %v5195 = vpack.c.b16 %v4027, %v4023
    %v5196 = vpack.c.b16 %v4028, %v4024
    %v5197 = vpack.c.b16 %v4029, %v4025
    %v5198 = vpack.c.b16 %v4034, %v4030
    %v5199 = vpack.c.b16 %v4035, %v4031
    %v5200 = vpack.c.b16 %v4036, %v4032
    %v5201 = vpack.c.b16 %v4037, %v4033
    %v5202 = vpack.c.b16 %v4042, %v4038
    %v5203 = vpack.c.b16 %v4043, %v4039
    %v5204 = vpack.c.b16 %v4044, %v4040
    %v5205 = vpack.c.b16 %v4045, %v4041
    %v5206 = vpack.c.b16 %v4050, %v4046
    %v5207 = vpack.c.b16 %v4051, %v4047
    %v5208 = vpack.c.b16 %v4052, %v4048
    %v5209 = vpack.c.b16 %v4053, %v4049
    %v5210 = vpack.c.b16 %v4058, %v4054
    %v5211 = vpack.c.b16 %v4059, %v4055
    %v5212 = vpack.c.b16 %v4060, %v4056
    %v5213 = vpack.c.b16 %v4061, %v4057
    %v5214 = vpack.c.b16 %v4066, %v4062
    %v5215 = vpack.c.b16 %v4067, %v4063
    %v5216 = vpack.c.b16 %v4068, %v4064
    %v5217 = vpack.c.b16 %v4069, %v4065
    %v5218 = vpack.c.b16 %v4074, %v4070
    %v5219 = vpack.c.b16 %v4075, %v4071
    %v5220 = vpack.c.b16 %v4076, %v4072
    %v5221 = vpack.c.b16 %v4077, %v4073
    %v5222 = vpack.c.b16 %v4082, %v4078
    %v5223 = vpack.c.b16 %v4083, %v4079
    %v5224 = vpack.c.b16 %v4084, %v4080
    %v5225 = vpack.c.b16 %v4085, %v4081
    %v5226 = vpack.c.b16 %v4090, %v4086
    %v5227 = vpack.c.b16 %v4091, %v4087
    %v5228 = vpack.c.b16 %v4092, %v4088
    %v5229 = vpack.c.b16 %v4093, %v4089
    %v5230 = vpack.c.b16 %v4098, %v4094
    %v5231 = vpack.c.b16 %v4099, %v4095
    %v5232 = vpack.c.b16 %v4100, %v4096
    %v5233 = vpack.c.b16 %v4101, %v4097
    %v5234 = vpack.c.b16 %v4106, %v4102
    %v5235 = vpack.c.b16 %v4107, %v4103
    %v5236 = vpack.c.b16 %v4108, %v4104
    %v5237 = vpack.c.b16 %v4109, %v4105
    %v5238 = vpack.c.b16 %v4114, %v4110
    %v5239 = vpack.c.b16 %v4115, %v4111
    %v5240 = vpack.c.b16 %v4116, %v4112
    %v5241 = vpack.c.b16 %v4117, %v4113
    %v5242 = vpack.c.b16 %v4122, %v4118
    %v5243 = vpack.c.b16 %v4123, %v4119
    %v5244 = vpack.c.b16 %v4124, %v4120
    %v5245 = vpack.c.b16 %v4125, %v4121
    %v5246 = vpack.c.b16 %v4130, %v4126
    %v5247 = vpack.c.b16 %v4131, %v4127
    %v5248 = vpack.c.b16 %v4132, %v4128
    %v5249 = vpack.c.b16 %v4133, %v4129
    %v5250 = vpack.c.b16 %v4138, %v4134
    %v5251 = vpack.c.b16 %v4139, %v4135
    %v5252 = vpack.c.b16 %v4140, %v4136
    %v5253 = vpack.c.b16 %v4141, %v4137
    %v5254 = vpack.c.b16 %v4146, %v4142
    %v5255 = vpack.c.b16 %v4147, %v4143
    %v5256 = vpack.c.b16 %v4148, %v4144
    %v5257 = vpack.c.b16 %v4149, %v4145
    %v5258 = vpack.c.b16 %v4154, %v4150
    %v5259 = vpack.c.b16 %v4155, %v4151
    %v5260 = vpack.c.b16 %v4156, %v4152
    %v5261 = vpack.c.b16 %v4157, %v4153
    %v5262 = vpack.c.b16 %v4162, %v4158
    %v5263 = vpack.c.b16 %v4163, %v4159
    %v5264 = vpack.c.b16 %v4164, %v4160
    %v5265 = vpack.c.b16 %v4165, %v4161
    %v5266 = vpack.c.b16 %v4170, %v4166
    %v5267 = vpack.c.b16 %v4171, %v4167
    %v5268 = vpack.c.b16 %v4172, %v4168
    %v5269 = vpack.c.b16 %v4173, %v4169
    %v5270 = vpack.c.b16 %v4178, %v4174
    %v5271 = vpack.c.b16 %v4179, %v4175
    %v5272 = vpack.c.b16 %v4180, %v4176
    %v5273 = vpack.c.b16 %v4181, %v4177
    %v5274 = vpack.c.b16 %v4186, %v4182
    %v5275 = vpack.c.b16 %v4187, %v4183
    %v5276 = vpack.c.b16 %v4188, %v4184
    %v5277 = vpack.c.b16 %v4189, %v4185
    %v5278 = vpack.c.b16 %v4194, %v4190
    %v5279 = vpack.c.b16 %v4195, %v4191
    %v5280 = vpack.c.b16 %v4196, %v4192
    %v5281 = vpack.c.b16 %v4197, %v4193
    %v5282 = vpack.c.b16 %v4202, %v4198
    %v5283 = vpack.c.b16 %v4203, %v4199
    %v5284 = vpack.c.b16 %v4204, %v4200
    %v5285 = vpack.c.b16 %v4205, %v4201
    %v5286 = vpack.c.b16 %v4210, %v4206
    %v5287 = vpack.c.b16 %v4211, %v4207
    %v5288 = vpack.c.b16 %v4212, %v4208
    %v5289 = vpack.c.b16 %v4213, %v4209
    %v5290 = vpack.c.b16 %v4218, %v4214
    %v5291 = vpack.c.b16 %v4219, %v4215
    %v5292 = vpack.c.b16 %v4220, %v4216
    %v5293 = vpack.c.b16 %v4221, %v4217
    %v5294 = vpack.c.b16 %v4226, %v4222
    %v5295 = vpack.c.b16 %v4227, %v4223
    %v5296 = vpack.c.b16 %v4228, %v4224
    %v5297 = vpack.c.b16 %v4229, %v4225
    %v5298 = vpack.c.b16 %v4234, %v4230
    %v5299 = vpack.c.b16 %v4235, %v4231
    %v5300 = vpack.c.b16 %v4236, %v4232
    %v5301 = vpack.c.b16 %v4237, %v4233
    %v5302 = vpack.c.b16 %v4242, %v4238
    %v5303 = vpack.c.b16 %v4243, %v4239
    %v5304 = vpack.c.b16 %v4244, %v4240
    %v5305 = vpack.c.b16 %v4245, %v4241
    %v5306 = vpack.c.b16 %v4250, %v4246
    %v5307 = vpack.c.b16 %v4251, %v4247
    %v5308 = vpack.c.b16 %v4252, %v4248
    %v5309 = vpack.c.b16 %v4253, %v4249
    %v5310 = vpack.c.b16 %v4258, %v4254
    %v5311 = vpack.c.b16 %v4259, %v4255
    %v5312 = vpack.c.b16 %v4260, %v4256
    %v5313 = vpack.c.b16 %v4261, %v4257
    %v5314 = vpack.c.b16 %v4266, %v4262
    %v5315 = vpack.c.b16 %v4267, %v4263
    %v5316 = vpack.c.b16 %v4268, %v4264
    %v5317 = vpack.c.b16 %v4269, %v4265
    %v5318 = vpack.c.b16 %v4274, %v4270
    %v5319 = vpack.c.b16 %v4275, %v4271
    %v5320 = vpack.c.b16 %v4276, %v4272
    %v5321 = vpack.c.b16 %v4277, %v4273
    %v5322 = vpack.c.b16 %v4282, %v4278
    %v5323 = vpack.c.b16 %v4283, %v4279
    %v5324 = vpack.c.b16 %v4284, %v4280
    %v5325 = vpack.c.b16 %v4285, %v4281
    %v5326 = vpack.c.b16 %v4290, %v4286
    %v5327 = vpack.c.b16 %v4291, %v4287
    %v5328 = vpack.c.b16 %v4292, %v4288
    %v5329 = vpack.c.b16 %v4293, %v4289
    %v5330 = vpack.c.b16 %v4298, %v4294
    %v5331 = vpack.c.b16 %v4299, %v4295
    %v5332 = vpack.c.b16 %v4300, %v4296
    %v5333 = vpack.c.b16 %v4301, %v4297
    %v5334 = vpack.c.b16 %v4306, %v4302
    %v5335 = vpack.c.b16 %v4307, %v4303
    %v5336 = vpack.c.b16 %v4308, %v4304
    %v5337 = vpack.c.b16 %v4309, %v4305
    %v5338 = vpack.c.b16 %v4314, %v4310
    %v5339 = vpack.c.b16 %v4315, %v4311
    %v5340 = vpack.c.b16 %v4316, %v4312
    %v5341 = vpack.c.b16 %v4317, %v4313
    %6366 = vmatprep.subr.bf16.mxu0 %v4319
    %6367 = vmatpush1.bf16.msra.mxu0 %v4318
    %6368 = vmatprep.subr.bf16.mxu0 %v4323
    %6369 = vmatpush1.bf16.msra.mxu0 %v4322
    %6370 = vmatprep.subr.bf16.mxu0 %v4327
    %6371 = vmatpush1.bf16.msra.mxu0 %v4326
    %6372 = vmatprep.subr.bf16.mxu0 %v4331
    %6373 = vmatpush1.bf16.msra.mxu0 %v4330
    %6374 = vmatprep.subr.bf16.mxu0 %v4335
    %6375 = vmatpush1.bf16.msra.mxu0 %v4334
    %6376 = vmatprep.subr.bf16.mxu0 %v4339
    %6377 = vmatpush1.bf16.msra.mxu0 %v4338
    %6378 = vmatprep.subr.bf16.mxu0 %v4343
    %6379 = vmatpush1.bf16.msra.mxu0 %v4342
    %6380 = vmatprep.subr.bf16.mxu0 %v4347
    %6381 = vmatpush1.bf16.msra.mxu0 %v4346
    %6382 = vmatprep.subr.bf16.mxu0 %v4351
    %6383 = vmatpush1.bf16.msra.mxu0 %v4350
    %6384 = vmatprep.subr.bf16.mxu0 %v4355
    %6385 = vmatpush1.bf16.msra.mxu0 %v4354
    %6386 = vmatprep.subr.bf16.mxu0 %v4359
    %6387 = vmatpush1.bf16.msra.mxu0 %v4358
    %6388 = vmatprep.subr.bf16.mxu0 %v4363
    %6389 = vmatpush1.bf16.msra.mxu0 %v4362
    %6390 = vmatprep.subr.bf16.mxu0 %v4367
    %6391 = vmatpush1.bf16.msra.mxu0 %v4366
    %6392 = vmatprep.subr.bf16.mxu0 %v4371
    %6393 = vmatpush1.bf16.msra.mxu0 %v4370
    %6394 = vmatprep.subr.bf16.mxu0 %v4375
    %6395 = vmatpush1.bf16.msra.mxu0 %v4374
    %6396 = vmatprep.subr.bf16.mxu0 %v4379
    %6397 = vmatpush1.bf16.msra.mxu0 %v4378
    %6398 = vmatprep.mubr.bf16.mxu0 %v1183
    %6399 = vmatmul.mubr.bf16.gmra.mrb[0].mxu0 %v1182
    %v6400 = vpop.f32.mrb[0].mxu0
    %v6401 = vadd.f32 %v1117, %v6400
    %v6402 = vpop.f32.mrb[0].mxu0
    %v6403 = vadd.f32 %v1121, %v6402
    %v6404 = vpop.f32.mrb[0].mxu0
    %v6405 = vpop.f32.mrb[0].mxu0
    %6406 = vdwg.mxu0
    %6407 = vmatprep.subr.bf16.mxu0 %v4383
    %6408 = vmatpush1.bf16.msra.mxu0 %v4382
    %6409 = vmatprep.subr.bf16.mxu0 %v4387
    %6410 = vmatpush1.bf16.msra.mxu0 %v4386
    %6411 = vmatprep.subr.bf16.mxu0 %v4391
    %6412 = vmatpush1.bf16.msra.mxu0 %v4390
    %6413 = vmatprep.subr.bf16.mxu0 %v4395
    %6414 = vmatpush1.bf16.msra.mxu0 %v4394
    %6415 = vmatprep.subr.bf16.mxu0 %v4399
    %6416 = vmatpush1.bf16.msra.mxu0 %v4398
    %6417 = vmatprep.subr.bf16.mxu0 %v4403
    %6418 = vmatpush1.bf16.msra.mxu0 %v4402
    %6419 = vmatprep.subr.bf16.mxu0 %v4407
    %6420 = vmatpush1.bf16.msra.mxu0 %v4406
    %6421 = vmatprep.subr.bf16.mxu0 %v4411
    %6422 = vmatpush1.bf16.msra.mxu0 %v4410
    %6423 = vmatprep.subr.bf16.mxu0 %v4415
    %6424 = vmatpush1.bf16.msra.mxu0 %v4414
    %6425 = vmatprep.subr.bf16.mxu0 %v4419
    %6426 = vmatpush1.bf16.msra.mxu0 %v4418
    %6427 = vmatprep.subr.bf16.mxu0 %v4423
    %6428 = vmatpush1.bf16.msra.mxu0 %v4422
    %6429 = vmatprep.subr.bf16.mxu0 %v4427
    %6430 = vmatpush1.bf16.msra.mxu0 %v4426
    %6431 = vmatprep.subr.bf16.mxu0 %v4431
    %6432 = vmatpush1.bf16.msra.mxu0 %v4430
    %6433 = vmatprep.subr.bf16.mxu0 %v4435
    %6434 = vmatpush1.bf16.msra.mxu0 %v4434
    %6435 = vmatprep.subr.bf16.mxu0 %v4439
    %6436 = vmatpush1.bf16.msra.mxu0 %v4438
    %6437 = vmatprep.subr.bf16.mxu0 %v4443
    %6438 = vmatpush1.bf16.msra.mxu0 %v4442
    %6439 = vmatprep.mubr.bf16.mxu0 %v1185
    %6440 = vmatmul.mubr.bf16.gmra.mrb[0].mxu0 %v1184
    %v6441 = vpop.f32.mrb[0].mxu0
    %v6442 = vadd.f32 %v6401, %v6441
    %v6443 = vpop.f32.mrb[0].mxu0
    %v6444 = vadd.f32 %v6403, %v6443
    %v6445 = vpop.f32.mrb[0].mxu0
    %v6446 = vpop.f32.mrb[0].mxu0
    %6447 = vdwg.mxu0
    %6448 = vmatprep.subr.bf16.mxu0 %v4447
    %6449 = vmatpush1.bf16.msra.mxu0 %v4446
    %6450 = vmatprep.subr.bf16.mxu0 %v4451
    %6451 = vmatpush1.bf16.msra.mxu0 %v4450
    %6452 = vmatprep.subr.bf16.mxu0 %v4455
    %6453 = vmatpush1.bf16.msra.mxu0 %v4454
    %6454 = vmatprep.subr.bf16.mxu0 %v4459
    %6455 = vmatpush1.bf16.msra.mxu0 %v4458
    %6456 = vmatprep.subr.bf16.mxu0 %v4463
    %6457 = vmatpush1.bf16.msra.mxu0 %v4462
    %6458 = vmatprep.subr.bf16.mxu0 %v4467
    %6459 = vmatpush1.bf16.msra.mxu0 %v4466
    %6460 = vmatprep.subr.bf16.mxu0 %v4471
    %6461 = vmatpush1.bf16.msra.mxu0 %v4470
    %6462 = vmatprep.subr.bf16.mxu0 %v4475
    %6463 = vmatpush1.bf16.msra.mxu0 %v4474
    %6464 = vmatprep.subr.bf16.mxu0 %v4479
    %6465 = vmatpush1.bf16.msra.mxu0 %v4478
    %6466 = vmatprep.subr.bf16.mxu0 %v4483
    %6467 = vmatpush1.bf16.msra.mxu0 %v4482
    %6468 = vmatprep.subr.bf16.mxu0 %v4487
    %6469 = vmatpush1.bf16.msra.mxu0 %v4486
    %6470 = vmatprep.subr.bf16.mxu0 %v4491
    %6471 = vmatpush1.bf16.msra.mxu0 %v4490
    %6472 = vmatprep.subr.bf16.mxu0 %v4495
    %6473 = vmatpush1.bf16.msra.mxu0 %v4494
    %6474 = vmatprep.subr.bf16.mxu0 %v4499
    %6475 = vmatpush1.bf16.msra.mxu0 %v4498
    %6476 = vmatprep.subr.bf16.mxu0 %v4503
    %6477 = vmatpush1.bf16.msra.mxu0 %v4502
    %6478 = vmatprep.subr.bf16.mxu0 %v4507
    %6479 = vmatpush1.bf16.msra.mxu0 %v4506
    %6480 = vmatprep.mubr.bf16.mxu0 %v1187
    %6481 = vmatmul.mubr.bf16.gmra.mrb[0].mxu0 %v1186
    %v6482 = vpop.f32.mrb[0].mxu0
    %v6483 = vadd.f32 %v6442, %v6482
    %v6484 = vpop.f32.mrb[0].mxu0
    %v6485 = vadd.f32 %v6444, %v6484
    %v6486 = vpop.f32.mrb[0].mxu0
    %v6487 = vpop.f32.mrb[0].mxu0
    %6488 = vdwg.mxu0
    %6489 = vmatprep.subr.bf16.mxu0 %v4511
    %6490 = vmatpush1.bf16.msra.mxu0 %v4510
    %6491 = vmatprep.subr.bf16.mxu0 %v4515
    %6492 = vmatpush1.bf16.msra.mxu0 %v4514
    %6493 = vmatprep.subr.bf16.mxu0 %v4519
    %6494 = vmatpush1.bf16.msra.mxu0 %v4518
    %6495 = vmatprep.subr.bf16.mxu0 %v4523
    %6496 = vmatpush1.bf16.msra.mxu0 %v4522
    %6497 = vmatprep.subr.bf16.mxu0 %v4527
    %6498 = vmatpush1.bf16.msra.mxu0 %v4526
    %6499 = vmatprep.subr.bf16.mxu0 %v4531
    %6500 = vmatpush1.bf16.msra.mxu0 %v4530
    %6501 = vmatprep.subr.bf16.mxu0 %v4535
    %6502 = vmatpush1.bf16.msra.mxu0 %v4534
    %6503 = vmatprep.subr.bf16.mxu0 %v4539
    %6504 = vmatpush1.bf16.msra.mxu0 %v4538
    %6505 = vmatprep.subr.bf16.mxu0 %v4543
    %6506 = vmatpush1.bf16.msra.mxu0 %v4542
    %6507 = vmatprep.subr.bf16.mxu0 %v4547
    %6508 = vmatpush1.bf16.msra.mxu0 %v4546
    %6509 = vmatprep.subr.bf16.mxu0 %v4551
    %6510 = vmatpush1.bf16.msra.mxu0 %v4550
    %6511 = vmatprep.subr.bf16.mxu0 %v4555
    %6512 = vmatpush1.bf16.msra.mxu0 %v4554
    %6513 = vmatprep.subr.bf16.mxu0 %v4559
    %6514 = vmatpush1.bf16.msra.mxu0 %v4558
    %6515 = vmatprep.subr.bf16.mxu0 %v4563
    %6516 = vmatpush1.bf16.msra.mxu0 %v4562
    %6517 = vmatprep.subr.bf16.mxu0 %v4567
    %6518 = vmatpush1.bf16.msra.mxu0 %v4566
    %6519 = vmatprep.subr.bf16.mxu0 %v4571
    %6520 = vmatpush1.bf16.msra.mxu0 %v4570
    %6521 = vmatprep.mubr.bf16.mxu0 %v1189
    %6522 = vmatmul.mubr.bf16.gmra.mrb[0].mxu0 %v1188
    %v6523 = vpop.f32.mrb[0].mxu0
    %v6524 = vadd.f32 %v6483, %v6523
    %v6525 = vpop.f32.mrb[0].mxu0
    %v6526 = vadd.f32 %v6485, %v6525
    %v6527 = vpop.f32.mrb[0].mxu0
    %v6528 = vpop.f32.mrb[0].mxu0
    %6529 = vdwg.mxu0
    %6530 = vmatprep.subr.bf16.mxu0 %v4575
    %6531 = vmatpush1.bf16.msra.mxu0 %v4574
    %6532 = vmatprep.subr.bf16.mxu0 %v4579
    %6533 = vmatpush1.bf16.msra.mxu0 %v4578
    %6534 = vmatprep.subr.bf16.mxu0 %v4583
    %6535 = vmatpush1.bf16.msra.mxu0 %v4582
    %6536 = vmatprep.subr.bf16.mxu0 %v4587
    %6537 = vmatpush1.bf16.msra.mxu0 %v4586
    %6538 = vmatprep.subr.bf16.mxu0 %v4591
    %6539 = vmatpush1.bf16.msra.mxu0 %v4590
    %6540 = vmatprep.subr.bf16.mxu0 %v4595
    %6541 = vmatpush1.bf16.msra.mxu0 %v4594
    %6542 = vmatprep.subr.bf16.mxu0 %v4599
    %6543 = vmatpush1.bf16.msra.mxu0 %v4598
    %6544 = vmatprep.subr.bf16.mxu0 %v4603
    %6545 = vmatpush1.bf16.msra.mxu0 %v4602
    %6546 = vmatprep.subr.bf16.mxu0 %v4607
    %6547 = vmatpush1.bf16.msra.mxu0 %v4606
    %6548 = vmatprep.subr.bf16.mxu0 %v4611
    %6549 = vmatpush1.bf16.msra.mxu0 %v4610
    %6550 = vmatprep.subr.bf16.mxu0 %v4615
    %6551 = vmatpush1.bf16.msra.mxu0 %v4614
    %6552 = vmatprep.subr.bf16.mxu0 %v4619
    %6553 = vmatpush1.bf16.msra.mxu0 %v4618
    %6554 = vmatprep.subr.bf16.mxu0 %v4623
    %6555 = vmatpush1.bf16.msra.mxu0 %v4622
    %6556 = vmatprep.subr.bf16.mxu0 %v4627
    %6557 = vmatpush1.bf16.msra.mxu0 %v4626
    %6558 = vmatprep.subr.bf16.mxu0 %v4631
    %6559 = vmatpush1.bf16.msra.mxu0 %v4630
    %6560 = vmatprep.subr.bf16.mxu0 %v4635
    %6561 = vmatpush1.bf16.msra.mxu0 %v4634
    %6562 = vmatprep.mubr.bf16.mxu0 %v1191
    %6563 = vmatmul.mubr.bf16.gmra.mrb[0].mxu0 %v1190
    %v6564 = vpop.f32.mrb[0].mxu0
    %v6565 = vadd.f32 %v6524, %v6564
    %v6566 = vpop.f32.mrb[0].mxu0
    %v6567 = vadd.f32 %v6526, %v6566
    %v6568 = vpop.f32.mrb[0].mxu0
    %v6569 = vpop.f32.mrb[0].mxu0
    %6570 = vdwg.mxu0
    %6571 = vmatprep.subr.bf16.mxu0 %v4639
    %6572 = vmatpush1.bf16.msra.mxu0 %v4638
    %6573 = vmatprep.subr.bf16.mxu0 %v4643
    %6574 = vmatpush1.bf16.msra.mxu0 %v4642
    %6575 = vmatprep.subr.bf16.mxu0 %v4647
    %6576 = vmatpush1.bf16.msra.mxu0 %v4646
    %6577 = vmatprep.subr.bf16.mxu0 %v4651
    %6578 = vmatpush1.bf16.msra.mxu0 %v4650
    %6579 = vmatprep.subr.bf16.mxu0 %v4655
    %6580 = vmatpush1.bf16.msra.mxu0 %v4654
    %6581 = vmatprep.subr.bf16.mxu0 %v4659
    %6582 = vmatpush1.bf16.msra.mxu0 %v4658
    %6583 = vmatprep.subr.bf16.mxu0 %v4663
    %6584 = vmatpush1.bf16.msra.mxu0 %v4662
    %6585 = vmatprep.subr.bf16.mxu0 %v4667
    %6586 = vmatpush1.bf16.msra.mxu0 %v4666
    %6587 = vmatprep.subr.bf16.mxu0 %v4671
    %6588 = vmatpush1.bf16.msra.mxu0 %v4670
    %6589 = vmatprep.subr.bf16.mxu0 %v4675
    %6590 = vmatpush1.bf16.msra.mxu0 %v4674
    %6591 = vmatprep.subr.bf16.mxu0 %v4679
    %6592 = vmatpush1.bf16.msra.mxu0 %v4678
    %6593 = vmatprep.subr.bf16.mxu0 %v4683
    %6594 = vmatpush1.bf16.msra.mxu0 %v4682
    %6595 = vmatprep.subr.bf16.mxu0 %v4687
    %6596 = vmatpush1.bf16.msra.mxu0 %v4686
    %6597 = vmatprep.subr.bf16.mxu0 %v4691
    %6598 = vmatpush1.bf16.msra.mxu0 %v4690
    %6599 = vmatprep.subr.bf16.mxu0 %v4695
    %6600 = vmatpush1.bf16.msra.mxu0 %v4694
    %6601 = vmatprep.subr.bf16.mxu0 %v4699
    %6602 = vmatpush1.bf16.msra.mxu0 %v4698
    %6603 = vmatprep.mubr.bf16.mxu0 %v1193
    %6604 = vmatmul.mubr.bf16.gmra.mrb[0].mxu0 %v1192
    %v6605 = vpop.f32.mrb[0].mxu0
    %v6606 = vadd.f32 %v6565, %v6605
    %v6607 = vpop.f32.mrb[0].mxu0
    %v6608 = vadd.f32 %v6567, %v6607
    %v6609 = vpop.f32.mrb[0].mxu0
    %v6610 = vpop.f32.mrb[0].mxu0
    %6611 = vdwg.mxu0
    %6612 = vmatprep.subr.bf16.mxu0 %v4703
    %6613 = vmatpush1.bf16.msra.mxu0 %v4702
    %6614 = vmatprep.subr.bf16.mxu0 %v4707
    %6615 = vmatpush1.bf16.msra.mxu0 %v4706
    %6616 = vmatprep.subr.bf16.mxu0 %v4711
    %6617 = vmatpush1.bf16.msra.mxu0 %v4710
    %6618 = vmatprep.subr.bf16.mxu0 %v4715
    %6619 = vmatpush1.bf16.msra.mxu0 %v4714
    %6620 = vmatprep.subr.bf16.mxu0 %v4719
    %6621 = vmatpush1.bf16.msra.mxu0 %v4718
    %6622 = vmatprep.subr.bf16.mxu0 %v4723
    %6623 = vmatpush1.bf16.msra.mxu0 %v4722
    %6624 = vmatprep.subr.bf16.mxu0 %v4727
    %6625 = vmatpush1.bf16.msra.mxu0 %v4726
    %6626 = vmatprep.subr.bf16.mxu0 %v4731
    %6627 = vmatpush1.bf16.msra.mxu0 %v4730
    %6628 = vmatprep.subr.bf16.mxu0 %v4735
    %6629 = vmatpush1.bf16.msra.mxu0 %v4734
    %6630 = vmatprep.subr.bf16.mxu0 %v4739
    %6631 = vmatpush1.bf16.msra.mxu0 %v4738
    %6632 = vmatprep.subr.bf16.mxu0 %v4743
    %6633 = vmatpush1.bf16.msra.mxu0 %v4742
    %6634 = vmatprep.subr.bf16.mxu0 %v4747
    %6635 = vmatpush1.bf16.msra.mxu0 %v4746
    %6636 = vmatprep.subr.bf16.mxu0 %v4751
    %6637 = vmatpush1.bf16.msra.mxu0 %v4750
    %6638 = vmatprep.subr.bf16.mxu0 %v4755
    %6639 = vmatpush1.bf16.msra.mxu0 %v4754
    %6640 = vmatprep.subr.bf16.mxu0 %v4759
    %6641 = vmatpush1.bf16.msra.mxu0 %v4758
    %6642 = vmatprep.subr.bf16.mxu0 %v4763
    %6643 = vmatpush1.bf16.msra.mxu0 %v4762
    %6644 = vmatprep.mubr.bf16.mxu0 %v1195
    %6645 = vmatmul.mubr.bf16.gmra.mrb[0].mxu0 %v1194
    %v6646 = vpop.f32.mrb[0].mxu0
    %v6647 = vadd.f32 %v6606, %v6646
    %v6648 = vpop.f32.mrb[0].mxu0
    %v6649 = vadd.f32 %v6608, %v6648
    %v6650 = vpop.f32.mrb[0].mxu0
    %v6651 = vpop.f32.mrb[0].mxu0
    %6652 = vdwg.mxu0
    %6653 = vmatprep.subr.bf16.mxu0 %v4767
    %6654 = vmatpush1.bf16.msra.mxu0 %v4766
    %6655 = vmatprep.subr.bf16.mxu0 %v4771
    %6656 = vmatpush1.bf16.msra.mxu0 %v4770
    %6657 = vmatprep.subr.bf16.mxu0 %v4775
    %6658 = vmatpush1.bf16.msra.mxu0 %v4774
    %6659 = vmatprep.subr.bf16.mxu0 %v4779
    %6660 = vmatpush1.bf16.msra.mxu0 %v4778
    %6661 = vmatprep.subr.bf16.mxu0 %v4783
    %6662 = vmatpush1.bf16.msra.mxu0 %v4782
    %6663 = vmatprep.subr.bf16.mxu0 %v4787
    %6664 = vmatpush1.bf16.msra.mxu0 %v4786
    %6665 = vmatprep.subr.bf16.mxu0 %v4791
    %6666 = vmatpush1.bf16.msra.mxu0 %v4790
    %6667 = vmatprep.subr.bf16.mxu0 %v4795
    %6668 = vmatpush1.bf16.msra.mxu0 %v4794
    %6669 = vmatprep.subr.bf16.mxu0 %v4799
    %6670 = vmatpush1.bf16.msra.mxu0 %v4798
    %6671 = vmatprep.subr.bf16.mxu0 %v4803
    %6672 = vmatpush1.bf16.msra.mxu0 %v4802
    %6673 = vmatprep.subr.bf16.mxu0 %v4807
    %6674 = vmatpush1.bf16.msra.mxu0 %v4806
    %6675 = vmatprep.subr.bf16.mxu0 %v4811
    %6676 = vmatpush1.bf16.msra.mxu0 %v4810
    %6677 = vmatprep.subr.bf16.mxu0 %v4815
    %6678 = vmatpush1.bf16.msra.mxu0 %v4814
    %6679 = vmatprep.subr.bf16.mxu0 %v4819
    %6680 = vmatpush1.bf16.msra.mxu0 %v4818
    %6681 = vmatprep.subr.bf16.mxu0 %v4823
    %6682 = vmatpush1.bf16.msra.mxu0 %v4822
    %6683 = vmatprep.subr.bf16.mxu0 %v4827
    %6684 = vmatpush1.bf16.msra.mxu0 %v4826
    %6685 = vmatprep.mubr.bf16.mxu0 %v1197
    %6686 = vmatmul.mubr.bf16.gmra.mrb[0].mxu0 %v1196
    %v6687 = vpop.f32.mrb[0].mxu0
    %v6688 = vadd.f32 %v6647, %v6687
    %v6689 = vpop.f32.mrb[0].mxu0
    %v6690 = vadd.f32 %v6649, %v6689
    %v6691 = vpop.f32.mrb[0].mxu0
    %v6692 = vpop.f32.mrb[0].mxu0
    %6693 = vdwg.mxu0
    %6694 = vmatprep.subr.bf16.mxu0 %v4831
    %6695 = vmatpush1.bf16.msra.mxu0 %v4830
    %6696 = vmatprep.subr.bf16.mxu0 %v4835
    %6697 = vmatpush1.bf16.msra.mxu0 %v4834
    %6698 = vmatprep.subr.bf16.mxu0 %v4839
    %6699 = vmatpush1.bf16.msra.mxu0 %v4838
    %6700 = vmatprep.subr.bf16.mxu0 %v4843
    %6701 = vmatpush1.bf16.msra.mxu0 %v4842
    %6702 = vmatprep.subr.bf16.mxu0 %v4847
    %6703 = vmatpush1.bf16.msra.mxu0 %v4846
    %6704 = vmatprep.subr.bf16.mxu0 %v4851
    %6705 = vmatpush1.bf16.msra.mxu0 %v4850
    %6706 = vmatprep.subr.bf16.mxu0 %v4855
    %6707 = vmatpush1.bf16.msra.mxu0 %v4854
    %6708 = vmatprep.subr.bf16.mxu0 %v4859
    %6709 = vmatpush1.bf16.msra.mxu0 %v4858
    %6710 = vmatprep.subr.bf16.mxu0 %v4863
    %6711 = vmatpush1.bf16.msra.mxu0 %v4862
    %6712 = vmatprep.subr.bf16.mxu0 %v4867
    %6713 = vmatpush1.bf16.msra.mxu0 %v4866
    %6714 = vmatprep.subr.bf16.mxu0 %v4871
    %6715 = vmatpush1.bf16.msra.mxu0 %v4870
    %6716 = vmatprep.subr.bf16.mxu0 %v4875
    %6717 = vmatpush1.bf16.msra.mxu0 %v4874
    %6718 = vmatprep.subr.bf16.mxu0 %v4879
    %6719 = vmatpush1.bf16.msra.mxu0 %v4878
    %6720 = vmatprep.subr.bf16.mxu0 %v4883
    %6721 = vmatpush1.bf16.msra.mxu0 %v4882
    %6722 = vmatprep.subr.bf16.mxu0 %v4887
    %6723 = vmatpush1.bf16.msra.mxu0 %v4886
    %6724 = vmatprep.subr.bf16.mxu0 %v4891
    %6725 = vmatpush1.bf16.msra.mxu0 %v4890
    %6726 = vmatprep.mubr.bf16.mxu0 %v1199
    %6727 = vmatmul.mubr.bf16.gmra.mrb[0].mxu0 %v1198
    %v6728 = vpop.f32.mrb[0].mxu0
    %v6729 = vadd.f32 %v6688, %v6728
    %v6730 = vpop.f32.mrb[0].mxu0
    %v6731 = vadd.f32 %v6690, %v6730
    %v6732 = vpop.f32.mrb[0].mxu0
    %v6733 = vpop.f32.mrb[0].mxu0
    %6734 = vdwg.mxu0
    %6735 = vmatprep.subr.bf16.mxu0 %v4895
    %6736 = vmatpush1.bf16.msra.mxu0 %v4894
    %6737 = vmatprep.subr.bf16.mxu0 %v4899
    %6738 = vmatpush1.bf16.msra.mxu0 %v4898
    %6739 = vmatprep.subr.bf16.mxu0 %v4903
    %6740 = vmatpush1.bf16.msra.mxu0 %v4902
    %6741 = vmatprep.subr.bf16.mxu0 %v4907
    %6742 = vmatpush1.bf16.msra.mxu0 %v4906
    %6743 = vmatprep.subr.bf16.mxu0 %v4911
    %6744 = vmatpush1.bf16.msra.mxu0 %v4910
    %6745 = vmatprep.subr.bf16.mxu0 %v4915
    %6746 = vmatpush1.bf16.msra.mxu0 %v4914
    %6747 = vmatprep.subr.bf16.mxu0 %v4919
    %6748 = vmatpush1.bf16.msra.mxu0 %v4918
    %6749 = vmatprep.subr.bf16.mxu0 %v4923
    %6750 = vmatpush1.bf16.msra.mxu0 %v4922
    %6751 = vmatprep.subr.bf16.mxu0 %v4927
    %6752 = vmatpush1.bf16.msra.mxu0 %v4926
    %6753 = vmatprep.subr.bf16.mxu0 %v4931
    %6754 = vmatpush1.bf16.msra.mxu0 %v4930
    %6755 = vmatprep.subr.bf16.mxu0 %v4935
    %6756 = vmatpush1.bf16.msra.mxu0 %v4934
    %6757 = vmatprep.subr.bf16.mxu0 %v4939
    %6758 = vmatpush1.bf16.msra.mxu0 %v4938
    %6759 = vmatprep.subr.bf16.mxu0 %v4943
    %6760 = vmatpush1.bf16.msra.mxu0 %v4942
    %6761 = vmatprep.subr.bf16.mxu0 %v4947
    %6762 = vmatpush1.bf16.msra.mxu0 %v4946
    %6763 = vmatprep.subr.bf16.mxu0 %v4951
    %6764 = vmatpush1.bf16.msra.mxu0 %v4950
    %6765 = vmatprep.subr.bf16.mxu0 %v4955
    %6766 = vmatpush1.bf16.msra.mxu0 %v4954
    %6767 = vmatprep.mubr.bf16.mxu0 %v1201
    %6768 = vmatmul.mubr.bf16.gmra.mrb[0].mxu0 %v1200
    %v6769 = vpop.f32.mrb[0].mxu0
    %v6770 = vadd.f32 %v6729, %v6769
    %v6771 = vpop.f32.mrb[0].mxu0
    %v6772 = vadd.f32 %v6731, %v6771
    %v6773 = vpop.f32.mrb[0].mxu0
    %v6774 = vpop.f32.mrb[0].mxu0
    %6775 = vdwg.mxu0
    %6776 = vmatprep.subr.bf16.mxu0 %v4959
    %6777 = vmatpush1.bf16.msra.mxu0 %v4958
    %6778 = vmatprep.subr.bf16.mxu0 %v4963
    %6779 = vmatpush1.bf16.msra.mxu0 %v4962
    %6780 = vmatprep.subr.bf16.mxu0 %v4967
    %6781 = vmatpush1.bf16.msra.mxu0 %v4966
    %6782 = vmatprep.subr.bf16.mxu0 %v4971
    %6783 = vmatpush1.bf16.msra.mxu0 %v4970
    %6784 = vmatprep.subr.bf16.mxu0 %v4975
    %6785 = vmatpush1.bf16.msra.mxu0 %v4974
    %6786 = vmatprep.subr.bf16.mxu0 %v4979
    %6787 = vmatpush1.bf16.msra.mxu0 %v4978
    %6788 = vmatprep.subr.bf16.mxu0 %v4983
    %6789 = vmatpush1.bf16.msra.mxu0 %v4982
    %6790 = vmatprep.subr.bf16.mxu0 %v4987
    %6791 = vmatpush1.bf16.msra.mxu0 %v4986
    %6792 = vmatprep.subr.bf16.mxu0 %v4991
    %6793 = vmatpush1.bf16.msra.mxu0 %v4990
    %6794 = vmatprep.subr.bf16.mxu0 %v4995
    %6795 = vmatpush1.bf16.msra.mxu0 %v4994
    %6796 = vmatprep.subr.bf16.mxu0 %v4999
    %6797 = vmatpush1.bf16.msra.mxu0 %v4998
    %6798 = vmatprep.subr.bf16.mxu0 %v5003
    %6799 = vmatpush1.bf16.msra.mxu0 %v5002
    %6800 = vmatprep.subr.bf16.mxu0 %v5007
    %6801 = vmatpush1.bf16.msra.mxu0 %v5006
    %6802 = vmatprep.subr.bf16.mxu0 %v5011
    %6803 = vmatpush1.bf16.msra.mxu0 %v5010
    %6804 = vmatprep.subr.bf16.mxu0 %v5015
    %6805 = vmatpush1.bf16.msra.mxu0 %v5014
    %6806 = vmatprep.subr.bf16.mxu0 %v5019
    %6807 = vmatpush1.bf16.msra.mxu0 %v5018
    %6808 = vmatprep.mubr.bf16.mxu0 %v1203
    %6809 = vmatmul.mubr.bf16.gmra.mrb[0].mxu0 %v1202
    %v6810 = vpop.f32.mrb[0].mxu0
    %v6811 = vadd.f32 %v6770, %v6810
    %v6812 = vpop.f32.mrb[0].mxu0
    %v6813 = vadd.f32 %v6772, %v6812
    %v6814 = vpop.f32.mrb[0].mxu0
    %v6815 = vpop.f32.mrb[0].mxu0
    %6816 = vdwg.mxu0
    %6817 = vmatprep.subr.bf16.mxu0 %v5023
    %6818 = vmatpush1.bf16.msra.mxu0 %v5022
    %6819 = vmatprep.subr.bf16.mxu0 %v5027
    %6820 = vmatpush1.bf16.msra.mxu0 %v5026
    %6821 = vmatprep.subr.bf16.mxu0 %v5031
    %6822 = vmatpush1.bf16.msra.mxu0 %v5030
    %6823 = vmatprep.subr.bf16.mxu0 %v5035
    %6824 = vmatpush1.bf16.msra.mxu0 %v5034
    %6825 = vmatprep.subr.bf16.mxu0 %v5039
    %6826 = vmatpush1.bf16.msra.mxu0 %v5038
    %6827 = vmatprep.subr.bf16.mxu0 %v5043
    %6828 = vmatpush1.bf16.msra.mxu0 %v5042
    %6829 = vmatprep.subr.bf16.mxu0 %v5047
    %6830 = vmatpush1.bf16.msra.mxu0 %v5046
    %6831 = vmatprep.subr.bf16.mxu0 %v5051
    %6832 = vmatpush1.bf16.msra.mxu0 %v5050
    %6833 = vmatprep.subr.bf16.mxu0 %v5055
    %6834 = vmatpush1.bf16.msra.mxu0 %v5054
    %6835 = vmatprep.subr.bf16.mxu0 %v5059
    %6836 = vmatpush1.bf16.msra.mxu0 %v5058
    %6837 = vmatprep.subr.bf16.mxu0 %v5063
    %6838 = vmatpush1.bf16.msra.mxu0 %v5062
    %6839 = vmatprep.subr.bf16.mxu0 %v5067
    %6840 = vmatpush1.bf16.msra.mxu0 %v5066
    %6841 = vmatprep.subr.bf16.mxu0 %v5071
    %6842 = vmatpush1.bf16.msra.mxu0 %v5070
    %6843 = vmatprep.subr.bf16.mxu0 %v5075
    %6844 = vmatpush1.bf16.msra.mxu0 %v5074
    %6845 = vmatprep.subr.bf16.mxu0 %v5079
    %6846 = vmatpush1.bf16.msra.mxu0 %v5078
    %6847 = vmatprep.subr.bf16.mxu0 %v5083
    %6848 = vmatpush1.bf16.msra.mxu0 %v5082
    %6849 = vmatprep.mubr.bf16.mxu0 %v1205
    %6850 = vmatmul.mubr.bf16.gmra.mrb[0].mxu0 %v1204
    %v6851 = vpop.f32.mrb[0].mxu0
    %v6852 = vadd.f32 %v6811, %v6851
    %v6853 = vpop.f32.mrb[0].mxu0
    %v6854 = vadd.f32 %v6813, %v6853
    %v6855 = vpop.f32.mrb[0].mxu0
    %v6856 = vpop.f32.mrb[0].mxu0
    %6857 = vdwg.mxu0
    %6858 = vmatprep.subr.bf16.mxu0 %v5087
    %6859 = vmatpush1.bf16.msra.mxu0 %v5086
    %6860 = vmatprep.subr.bf16.mxu0 %v5091
    %6861 = vmatpush1.bf16.msra.mxu0 %v5090
    %6862 = vmatprep.subr.bf16.mxu0 %v5095
    %6863 = vmatpush1.bf16.msra.mxu0 %v5094
    %6864 = vmatprep.subr.bf16.mxu0 %v5099
    %6865 = vmatpush1.bf16.msra.mxu0 %v5098
    %6866 = vmatprep.subr.bf16.mxu0 %v5103
    %6867 = vmatpush1.bf16.msra.mxu0 %v5102
    %6868 = vmatprep.subr.bf16.mxu0 %v5107
    %6869 = vmatpush1.bf16.msra.mxu0 %v5106
    %6870 = vmatprep.subr.bf16.mxu0 %v5111
    %6871 = vmatpush1.bf16.msra.mxu0 %v5110
    %6872 = vmatprep.subr.bf16.mxu0 %v5115
    %6873 = vmatpush1.bf16.msra.mxu0 %v5114
    %6874 = vmatprep.subr.bf16.mxu0 %v5119
    %6875 = vmatpush1.bf16.msra.mxu0 %v5118
    %6876 = vmatprep.subr.bf16.mxu0 %v5123
    %6877 = vmatpush1.bf16.msra.mxu0 %v5122
    %6878 = vmatprep.subr.bf16.mxu0 %v5127
    %6879 = vmatpush1.bf16.msra.mxu0 %v5126
    %6880 = vmatprep.subr.bf16.mxu0 %v5131
    %6881 = vmatpush1.bf16.msra.mxu0 %v5130
    %6882 = vmatprep.subr.bf16.mxu0 %v5135
    %6883 = vmatpush1.bf16.msra.mxu0 %v5134
    %6884 = vmatprep.subr.bf16.mxu0 %v5139
    %6885 = vmatpush1.bf16.msra.mxu0 %v5138
    %6886 = vmatprep.subr.bf16.mxu0 %v5143
    %6887 = vmatpush1.bf16.msra.mxu0 %v5142
    %6888 = vmatprep.subr.bf16.mxu0 %v5147
    %6889 = vmatpush1.bf16.msra.mxu0 %v5146
    %6890 = vmatprep.mubr.bf16.mxu0 %v1207
    %6891 = vmatmul.mubr.bf16.gmra.mrb[0].mxu0 %v1206
    %v6892 = vpop.f32.mrb[0].mxu0
    %v6893 = vadd.f32 %v6852, %v6892
    %v6894 = vpop.f32.mrb[0].mxu0
    %v6895 = vadd.f32 %v6854, %v6894
    %v6896 = vpop.f32.mrb[0].mxu0
    %v6897 = vpop.f32.mrb[0].mxu0
    %6898 = vdwg.mxu0
    %6899 = vmatprep.subr.bf16.mxu0 %v5151
    %6900 = vmatpush1.bf16.msra.mxu0 %v5150
    %6901 = vmatprep.subr.bf16.mxu0 %v5155
    %6902 = vmatpush1.bf16.msra.mxu0 %v5154
    %6903 = vmatprep.subr.bf16.mxu0 %v5159
    %6904 = vmatpush1.bf16.msra.mxu0 %v5158
    %6905 = vmatprep.subr.bf16.mxu0 %v5163
    %6906 = vmatpush1.bf16.msra.mxu0 %v5162
    %6907 = vmatprep.subr.bf16.mxu0 %v5167
    %6908 = vmatpush1.bf16.msra.mxu0 %v5166
    %6909 = vmatprep.subr.bf16.mxu0 %v5171
    %6910 = vmatpush1.bf16.msra.mxu0 %v5170
    %6911 = vmatprep.subr.bf16.mxu0 %v5175
    %6912 = vmatpush1.bf16.msra.mxu0 %v5174
    %6913 = vmatprep.subr.bf16.mxu0 %v5179
    %6914 = vmatpush1.bf16.msra.mxu0 %v5178
    %6915 = vmatprep.subr.bf16.mxu0 %v5183
    %6916 = vmatpush1.bf16.msra.mxu0 %v5182
    %6917 = vmatprep.subr.bf16.mxu0 %v5187
    %6918 = vmatpush1.bf16.msra.mxu0 %v5186
    %6919 = vmatprep.subr.bf16.mxu0 %v5191
    %6920 = vmatpush1.bf16.msra.mxu0 %v5190
    %6921 = vmatprep.subr.bf16.mxu0 %v5195
    %6922 = vmatpush1.bf16.msra.mxu0 %v5194
    %6923 = vmatprep.subr.bf16.mxu0 %v5199
    %6924 = vmatpush1.bf16.msra.mxu0 %v5198
    %6925 = vmatprep.subr.bf16.mxu0 %v5203
    %6926 = vmatpush1.bf16.msra.mxu0 %v5202
    %6927 = vmatprep.subr.bf16.mxu0 %v5207
    %6928 = vmatpush1.bf16.msra.mxu0 %v5206
    %6929 = vmatprep.subr.bf16.mxu0 %v5211
    %6930 = vmatpush1.bf16.msra.mxu0 %v5210
    %6931 = vmatprep.mubr.bf16.mxu0 %v1209
    %6932 = vmatmul.mubr.bf16.gmra.mrb[0].mxu0 %v1208
    %v6933 = vpop.f32.mrb[0].mxu0
    %v6934 = vadd.f32 %v6893, %v6933
    %v6935 = vpop.f32.mrb[0].mxu0
    %v6936 = vadd.f32 %v6895, %v6935
    %v6937 = vpop.f32.mrb[0].mxu0
    %v6938 = vpop.f32.mrb[0].mxu0
    %6939 = vdwg.mxu0
    %6940 = vmatprep.subr.bf16.mxu0 %v5215
    %6941 = vmatpush1.bf16.msra.mxu0 %v5214
    %6942 = vmatprep.subr.bf16.mxu0 %v5219
    %6943 = vmatpush1.bf16.msra.mxu0 %v5218
    %6944 = vmatprep.subr.bf16.mxu0 %v5223
    %6945 = vmatpush1.bf16.msra.mxu0 %v5222
    %6946 = vmatprep.subr.bf16.mxu0 %v5227
    %6947 = vmatpush1.bf16.msra.mxu0 %v5226
    %6948 = vmatprep.subr.bf16.mxu0 %v5231
    %6949 = vmatpush1.bf16.msra.mxu0 %v5230
    %6950 = vmatprep.subr.bf16.mxu0 %v5235
    %6951 = vmatpush1.bf16.msra.mxu0 %v5234
    %6952 = vmatprep.subr.bf16.mxu0 %v5239
    %6953 = vmatpush1.bf16.msra.mxu0 %v5238
    %6954 = vmatprep.subr.bf16.mxu0 %v5243
    %6955 = vmatpush1.bf16.msra.mxu0 %v5242
    %6956 = vmatprep.subr.bf16.mxu0 %v5247
    %6957 = vmatpush1.bf16.msra.mxu0 %v5246
    %6958 = vmatprep.subr.bf16.mxu0 %v5251
    %6959 = vmatpush1.bf16.msra.mxu0 %v5250
    %6960 = vmatprep.subr.bf16.mxu0 %v5255
    %6961 = vmatpush1.bf16.msra.mxu0 %v5254
    %6962 = vmatprep.subr.bf16.mxu0 %v5259
    %6963 = vmatpush1.bf16.msra.mxu0 %v5258
    %6964 = vmatprep.subr.bf16.mxu0 %v5263
    %6965 = vmatpush1.bf16.msra.mxu0 %v5262
    %6966 = vmatprep.subr.bf16.mxu0 %v5267
    %6967 = vmatpush1.bf16.msra.mxu0 %v5266
    %6968 = vmatprep.subr.bf16.mxu0 %v5271
    %6969 = vmatpush1.bf16.msra.mxu0 %v5270
    %6970 = vmatprep.subr.bf16.mxu0 %v5275
    %6971 = vmatpush1.bf16.msra.mxu0 %v5274
    %6972 = vmatprep.mubr.bf16.mxu0 %v1211
    %6973 = vmatmul.mubr.bf16.gmra.mrb[0].mxu0 %v1210
    %v6974 = vpop.f32.mrb[0].mxu0
    %v6975 = vadd.f32 %v6934, %v6974
    %v6976 = vpop.f32.mrb[0].mxu0
    %v6977 = vadd.f32 %v6936, %v6976
    %v6978 = vpop.f32.mrb[0].mxu0
    %v6979 = vpop.f32.mrb[0].mxu0
    %6980 = vdwg.mxu0
    %6981 = vmatprep.subr.bf16.mxu0 %v5279
    %6982 = vmatpush1.bf16.msra.mxu0 %v5278
    %6983 = vmatprep.subr.bf16.mxu0 %v5283
    %6984 = vmatpush1.bf16.msra.mxu0 %v5282
    %6985 = vmatprep.subr.bf16.mxu0 %v5287
    %6986 = vmatpush1.bf16.msra.mxu0 %v5286
    %6987 = vmatprep.subr.bf16.mxu0 %v5291
    %6988 = vmatpush1.bf16.msra.mxu0 %v5290
    %6989 = vmatprep.subr.bf16.mxu0 %v5295
    %6990 = vmatpush1.bf16.msra.mxu0 %v5294
    %6991 = vmatprep.subr.bf16.mxu0 %v5299
    %6992 = vmatpush1.bf16.msra.mxu0 %v5298
    %6993 = vmatprep.subr.bf16.mxu0 %v5303
    %6994 = vmatpush1.bf16.msra.mxu0 %v5302
    %6995 = vmatprep.subr.bf16.mxu0 %v5307
    %6996 = vmatpush1.bf16.msra.mxu0 %v5306
    %6997 = vmatprep.subr.bf16.mxu0 %v5311
    %6998 = vmatpush1.bf16.msra.mxu0 %v5310
    %6999 = vmatprep.subr.bf16.mxu0 %v5315
    %7000 = vmatpush1.bf16.msra.mxu0 %v5314
    %7001 = vmatprep.subr.bf16.mxu0 %v5319
    %7002 = vmatpush1.bf16.msra.mxu0 %v5318
    %7003 = vmatprep.subr.bf16.mxu0 %v5323
    %7004 = vmatpush1.bf16.msra.mxu0 %v5322
    %7005 = vmatprep.subr.bf16.mxu0 %v5327
    %7006 = vmatpush1.bf16.msra.mxu0 %v5326
    %7007 = vmatprep.subr.bf16.mxu0 %v5331
    %7008 = vmatpush1.bf16.msra.mxu0 %v5330
    %7009 = vmatprep.subr.bf16.mxu0 %v5335
    %7010 = vmatpush1.bf16.msra.mxu0 %v5334
    %7011 = vmatprep.subr.bf16.mxu0 %v5339
    %7012 = vmatpush1.bf16.msra.mxu0 %v5338
    %7013 = vmatprep.mubr.bf16.mxu0 %v1213
    %7014 = vmatmul.mubr.bf16.gmra.mrb[0].mxu0 %v1212
    %v7015 = vpop.f32.mrb[0].mxu0
    %v7016 = vadd.f32 %v6975, %v7015
    %v7017 = vpop.f32.mrb[0].mxu0
    %v7018 = vadd.f32 %v6977, %v7017
    %v7019 = vpop.f32.mrb[0].mxu0
    %v7020 = vpop.f32.mrb[0].mxu0
    %7021 = vdwg.mxu0
    %7022 = vmatprep.subr.bf16.mxu0 %v4321
    %7023 = vmatpush1.bf16.msra.mxu0 %v4320
    %7024 = vmatprep.subr.bf16.mxu0 %v4325
    %7025 = vmatpush1.bf16.msra.mxu0 %v4324
    %7026 = vmatprep.subr.bf16.mxu0 %v4329
    %7027 = vmatpush1.bf16.msra.mxu0 %v4328
    %7028 = vmatprep.subr.bf16.mxu0 %v4333
    %7029 = vmatpush1.bf16.msra.mxu0 %v4332
    %7030 = vmatprep.subr.bf16.mxu0 %v4337
    %7031 = vmatpush1.bf16.msra.mxu0 %v4336
    %7032 = vmatprep.subr.bf16.mxu0 %v4341
    %7033 = vmatpush1.bf16.msra.mxu0 %v4340
    %7034 = vmatprep.subr.bf16.mxu0 %v4345
    %7035 = vmatpush1.bf16.msra.mxu0 %v4344
    %7036 = vmatprep.subr.bf16.mxu0 %v4349
    %7037 = vmatpush1.bf16.msra.mxu0 %v4348
    %7038 = vmatprep.subr.bf16.mxu0 %v4353
    %7039 = vmatpush1.bf16.msra.mxu0 %v4352
    %7040 = vmatprep.subr.bf16.mxu0 %v4357
    %7041 = vmatpush1.bf16.msra.mxu0 %v4356
    %7042 = vmatprep.subr.bf16.mxu0 %v4361
    %7043 = vmatpush1.bf16.msra.mxu0 %v4360
    %7044 = vmatprep.subr.bf16.mxu0 %v4365
    %7045 = vmatpush1.bf16.msra.mxu0 %v4364
    %7046 = vmatprep.subr.bf16.mxu0 %v4369
    %7047 = vmatpush1.bf16.msra.mxu0 %v4368
    %7048 = vmatprep.subr.bf16.mxu0 %v4373
    %7049 = vmatpush1.bf16.msra.mxu0 %v4372
    %7050 = vmatprep.subr.bf16.mxu0 %v4377
    %7051 = vmatpush1.bf16.msra.mxu0 %v4376
    %7052 = vmatprep.subr.bf16.mxu0 %v4381
    %7053 = vmatpush1.bf16.msra.mxu0 %v4380
    %7054 = vmatprep.mubr.bf16.mxu0 %v1183
    %7055 = vmatmul.mubr.bf16.gmra.mrb[0].mxu0 %v1182
    %v7056 = vpop.f32.mrb[0].mxu0
    %v7057 = vadd.f32 %v1125, %v7056
    %v7058 = vpop.f32.mrb[0].mxu0
    %v7059 = vadd.f32 %v1129, %v7058
    %v7060 = vpop.f32.mrb[0].mxu0
    %v7061 = vpop.f32.mrb[0].mxu0
    %7062 = vdwg.mxu0
    %7063 = vmatprep.subr.bf16.mxu0 %v4385
    %7064 = vmatpush1.bf16.msra.mxu0 %v4384
    %7065 = vmatprep.subr.bf16.mxu0 %v4389
    %7066 = vmatpush1.bf16.msra.mxu0 %v4388
    %7067 = vmatprep.subr.bf16.mxu0 %v4393
    %7068 = vmatpush1.bf16.msra.mxu0 %v4392
    %7069 = vmatprep.subr.bf16.mxu0 %v4397
    %7070 = vmatpush1.bf16.msra.mxu0 %v4396
    %7071 = vmatprep.subr.bf16.mxu0 %v4401
    %7072 = vmatpush1.bf16.msra.mxu0 %v4400
    %7073 = vmatprep.subr.bf16.mxu0 %v4405
    %7074 = vmatpush1.bf16.msra.mxu0 %v4404
    %7075 = vmatprep.subr.bf16.mxu0 %v4409
    %7076 = vmatpush1.bf16.msra.mxu0 %v4408
    %7077 = vmatprep.subr.bf16.mxu0 %v4413
    %7078 = vmatpush1.bf16.msra.mxu0 %v4412
    %7079 = vmatprep.subr.bf16.mxu0 %v4417
    %7080 = vmatpush1.bf16.msra.mxu0 %v4416
    %7081 = vmatprep.subr.bf16.mxu0 %v4421
    %7082 = vmatpush1.bf16.msra.mxu0 %v4420
    %7083 = vmatprep.subr.bf16.mxu0 %v4425
    %7084 = vmatpush1.bf16.msra.mxu0 %v4424
    %7085 = vmatprep.subr.bf16.mxu0 %v4429
    %7086 = vmatpush1.bf16.msra.mxu0 %v4428
    %7087 = vmatprep.subr.bf16.mxu0 %v4433
    %7088 = vmatpush1.bf16.msra.mxu0 %v4432
    %7089 = vmatprep.subr.bf16.mxu0 %v4437
    %7090 = vmatpush1.bf16.msra.mxu0 %v4436
    %7091 = vmatprep.subr.bf16.mxu0 %v4441
    %7092 = vmatpush1.bf16.msra.mxu0 %v4440
    %7093 = vmatprep.subr.bf16.mxu0 %v4445
    %7094 = vmatpush1.bf16.msra.mxu0 %v4444
    %7095 = vmatprep.mubr.bf16.mxu0 %v1185
    %7096 = vmatmul.mubr.bf16.gmra.mrb[0].mxu0 %v1184
    %v7097 = vpop.f32.mrb[0].mxu0
    %v7098 = vadd.f32 %v7057, %v7097
    %v7099 = vpop.f32.mrb[0].mxu0
    %v7100 = vadd.f32 %v7059, %v7099
    %v7101 = vpop.f32.mrb[0].mxu0
    %v7102 = vpop.f32.mrb[0].mxu0
    %7103 = vdwg.mxu0
    %7104 = vmatprep.subr.bf16.mxu0 %v4449
    %7105 = vmatpush1.bf16.msra.mxu0 %v4448
    %7106 = vmatprep.subr.bf16.mxu0 %v4453
    %7107 = vmatpush1.bf16.msra.mxu0 %v4452
    %7108 = vmatprep.subr.bf16.mxu0 %v4457
    %7109 = vmatpush1.bf16.msra.mxu0 %v4456
    %7110 = vmatprep.subr.bf16.mxu0 %v4461
    %7111 = vmatpush1.bf16.msra.mxu0 %v4460
    %7112 = vmatprep.subr.bf16.mxu0 %v4465
    %7113 = vmatpush1.bf16.msra.mxu0 %v4464
    %7114 = vmatprep.subr.bf16.mxu0 %v4469
    %7115 = vmatpush1.bf16.msra.mxu0 %v4468
    %7116 = vmatprep.subr.bf16.mxu0 %v4473
    %7117 = vmatpush1.bf16.msra.mxu0 %v4472
    %7118 = vmatprep.subr.bf16.mxu0 %v4477
    %7119 = vmatpush1.bf16.msra.mxu0 %v4476
    %7120 = vmatprep.subr.bf16.mxu0 %v4481
    %7121 = vmatpush1.bf16.msra.mxu0 %v4480
    %7122 = vmatprep.subr.bf16.mxu0 %v4485
    %7123 = vmatpush1.bf16.msra.mxu0 %v4484
    %7124 = vmatprep.subr.bf16.mxu0 %v4489
    %7125 = vmatpush1.bf16.msra.mxu0 %v4488
    %7126 = vmatprep.subr.bf16.mxu0 %v4493
    %7127 = vmatpush1.bf16.msra.mxu0 %v4492
    %7128 = vmatprep.subr.bf16.mxu0 %v4497
    %7129 = vmatpush1.bf16.msra.mxu0 %v4496
    %7130 = vmatprep.subr.bf16.mxu0 %v4501
    %7131 = vmatpush1.bf16.msra.mxu0 %v4500
    %7132 = vmatprep.subr.bf16.mxu0 %v4505
    %7133 = vmatpush1.bf16.msra.mxu0 %v4504
    %7134 = vmatprep.subr.bf16.mxu0 %v4509
    %7135 = vmatpush1.bf16.msra.mxu0 %v4508
    %7136 = vmatprep.mubr.bf16.mxu0 %v1187
    %7137 = vmatmul.mubr.bf16.gmra.mrb[0].mxu0 %v1186
    %v7138 = vpop.f32.mrb[0].mxu0
    %v7139 = vadd.f32 %v7098, %v7138
    %v7140 = vpop.f32.mrb[0].mxu0
    %v7141 = vadd.f32 %v7100, %v7140
    %v7142 = vpop.f32.mrb[0].mxu0
    %v7143 = vpop.f32.mrb[0].mxu0
    %7144 = vdwg.mxu0
    %7145 = vmatprep.subr.bf16.mxu0 %v4513
    %7146 = vmatpush1.bf16.msra.mxu0 %v4512
    %7147 = vmatprep.subr.bf16.mxu0 %v4517
    %7148 = vmatpush1.bf16.msra.mxu0 %v4516
    %7149 = vmatprep.subr.bf16.mxu0 %v4521
    %7150 = vmatpush1.bf16.msra.mxu0 %v4520
    %7151 = vmatprep.subr.bf16.mxu0 %v4525
    %7152 = vmatpush1.bf16.msra.mxu0 %v4524
    %7153 = vmatprep.subr.bf16.mxu0 %v4529
    %7154 = vmatpush1.bf16.msra.mxu0 %v4528
    %7155 = vmatprep.subr.bf16.mxu0 %v4533
    %7156 = vmatpush1.bf16.msra.mxu0 %v4532
    %7157 = vmatprep.subr.bf16.mxu0 %v4537
    %7158 = vmatpush1.bf16.msra.mxu0 %v4536
    %7159 = vmatprep.subr.bf16.mxu0 %v4541
    %7160 = vmatpush1.bf16.msra.mxu0 %v4540
    %7161 = vmatprep.subr.bf16.mxu0 %v4545
    %7162 = vmatpush1.bf16.msra.mxu0 %v4544
    %7163 = vmatprep.subr.bf16.mxu0 %v4549
    %7164 = vmatpush1.bf16.msra.mxu0 %v4548
    %7165 = vmatprep.subr.bf16.mxu0 %v4553
    %7166 = vmatpush1.bf16.msra.mxu0 %v4552
    %7167 = vmatprep.subr.bf16.mxu0 %v4557
    %7168 = vmatpush1.bf16.msra.mxu0 %v4556
    %7169 = vmatprep.subr.bf16.mxu0 %v4561
    %7170 = vmatpush1.bf16.msra.mxu0 %v4560
    %7171 = vmatprep.subr.bf16.mxu0 %v4565
    %7172 = vmatpush1.bf16.msra.mxu0 %v4564
    %7173 = vmatprep.subr.bf16.mxu0 %v4569
    %7174 = vmatpush1.bf16.msra.mxu0 %v4568
    %7175 = vmatprep.subr.bf16.mxu0 %v4573
    %7176 = vmatpush1.bf16.msra.mxu0 %v4572
    %7177 = vmatprep.mubr.bf16.mxu0 %v1189
    %7178 = vmatmul.mubr.bf16.gmra.mrb[0].mxu0 %v1188
    %v7179 = vpop.f32.mrb[0].mxu0
    %v7180 = vadd.f32 %v7139, %v7179
    %v7181 = vpop.f32.mrb[0].mxu0
    %v7182 = vadd.f32 %v7141, %v7181
    %v7183 = vpop.f32.mrb[0].mxu0
    %v7184 = vpop.f32.mrb[0].mxu0
    %7185 = vdwg.mxu0
    %7186 = vmatprep.subr.bf16.mxu0 %v4577
    %7187 = vmatpush1.bf16.msra.mxu0 %v4576
    %7188 = vmatprep.subr.bf16.mxu0 %v4581
    %7189 = vmatpush1.bf16.msra.mxu0 %v4580
    %7190 = vmatprep.subr.bf16.mxu0 %v4585
    %7191 = vmatpush1.bf16.msra.mxu0 %v4584
    %7192 = vmatprep.subr.bf16.mxu0 %v4589
    %7193 = vmatpush1.bf16.msra.mxu0 %v4588
    %7194 = vmatprep.subr.bf16.mxu0 %v4593
    %7195 = vmatpush1.bf16.msra.mxu0 %v4592
    %7196 = vmatprep.subr.bf16.mxu0 %v4597
    %7197 = vmatpush1.bf16.msra.mxu0 %v4596
    %7198 = vmatprep.subr.bf16.mxu0 %v4601
    %7199 = vmatpush1.bf16.msra.mxu0 %v4600
    %7200 = vmatprep.subr.bf16.mxu0 %v4605
    %7201 = vmatpush1.bf16.msra.mxu0 %v4604
    %7202 = vmatprep.subr.bf16.mxu0 %v4609
    %7203 = vmatpush1.bf16.msra.mxu0 %v4608
    %7204 = vmatprep.subr.bf16.mxu0 %v4613
    %7205 = vmatpush1.bf16.msra.mxu0 %v4612
    %7206 = vmatprep.subr.bf16.mxu0 %v4617
    %7207 = vmatpush1.bf16.msra.mxu0 %v4616
    %7208 = vmatprep.subr.bf16.mxu0 %v4621
    %7209 = vmatpush1.bf16.msra.mxu0 %v4620
    %7210 = vmatprep.subr.bf16.mxu0 %v4625
    %7211 = vmatpush1.bf16.msra.mxu0 %v4624
    %7212 = vmatprep.subr.bf16.mxu0 %v4629
    %7213 = vmatpush1.bf16.msra.mxu0 %v4628
    %7214 = vmatprep.subr.bf16.mxu0 %v4633
    %7215 = vmatpush1.bf16.msra.mxu0 %v4632
    %7216 = vmatprep.subr.bf16.mxu0 %v4637
    %7217 = vmatpush1.bf16.msra.mxu0 %v4636
    %7218 = vmatprep.mubr.bf16.mxu0 %v1191
    %7219 = vmatmul.mubr.bf16.gmra.mrb[0].mxu0 %v1190
    %v7220 = vpop.f32.mrb[0].mxu0
    %v7221 = vadd.f32 %v7180, %v7220
    %v7222 = vpop.f32.mrb[0].mxu0
    %v7223 = vadd.f32 %v7182, %v7222
    %v7224 = vpop.f32.mrb[0].mxu0
    %v7225 = vpop.f32.mrb[0].mxu0
    %7226 = vdwg.mxu0
    %7227 = vmatprep.subr.bf16.mxu0 %v4641
    %7228 = vmatpush1.bf16.msra.mxu0 %v4640
    %7229 = vmatprep.subr.bf16.mxu0 %v4645
    %7230 = vmatpush1.bf16.msra.mxu0 %v4644
    %7231 = vmatprep.subr.bf16.mxu0 %v4649
    %7232 = vmatpush1.bf16.msra.mxu0 %v4648
    %7233 = vmatprep.subr.bf16.mxu0 %v4653
    %7234 = vmatpush1.bf16.msra.mxu0 %v4652
    %7235 = vmatprep.subr.bf16.mxu0 %v4657
    %7236 = vmatpush1.bf16.msra.mxu0 %v4656
    %7237 = vmatprep.subr.bf16.mxu0 %v4661
    %7238 = vmatpush1.bf16.msra.mxu0 %v4660
    %7239 = vmatprep.subr.bf16.mxu0 %v4665
    %7240 = vmatpush1.bf16.msra.mxu0 %v4664
    %7241 = vmatprep.subr.bf16.mxu0 %v4669
    %7242 = vmatpush1.bf16.msra.mxu0 %v4668
    %7243 = vmatprep.subr.bf16.mxu0 %v4673
    %7244 = vmatpush1.bf16.msra.mxu0 %v4672
    %7245 = vmatprep.subr.bf16.mxu0 %v4677
    %7246 = vmatpush1.bf16.msra.mxu0 %v4676
    %7247 = vmatprep.subr.bf16.mxu0 %v4681
    %7248 = vmatpush1.bf16.msra.mxu0 %v4680
    %7249 = vmatprep.subr.bf16.mxu0 %v4685
    %7250 = vmatpush1.bf16.msra.mxu0 %v4684
    %7251 = vmatprep.subr.bf16.mxu0 %v4689
    %7252 = vmatpush1.bf16.msra.mxu0 %v4688
    %7253 = vmatprep.subr.bf16.mxu0 %v4693
    %7254 = vmatpush1.bf16.msra.mxu0 %v4692
    %7255 = vmatprep.subr.bf16.mxu0 %v4697
    %7256 = vmatpush1.bf16.msra.mxu0 %v4696
    %7257 = vmatprep.subr.bf16.mxu0 %v4701
    %7258 = vmatpush1.bf16.msra.mxu0 %v4700
    %7259 = vmatprep.mubr.bf16.mxu0 %v1193
    %7260 = vmatmul.mubr.bf16.gmra.mrb[0].mxu0 %v1192
    %v7261 = vpop.f32.mrb[0].mxu0
    %v7262 = vadd.f32 %v7221, %v7261
    %v7263 = vpop.f32.mrb[0].mxu0
    %v7264 = vadd.f32 %v7223, %v7263
    %v7265 = vpop.f32.mrb[0].mxu0
    %v7266 = vpop.f32.mrb[0].mxu0
    %7267 = vdwg.mxu0
    %7268 = vmatprep.subr.bf16.mxu0 %v4705
    %7269 = vmatpush1.bf16.msra.mxu0 %v4704
    %7270 = vmatprep.subr.bf16.mxu0 %v4709
    %7271 = vmatpush1.bf16.msra.mxu0 %v4708
    %7272 = vmatprep.subr.bf16.mxu0 %v4713
    %7273 = vmatpush1.bf16.msra.mxu0 %v4712
    %7274 = vmatprep.subr.bf16.mxu0 %v4717
    %7275 = vmatpush1.bf16.msra.mxu0 %v4716
    %7276 = vmatprep.subr.bf16.mxu0 %v4721
    %7277 = vmatpush1.bf16.msra.mxu0 %v4720
    %7278 = vmatprep.subr.bf16.mxu0 %v4725
    %7279 = vmatpush1.bf16.msra.mxu0 %v4724
    %7280 = vmatprep.subr.bf16.mxu0 %v4729
    %7281 = vmatpush1.bf16.msra.mxu0 %v4728
    %7282 = vmatprep.subr.bf16.mxu0 %v4733
    %7283 = vmatpush1.bf16.msra.mxu0 %v4732
    %7284 = vmatprep.subr.bf16.mxu0 %v4737
    %7285 = vmatpush1.bf16.msra.mxu0 %v4736
    %7286 = vmatprep.subr.bf16.mxu0 %v4741
    %7287 = vmatpush1.bf16.msra.mxu0 %v4740
    %7288 = vmatprep.subr.bf16.mxu0 %v4745
    %7289 = vmatpush1.bf16.msra.mxu0 %v4744
    %7290 = vmatprep.subr.bf16.mxu0 %v4749
    %7291 = vmatpush1.bf16.msra.mxu0 %v4748
    %7292 = vmatprep.subr.bf16.mxu0 %v4753
    %7293 = vmatpush1.bf16.msra.mxu0 %v4752
    %7294 = vmatprep.subr.bf16.mxu0 %v4757
    %7295 = vmatpush1.bf16.msra.mxu0 %v4756
    %7296 = vmatprep.subr.bf16.mxu0 %v4761
    %7297 = vmatpush1.bf16.msra.mxu0 %v4760
    %7298 = vmatprep.subr.bf16.mxu0 %v4765
    %7299 = vmatpush1.bf16.msra.mxu0 %v4764
    %7300 = vmatprep.mubr.bf16.mxu0 %v1195
    %7301 = vmatmul.mubr.bf16.gmra.mrb[0].mxu0 %v1194
    %v7302 = vpop.f32.mrb[0].mxu0
    %v7303 = vadd.f32 %v7262, %v7302
    %v7304 = vpop.f32.mrb[0].mxu0
    %v7305 = vadd.f32 %v7264, %v7304
    %v7306 = vpop.f32.mrb[0].mxu0
    %v7307 = vpop.f32.mrb[0].mxu0
    %7308 = vdwg.mxu0
    %7309 = vmatprep.subr.bf16.mxu0 %v4769
    %7310 = vmatpush1.bf16.msra.mxu0 %v4768
    %7311 = vmatprep.subr.bf16.mxu0 %v4773
    %7312 = vmatpush1.bf16.msra.mxu0 %v4772
    %7313 = vmatprep.subr.bf16.mxu0 %v4777
    %7314 = vmatpush1.bf16.msra.mxu0 %v4776
    %7315 = vmatprep.subr.bf16.mxu0 %v4781
    %7316 = vmatpush1.bf16.msra.mxu0 %v4780
    %7317 = vmatprep.subr.bf16.mxu0 %v4785
    %7318 = vmatpush1.bf16.msra.mxu0 %v4784
    %7319 = vmatprep.subr.bf16.mxu0 %v4789
    %7320 = vmatpush1.bf16.msra.mxu0 %v4788
    %7321 = vmatprep.subr.bf16.mxu0 %v4793
    %7322 = vmatpush1.bf16.msra.mxu0 %v4792
    %7323 = vmatprep.subr.bf16.mxu0 %v4797
    %7324 = vmatpush1.bf16.msra.mxu0 %v4796
    %7325 = vmatprep.subr.bf16.mxu0 %v4801
    %7326 = vmatpush1.bf16.msra.mxu0 %v4800
    %7327 = vmatprep.subr.bf16.mxu0 %v4805
    %7328 = vmatpush1.bf16.msra.mxu0 %v4804
    %7329 = vmatprep.subr.bf16.mxu0 %v4809
    %7330 = vmatpush1.bf16.msra.mxu0 %v4808
    %7331 = vmatprep.subr.bf16.mxu0 %v4813
    %7332 = vmatpush1.bf16.msra.mxu0 %v4812
    %7333 = vmatprep.subr.bf16.mxu0 %v4817
    %7334 = vmatpush1.bf16.msra.mxu0 %v4816
    %7335 = vmatprep.subr.bf16.mxu0 %v4821
    %7336 = vmatpush1.bf16.msra.mxu0 %v4820
    %7337 = vmatprep.subr.bf16.mxu0 %v4825
    %7338 = vmatpush1.bf16.msra.mxu0 %v4824
    %7339 = vmatprep.subr.bf16.mxu0 %v4829
    %7340 = vmatpush1.bf16.msra.mxu0 %v4828
    %7341 = vmatprep.mubr.bf16.mxu0 %v1197
    %7342 = vmatmul.mubr.bf16.gmra.mrb[0].mxu0 %v1196
    %v7343 = vpop.f32.mrb[0].mxu0
    %v7344 = vadd.f32 %v7303, %v7343
    %v7345 = vpop.f32.mrb[0].mxu0
    %v7346 = vadd.f32 %v7305, %v7345
    %v7347 = vpop.f32.mrb[0].mxu0
    %v7348 = vpop.f32.mrb[0].mxu0
    %7349 = vdwg.mxu0
    %7350 = vmatprep.subr.bf16.mxu0 %v4833
    %7351 = vmatpush1.bf16.msra.mxu0 %v4832
    %7352 = vmatprep.subr.bf16.mxu0 %v4837
    %7353 = vmatpush1.bf16.msra.mxu0 %v4836
    %7354 = vmatprep.subr.bf16.mxu0 %v4841
    %7355 = vmatpush1.bf16.msra.mxu0 %v4840
    %7356 = vmatprep.subr.bf16.mxu0 %v4845
    %7357 = vmatpush1.bf16.msra.mxu0 %v4844
    %7358 = vmatprep.subr.bf16.mxu0 %v4849
    %7359 = vmatpush1.bf16.msra.mxu0 %v4848
    %7360 = vmatprep.subr.bf16.mxu0 %v4853
    %7361 = vmatpush1.bf16.msra.mxu0 %v4852
    %7362 = vmatprep.subr.bf16.mxu0 %v4857
    %7363 = vmatpush1.bf16.msra.mxu0 %v4856
    %7364 = vmatprep.subr.bf16.mxu0 %v4861
    %7365 = vmatpush1.bf16.msra.mxu0 %v4860
    %7366 = vmatprep.subr.bf16.mxu0 %v4865
    %7367 = vmatpush1.bf16.msra.mxu0 %v4864
    %7368 = vmatprep.subr.bf16.mxu0 %v4869
    %7369 = vmatpush1.bf16.msra.mxu0 %v4868
    %7370 = vmatprep.subr.bf16.mxu0 %v4873
    %7371 = vmatpush1.bf16.msra.mxu0 %v4872
    %7372 = vmatprep.subr.bf16.mxu0 %v4877
    %7373 = vmatpush1.bf16.msra.mxu0 %v4876
    %7374 = vmatprep.subr.bf16.mxu0 %v4881
    %7375 = vmatpush1.bf16.msra.mxu0 %v4880
    %7376 = vmatprep.subr.bf16.mxu0 %v4885
    %7377 = vmatpush1.bf16.msra.mxu0 %v4884
    %7378 = vmatprep.subr.bf16.mxu0 %v4889
    %7379 = vmatpush1.bf16.msra.mxu0 %v4888
    %7380 = vmatprep.subr.bf16.mxu0 %v4893
    %7381 = vmatpush1.bf16.msra.mxu0 %v4892
    %7382 = vmatprep.mubr.bf16.mxu0 %v1199
    %7383 = vmatmul.mubr.bf16.gmra.mrb[0].mxu0 %v1198
    %v7384 = vpop.f32.mrb[0].mxu0
    %v7385 = vadd.f32 %v7344, %v7384
    %v7386 = vpop.f32.mrb[0].mxu0
    %v7387 = vadd.f32 %v7346, %v7386
    %v7388 = vpop.f32.mrb[0].mxu0
    %v7389 = vpop.f32.mrb[0].mxu0
    %7390 = vdwg.mxu0
    %7391 = vmatprep.subr.bf16.mxu0 %v4897
    %7392 = vmatpush1.bf16.msra.mxu0 %v4896
    %7393 = vmatprep.subr.bf16.mxu0 %v4901
    %7394 = vmatpush1.bf16.msra.mxu0 %v4900
    %7395 = vmatprep.subr.bf16.mxu0 %v4905
    %7396 = vmatpush1.bf16.msra.mxu0 %v4904
    %7397 = vmatprep.subr.bf16.mxu0 %v4909
    %7398 = vmatpush1.bf16.msra.mxu0 %v4908
    %7399 = vmatprep.subr.bf16.mxu0 %v4913
    %7400 = vmatpush1.bf16.msra.mxu0 %v4912
    %7401 = vmatprep.subr.bf16.mxu0 %v4917
    %7402 = vmatpush1.bf16.msra.mxu0 %v4916
    %7403 = vmatprep.subr.bf16.mxu0 %v4921
    %7404 = vmatpush1.bf16.msra.mxu0 %v4920
    %7405 = vmatprep.subr.bf16.mxu0 %v4925
    %7406 = vmatpush1.bf16.msra.mxu0 %v4924
    %7407 = vmatprep.subr.bf16.mxu0 %v4929
    %7408 = vmatpush1.bf16.msra.mxu0 %v4928
    %7409 = vmatprep.subr.bf16.mxu0 %v4933
    %7410 = vmatpush1.bf16.msra.mxu0 %v4932
    %7411 = vmatprep.subr.bf16.mxu0 %v4937
    %7412 = vmatpush1.bf16.msra.mxu0 %v4936
    %7413 = vmatprep.subr.bf16.mxu0 %v4941
    %7414 = vmatpush1.bf16.msra.mxu0 %v4940
    %7415 = vmatprep.subr.bf16.mxu0 %v4945
    %7416 = vmatpush1.bf16.msra.mxu0 %v4944
    %7417 = vmatprep.subr.bf16.mxu0 %v4949
    %7418 = vmatpush1.bf16.msra.mxu0 %v4948
    %7419 = vmatprep.subr.bf16.mxu0 %v4953
    %7420 = vmatpush1.bf16.msra.mxu0 %v4952
    %7421 = vmatprep.subr.bf16.mxu0 %v4957
    %7422 = vmatpush1.bf16.msra.mxu0 %v4956
    %7423 = vmatprep.mubr.bf16.mxu0 %v1201
    %7424 = vmatmul.mubr.bf16.gmra.mrb[0].mxu0 %v1200
    %v7425 = vpop.f32.mrb[0].mxu0
    %v7426 = vadd.f32 %v7385, %v7425
    %v7427 = vpop.f32.mrb[0].mxu0
    %v7428 = vadd.f32 %v7387, %v7427
    %v7429 = vpop.f32.mrb[0].mxu0
    %v7430 = vpop.f32.mrb[0].mxu0
    %7431 = vdwg.mxu0
    %7432 = vmatprep.subr.bf16.mxu0 %v4961
    %7433 = vmatpush1.bf16.msra.mxu0 %v4960
    %7434 = vmatprep.subr.bf16.mxu0 %v4965
    %7435 = vmatpush1.bf16.msra.mxu0 %v4964
    %7436 = vmatprep.subr.bf16.mxu0 %v4969
    %7437 = vmatpush1.bf16.msra.mxu0 %v4968
    %7438 = vmatprep.subr.bf16.mxu0 %v4973
    %7439 = vmatpush1.bf16.msra.mxu0 %v4972
    %7440 = vmatprep.subr.bf16.mxu0 %v4977
    %7441 = vmatpush1.bf16.msra.mxu0 %v4976
    %7442 = vmatprep.subr.bf16.mxu0 %v4981
    %7443 = vmatpush1.bf16.msra.mxu0 %v4980
    %7444 = vmatprep.subr.bf16.mxu0 %v4985
    %7445 = vmatpush1.bf16.msra.mxu0 %v4984
    %7446 = vmatprep.subr.bf16.mxu0 %v4989
    %7447 = vmatpush1.bf16.msra.mxu0 %v4988
    %7448 = vmatprep.subr.bf16.mxu0 %v4993
    %7449 = vmatpush1.bf16.msra.mxu0 %v4992
    %7450 = vmatprep.subr.bf16.mxu0 %v4997
    %7451 = vmatpush1.bf16.msra.mxu0 %v4996
    %7452 = vmatprep.subr.bf16.mxu0 %v5001
    %7453 = vmatpush1.bf16.msra.mxu0 %v5000
    %7454 = vmatprep.subr.bf16.mxu0 %v5005
    %7455 = vmatpush1.bf16.msra.mxu0 %v5004
    %7456 = vmatprep.subr.bf16.mxu0 %v5009
    %7457 = vmatpush1.bf16.msra.mxu0 %v5008
    %7458 = vmatprep.subr.bf16.mxu0 %v5013
    %7459 = vmatpush1.bf16.msra.mxu0 %v5012
    %7460 = vmatprep.subr.bf16.mxu0 %v5017
    %7461 = vmatpush1.bf16.msra.mxu0 %v5016
    %7462 = vmatprep.subr.bf16.mxu0 %v5021
    %7463 = vmatpush1.bf16.msra.mxu0 %v5020
    %7464 = vmatprep.mubr.bf16.mxu0 %v1203
    %7465 = vmatmul.mubr.bf16.gmra.mrb[0].mxu0 %v1202
    %v7466 = vpop.f32.mrb[0].mxu0
    %v7467 = vadd.f32 %v7426, %v7466
    %v7468 = vpop.f32.mrb[0].mxu0
    %v7469 = vadd.f32 %v7428, %v7468
    %v7470 = vpop.f32.mrb[0].mxu0
    %v7471 = vpop.f32.mrb[0].mxu0
    %7472 = vdwg.mxu0
    %7473 = vmatprep.subr.bf16.mxu0 %v5025
    %7474 = vmatpush1.bf16.msra.mxu0 %v5024
    %7475 = vmatprep.subr.bf16.mxu0 %v5029
    %7476 = vmatpush1.bf16.msra.mxu0 %v5028
    %7477 = vmatprep.subr.bf16.mxu0 %v5033
    %7478 = vmatpush1.bf16.msra.mxu0 %v5032
    %7479 = vmatprep.subr.bf16.mxu0 %v5037
    %7480 = vmatpush1.bf16.msra.mxu0 %v5036
    %7481 = vmatprep.subr.bf16.mxu0 %v5041
    %7482 = vmatpush1.bf16.msra.mxu0 %v5040
    %7483 = vmatprep.subr.bf16.mxu0 %v5045
    %7484 = vmatpush1.bf16.msra.mxu0 %v5044
    %7485 = vmatprep.subr.bf16.mxu0 %v5049
    %7486 = vmatpush1.bf16.msra.mxu0 %v5048
    %7487 = vmatprep.subr.bf16.mxu0 %v5053
    %7488 = vmatpush1.bf16.msra.mxu0 %v5052
    %7489 = vmatprep.subr.bf16.mxu0 %v5057
    %7490 = vmatpush1.bf16.msra.mxu0 %v5056
    %7491 = vmatprep.subr.bf16.mxu0 %v5061
    %7492 = vmatpush1.bf16.msra.mxu0 %v5060
    %7493 = vmatprep.subr.bf16.mxu0 %v5065
    %7494 = vmatpush1.bf16.msra.mxu0 %v5064
    %7495 = vmatprep.subr.bf16.mxu0 %v5069
    %7496 = vmatpush1.bf16.msra.mxu0 %v5068
    %7497 = vmatprep.subr.bf16.mxu0 %v5073
    %7498 = vmatpush1.bf16.msra.mxu0 %v5072
    %7499 = vmatprep.subr.bf16.mxu0 %v5077
    %7500 = vmatpush1.bf16.msra.mxu0 %v5076
    %7501 = vmatprep.subr.bf16.mxu0 %v5081
    %7502 = vmatpush1.bf16.msra.mxu0 %v5080
    %7503 = vmatprep.subr.bf16.mxu0 %v5085
    %7504 = vmatpush1.bf16.msra.mxu0 %v5084
    %7505 = vmatprep.mubr.bf16.mxu0 %v1205
    %7506 = vmatmul.mubr.bf16.gmra.mrb[0].mxu0 %v1204
    %v7507 = vpop.f32.mrb[0].mxu0
    %v7508 = vadd.f32 %v7467, %v7507
    %v7509 = vpop.f32.mrb[0].mxu0
    %v7510 = vadd.f32 %v7469, %v7509
    %v7511 = vpop.f32.mrb[0].mxu0
    %v7512 = vpop.f32.mrb[0].mxu0
    %7513 = vdwg.mxu0
    %7514 = vmatprep.subr.bf16.mxu0 %v5089
    %7515 = vmatpush1.bf16.msra.mxu0 %v5088
    %7516 = vmatprep.subr.bf16.mxu0 %v5093
    %7517 = vmatpush1.bf16.msra.mxu0 %v5092
    %7518 = vmatprep.subr.bf16.mxu0 %v5097
    %7519 = vmatpush1.bf16.msra.mxu0 %v5096
    %7520 = vmatprep.subr.bf16.mxu0 %v5101
    %7521 = vmatpush1.bf16.msra.mxu0 %v5100
    %7522 = vmatprep.subr.bf16.mxu0 %v5105
    %7523 = vmatpush1.bf16.msra.mxu0 %v5104
    %7524 = vmatprep.subr.bf16.mxu0 %v5109
    %7525 = vmatpush1.bf16.msra.mxu0 %v5108
    %7526 = vmatprep.subr.bf16.mxu0 %v5113
    %7527 = vmatpush1.bf16.msra.mxu0 %v5112
    %7528 = vmatprep.subr.bf16.mxu0 %v5117
    %7529 = vmatpush1.bf16.msra.mxu0 %v5116
    %7530 = vmatprep.subr.bf16.mxu0 %v5121
    %7531 = vmatpush1.bf16.msra.mxu0 %v5120
    %7532 = vmatprep.subr.bf16.mxu0 %v5125
    %7533 = vmatpush1.bf16.msra.mxu0 %v5124
    %7534 = vmatprep.subr.bf16.mxu0 %v5129
    %7535 = vmatpush1.bf16.msra.mxu0 %v5128
    %7536 = vmatprep.subr.bf16.mxu0 %v5133
    %7537 = vmatpush1.bf16.msra.mxu0 %v5132
    %7538 = vmatprep.subr.bf16.mxu0 %v5137
    %7539 = vmatpush1.bf16.msra.mxu0 %v5136
    %7540 = vmatprep.subr.bf16.mxu0 %v5141
    %7541 = vmatpush1.bf16.msra.mxu0 %v5140
    %7542 = vmatprep.subr.bf16.mxu0 %v5145
    %7543 = vmatpush1.bf16.msra.mxu0 %v5144
    %7544 = vmatprep.subr.bf16.mxu0 %v5149
    %7545 = vmatpush1.bf16.msra.mxu0 %v5148
    %7546 = vmatprep.mubr.bf16.mxu0 %v1207
    %7547 = vmatmul.mubr.bf16.gmra.mrb[0].mxu0 %v1206
    %v7548 = vpop.f32.mrb[0].mxu0
    %v7549 = vadd.f32 %v7508, %v7548
    %v7550 = vpop.f32.mrb[0].mxu0
    %v7551 = vadd.f32 %v7510, %v7550
    %v7552 = vpop.f32.mrb[0].mxu0
    %v7553 = vpop.f32.mrb[0].mxu0
    %7554 = vdwg.mxu0
    %7555 = vmatprep.subr.bf16.mxu0 %v5153
    %7556 = vmatpush1.bf16.msra.mxu0 %v5152
    %7557 = vmatprep.subr.bf16.mxu0 %v5157
    %7558 = vmatpush1.bf16.msra.mxu0 %v5156
    %7559 = vmatprep.subr.bf16.mxu0 %v5161
    %7560 = vmatpush1.bf16.msra.mxu0 %v5160
    %7561 = vmatprep.subr.bf16.mxu0 %v5165
    %7562 = vmatpush1.bf16.msra.mxu0 %v5164
    %7563 = vmatprep.subr.bf16.mxu0 %v5169
    %7564 = vmatpush1.bf16.msra.mxu0 %v5168
    %7565 = vmatprep.subr.bf16.mxu0 %v5173
    %7566 = vmatpush1.bf16.msra.mxu0 %v5172
    %7567 = vmatprep.subr.bf16.mxu0 %v5177
    %7568 = vmatpush1.bf16.msra.mxu0 %v5176
    %7569 = vmatprep.subr.bf16.mxu0 %v5181
    %7570 = vmatpush1.bf16.msra.mxu0 %v5180
    %7571 = vmatprep.subr.bf16.mxu0 %v5185
    %7572 = vmatpush1.bf16.msra.mxu0 %v5184
    %7573 = vmatprep.subr.bf16.mxu0 %v5189
    %7574 = vmatpush1.bf16.msra.mxu0 %v5188
    %7575 = vmatprep.subr.bf16.mxu0 %v5193
    %7576 = vmatpush1.bf16.msra.mxu0 %v5192
    %7577 = vmatprep.subr.bf16.mxu0 %v5197
    %7578 = vmatpush1.bf16.msra.mxu0 %v5196
    %7579 = vmatprep.subr.bf16.mxu0 %v5201
    %7580 = vmatpush1.bf16.msra.mxu0 %v5200
    %7581 = vmatprep.subr.bf16.mxu0 %v5205
    %7582 = vmatpush1.bf16.msra.mxu0 %v5204
    %7583 = vmatprep.subr.bf16.mxu0 %v5209
    %7584 = vmatpush1.bf16.msra.mxu0 %v5208
    %7585 = vmatprep.subr.bf16.mxu0 %v5213
    %7586 = vmatpush1.bf16.msra.mxu0 %v5212
    %7587 = vmatprep.mubr.bf16.mxu0 %v1209
    %7588 = vmatmul.mubr.bf16.gmra.mrb[0].mxu0 %v1208
    %v7589 = vpop.f32.mrb[0].mxu0
    %v7590 = vadd.f32 %v7549, %v7589
    %v7591 = vpop.f32.mrb[0].mxu0
    %v7592 = vadd.f32 %v7551, %v7591
    %v7593 = vpop.f32.mrb[0].mxu0
    %v7594 = vpop.f32.mrb[0].mxu0
    %7595 = vdwg.mxu0
    %7596 = vmatprep.subr.bf16.mxu0 %v5217
    %7597 = vmatpush1.bf16.msra.mxu0 %v5216
    %7598 = vmatprep.subr.bf16.mxu0 %v5221
    %7599 = vmatpush1.bf16.msra.mxu0 %v5220
    %7600 = vmatprep.subr.bf16.mxu0 %v5225
    %7601 = vmatpush1.bf16.msra.mxu0 %v5224
    %7602 = vmatprep.subr.bf16.mxu0 %v5229
    %7603 = vmatpush1.bf16.msra.mxu0 %v5228
    %7604 = vmatprep.subr.bf16.mxu0 %v5233
    %7605 = vmatpush1.bf16.msra.mxu0 %v5232
    %7606 = vmatprep.subr.bf16.mxu0 %v5237
    %7607 = vmatpush1.bf16.msra.mxu0 %v5236
    %7608 = vmatprep.subr.bf16.mxu0 %v5241
    %7609 = vmatpush1.bf16.msra.mxu0 %v5240
    %7610 = vmatprep.subr.bf16.mxu0 %v5245
    %7611 = vmatpush1.bf16.msra.mxu0 %v5244
    %7612 = vmatprep.subr.bf16.mxu0 %v5249
    %7613 = vmatpush1.bf16.msra.mxu0 %v5248
    %7614 = vmatprep.subr.bf16.mxu0 %v5253
    %7615 = vmatpush1.bf16.msra.mxu0 %v5252
    %7616 = vmatprep.subr.bf16.mxu0 %v5257
    %7617 = vmatpush1.bf16.msra.mxu0 %v5256
    %7618 = vmatprep.subr.bf16.mxu0 %v5261
    %7619 = vmatpush1.bf16.msra.mxu0 %v5260
    %7620 = vmatprep.subr.bf16.mxu0 %v5265
    %7621 = vmatpush1.bf16.msra.mxu0 %v5264
    %7622 = vmatprep.subr.bf16.mxu0 %v5269
    %7623 = vmatpush1.bf16.msra.mxu0 %v5268
    %7624 = vmatprep.subr.bf16.mxu0 %v5273
    %7625 = vmatpush1.bf16.msra.mxu0 %v5272
    %7626 = vmatprep.subr.bf16.mxu0 %v5277
    %7627 = vmatpush1.bf16.msra.mxu0 %v5276
    %7628 = vmatprep.mubr.bf16.mxu0 %v1211
    %7629 = vmatmul.mubr.bf16.gmra.mrb[0].mxu0 %v1210
    %v7630 = vpop.f32.mrb[0].mxu0
    %v7631 = vadd.f32 %v7590, %v7630
    %v7632 = vpop.f32.mrb[0].mxu0
    %v7633 = vadd.f32 %v7592, %v7632
    %v7634 = vpop.f32.mrb[0].mxu0
    %v7635 = vpop.f32.mrb[0].mxu0
    %7636 = vdwg.mxu0
    %7637 = vmatprep.subr.bf16.mxu0 %v5281
    %7638 = vmatpush1.bf16.msra.mxu0 %v5280
    %7639 = vmatprep.subr.bf16.mxu0 %v5285
    %7640 = vmatpush1.bf16.msra.mxu0 %v5284
    %7641 = vmatprep.subr.bf16.mxu0 %v5289
    %7642 = vmatpush1.bf16.msra.mxu0 %v5288
    %7643 = vmatprep.subr.bf16.mxu0 %v5293
    %7644 = vmatpush1.bf16.msra.mxu0 %v5292
    %7645 = vmatprep.subr.bf16.mxu0 %v5297
    %7646 = vmatpush1.bf16.msra.mxu0 %v5296
    %7647 = vmatprep.subr.bf16.mxu0 %v5301
    %7648 = vmatpush1.bf16.msra.mxu0 %v5300
    %7649 = vmatprep.subr.bf16.mxu0 %v5305
    %7650 = vmatpush1.bf16.msra.mxu0 %v5304
    %7651 = vmatprep.subr.bf16.mxu0 %v5309
    %7652 = vmatpush1.bf16.msra.mxu0 %v5308
    %7653 = vmatprep.subr.bf16.mxu0 %v5313
    %7654 = vmatpush1.bf16.msra.mxu0 %v5312
    %7655 = vmatprep.subr.bf16.mxu0 %v5317
    %7656 = vmatpush1.bf16.msra.mxu0 %v5316
    %7657 = vmatprep.subr.bf16.mxu0 %v5321
    %7658 = vmatpush1.bf16.msra.mxu0 %v5320
    %7659 = vmatprep.subr.bf16.mxu0 %v5325
    %7660 = vmatpush1.bf16.msra.mxu0 %v5324
    %7661 = vmatprep.subr.bf16.mxu0 %v5329
    %7662 = vmatpush1.bf16.msra.mxu0 %v5328
    %7663 = vmatprep.subr.bf16.mxu0 %v5333
    %7664 = vmatpush1.bf16.msra.mxu0 %v5332
    %7665 = vmatprep.subr.bf16.mxu0 %v5337
    %7666 = vmatpush1.bf16.msra.mxu0 %v5336
    %7667 = vmatprep.subr.bf16.mxu0 %v5341
    %7668 = vmatpush1.bf16.msra.mxu0 %v5340
    %7669 = vmatprep.mubr.bf16.mxu0 %v1213
    %7670 = vmatmul.mubr.bf16.gmra.mrb[0].mxu0 %v1212
    %v7671 = vpop.f32.mrb[0].mxu0
    %v7672 = vadd.f32 %v7631, %v7671
    %v7673 = vpop.f32.mrb[0].mxu0
    %v7674 = vadd.f32 %v7633, %v7673
    %v7675 = vpop.f32.mrb[0].mxu0
    %v7676 = vpop.f32.mrb[0].mxu0
    %7677 = vdwg.mxu0
    %v7678 = vmax.f32 %v7016, 0.0
    %v7679 = vmax.f32 %v7018, 0.0
    %v7680 = vmax.f32 %v7672, 0.0
    %v7681 = vmax.f32 %v7674, 0.0
    %v7682 = vpack.c.bf16 %v7678, %v7678
    %v7683 = vpack.c.bf16 %v7679, %v7679
    %v7684 = vpack.c.bf16 %v7680, %v7680
    %v7685 = vpack.c.bf16 %v7681, %v7681
    %v7686 = vld [vmem:[#allocation6] sm:$0xf]
    %v7687 = vld [vmem:[#allocation6 + $0x4] sm:$0xf]
    %v7688 = vld [vmem:[#allocation6 + $0x8] sm:$0xf]
    %v7689 = vld [vmem:[#allocation6 + $0xc] sm:$0xf]
    %v7690 = vld [vmem:[#allocation6 + $0x10] sm:$0xf]
    %v7691 = vld [vmem:[#allocation6 + $0x14] sm:$0xf]
    %v7692 = vld [vmem:[#allocation6 + $0x18] sm:$0xf]
    %v7693 = vld [vmem:[#allocation6 + $0x1c] sm:$0xf]
    %v7694 = vld [vmem:[#allocation6 + $0x20] sm:$0xf]
    %v7695 = vld [vmem:[#allocation6 + $0x24] sm:$0xf]
    %v7696 = vld [vmem:[#allocation6 + $0x28] sm:$0xf]
    %v7697 = vld [vmem:[#allocation6 + $0x2c] sm:$0xf]
    %v7698 = vld [vmem:[#allocation6 + $0x30] sm:$0xf]
    %v7699 = vld [vmem:[#allocation6 + $0x34] sm:$0xf]
    %v7700 = vld [vmem:[#allocation6 + $0x38] sm:$0xf]
    %v7701 = vld [vmem:[#allocation6 + $0x3c] sm:$0xf]
    %v7702 = vld [vmem:[#allocation6 + $0x40] sm:$0xf]
    %v7703 = vld [vmem:[#allocation6 + $0x44] sm:$0xf]
    %v7704 = vld [vmem:[#allocation6 + $0x48] sm:$0xf]
    %v7705 = vld [vmem:[#allocation6 + $0x4c] sm:$0xf]
    %v7706 = vld [vmem:[#allocation6 + $0x50] sm:$0xf]
    %v7707 = vld [vmem:[#allocation6 + $0x54] sm:$0xf]
    %v7708 = vld [vmem:[#allocation6 + $0x58] sm:$0xf]
    %v7709 = vld [vmem:[#allocation6 + $0x5c] sm:$0xf]
    %v7710 = vld [vmem:[#allocation6 + $0x60] sm:$0xf]
    %v7711 = vld [vmem:[#allocation6 + $0x64] sm:$0xf]
    %v7712 = vld [vmem:[#allocation6 + $0x68] sm:$0xf]
    %v7713 = vld [vmem:[#allocation6 + $0x6c] sm:$0xf]
    %v7714 = vld [vmem:[#allocation6 + $0x70] sm:$0xf]
    %v7715 = vld [vmem:[#allocation6 + $0x74] sm:$0xf]
    %v7716 = vld [vmem:[#allocation6 + $0x78] sm:$0xf]
    %v7717 = vld [vmem:[#allocation6 + $0x7c] sm:$0xf]
    %v7718 = vld [vmem:[#allocation6 + $0x80] sm:$0xf]
    %v7719 = vld [vmem:[#allocation6 + $0x84] sm:$0xf]
    %v7720 = vld [vmem:[#allocation6 + $0x88] sm:$0xf]
    %v7721 = vld [vmem:[#allocation6 + $0x8c] sm:$0xf]
    %v7722 = vld [vmem:[#allocation6 + $0x90] sm:$0xf]
    %v7723 = vld [vmem:[#allocation6 + $0x94] sm:$0xf]
    %v7724 = vld [vmem:[#allocation6 + $0x98] sm:$0xf]
    %v7725 = vld [vmem:[#allocation6 + $0x9c] sm:$0xf]
    %v7726 = vld [vmem:[#allocation6 + $0xa0] sm:$0xf]
    %v7727 = vld [vmem:[#allocation6 + $0xa4] sm:$0xf]
    %v7728 = vld [vmem:[#allocation6 + $0xa8] sm:$0xf]
    %v7729 = vld [vmem:[#allocation6 + $0xac] sm:$0xf]
    %v7730 = vld [vmem:[#allocation6 + $0xb0] sm:$0xf]
    %v7731 = vld [vmem:[#allocation6 + $0xb4] sm:$0xf]
    %v7732 = vld [vmem:[#allocation6 + $0xb8] sm:$0xf]
    %v7733 = vld [vmem:[#allocation6 + $0xbc] sm:$0xf]
    %v7734 = vld [vmem:[#allocation6 + $0xc0] sm:$0xf]
    %v7735 = vld [vmem:[#allocation6 + $0xc4] sm:$0xf]
    %v7736 = vld [vmem:[#allocation6 + $0xc8] sm:$0xf]
    %v7737 = vld [vmem:[#allocation6 + $0xcc] sm:$0xf]
    %v7738 = vld [vmem:[#allocation6 + $0xd0] sm:$0xf]
    %v7739 = vld [vmem:[#allocation6 + $0xd4] sm:$0xf]
    %v7740 = vld [vmem:[#allocation6 + $0xd8] sm:$0xf]
    %v7741 = vld [vmem:[#allocation6 + $0xdc] sm:$0xf]
    %v7742 = vld [vmem:[#allocation6 + $0xe0] sm:$0xf]
    %v7743 = vld [vmem:[#allocation6 + $0xe4] sm:$0xf]
    %v7744 = vld [vmem:[#allocation6 + $0xe8] sm:$0xf]
    %v7745 = vld [vmem:[#allocation6 + $0xec] sm:$0xf]
    %v7746 = vld [vmem:[#allocation6 + $0xf0] sm:$0xf]
    %v7747 = vld [vmem:[#allocation6 + $0xf4] sm:$0xf]
    %v7748 = vld [vmem:[#allocation6 + $0xf8] sm:$0xf]
    %v7749 = vld [vmem:[#allocation6 + $0xfc] sm:$0xf]
    %v7750 = vld [vmem:[#allocation7] sm:$0x1]
    %v7752 = vlaneseq
    %v7753 = vshrl.u32 %v7752, 7
    %v7754 = vsub.s32 0, %v7753
    %v7755 = vrot.slane %v7750, %v7754
    %v7821 = vunpack.c.l.b16 %v7686
    %v7822 = vunpack.c.l.b16 %v7687
    %v7823 = vunpack.c.l.b16 %v7688
    %v7824 = vunpack.c.l.b16 %v7689
    %v7825 = vunpack.c.l.b16 %v7690
    %v7826 = vunpack.c.l.b16 %v7691
    %v7827 = vunpack.c.l.b16 %v7692
    %v7828 = vunpack.c.l.b16 %v7693
    %v7829 = vunpack.c.l.b16 %v7694
    %v7830 = vunpack.c.l.b16 %v7695
    %v7831 = vunpack.c.l.b16 %v7696
    %v7832 = vunpack.c.l.b16 %v7697
    %v7833 = vunpack.c.l.b16 %v7698
    %v7834 = vunpack.c.l.b16 %v7699
    %v7835 = vunpack.c.l.b16 %v7700
    %v7836 = vunpack.c.l.b16 %v7701
    %v7837 = vunpack.c.l.b16 %v7702
    %v7838 = vunpack.c.l.b16 %v7703
    %v7839 = vunpack.c.l.b16 %v7704
    %v7840 = vunpack.c.l.b16 %v7705
    %v7841 = vunpack.c.l.b16 %v7706
    %v7842 = vunpack.c.l.b16 %v7707
    %v7843 = vunpack.c.l.b16 %v7708
    %v7844 = vunpack.c.l.b16 %v7709
    %v7845 = vunpack.c.l.b16 %v7710
    %v7846 = vunpack.c.l.b16 %v7711
    %v7847 = vunpack.c.l.b16 %v7712
    %v7848 = vunpack.c.l.b16 %v7713
    %v7849 = vunpack.c.l.b16 %v7714
    %v7850 = vunpack.c.l.b16 %v7715
    %v7851 = vunpack.c.l.b16 %v7716
    %v7852 = vunpack.c.l.b16 %v7717
    %v7853 = vunpack.c.l.b16 %v7718
    %v7854 = vunpack.c.l.b16 %v7719
    %v7855 = vunpack.c.l.b16 %v7720
    %v7856 = vunpack.c.l.b16 %v7721
    %v7857 = vunpack.c.l.b16 %v7722
    %v7858 = vunpack.c.l.b16 %v7723
    %v7859 = vunpack.c.l.b16 %v7724
    %v7860 = vunpack.c.l.b16 %v7725
    %v7861 = vunpack.c.l.b16 %v7726
    %v7862 = vunpack.c.l.b16 %v7727
    %v7863 = vunpack.c.l.b16 %v7728
    %v7864 = vunpack.c.l.b16 %v7729
    %v7865 = vunpack.c.l.b16 %v7730
    %v7866 = vunpack.c.l.b16 %v7731
    %v7867 = vunpack.c.l.b16 %v7732
    %v7868 = vunpack.c.l.b16 %v7733
    %v7869 = vunpack.c.l.b16 %v7734
    %v7870 = vunpack.c.l.b16 %v7735
    %v7871 = vunpack.c.l.b16 %v7736
    %v7872 = vunpack.c.l.b16 %v7737
    %v7873 = vunpack.c.l.b16 %v7738
    %v7874 = vunpack.c.l.b16 %v7739
    %v7875 = vunpack.c.l.b16 %v7740
    %v7876 = vunpack.c.l.b16 %v7741
    %v7877 = vunpack.c.l.b16 %v7742
    %v7878 = vunpack.c.l.b16 %v7743
    %v7879 = vunpack.c.l.b16 %v7744
    %v7880 = vunpack.c.l.b16 %v7745
    %v7881 = vunpack.c.l.b16 %v7746
    %v7882 = vunpack.c.l.b16 %v7747
    %v7883 = vunpack.c.l.b16 %v7748
    %v7884 = vunpack.c.l.b16 %v7749
    %v7885 = vpack.c.b16 %v7822, %v7821
    %v7886 = vpack.c.b16 %v7824, %v7823
    %v7887 = vpack.c.b16 %v7826, %v7825
    %v7888 = vpack.c.b16 %v7828, %v7827
    %v7889 = vpack.c.b16 %v7830, %v7829
    %v7890 = vpack.c.b16 %v7832, %v7831
    %v7891 = vpack.c.b16 %v7834, %v7833
    %v7892 = vpack.c.b16 %v7836, %v7835
    %v7893 = vpack.c.b16 %v7838, %v7837
    %v7894 = vpack.c.b16 %v7840, %v7839
    %v7895 = vpack.c.b16 %v7842, %v7841
    %v7896 = vpack.c.b16 %v7844, %v7843
    %v7897 = vpack.c.b16 %v7846, %v7845
    %v7898 = vpack.c.b16 %v7848, %v7847
    %v7899 = vpack.c.b16 %v7850, %v7849
    %v7900 = vpack.c.b16 %v7852, %v7851
    %v7901 = vpack.c.b16 %v7854, %v7853
    %v7902 = vpack.c.b16 %v7856, %v7855
    %v7903 = vpack.c.b16 %v7858, %v7857
    %v7904 = vpack.c.b16 %v7860, %v7859
    %v7905 = vpack.c.b16 %v7862, %v7861
    %v7906 = vpack.c.b16 %v7864, %v7863
    %v7907 = vpack.c.b16 %v7866, %v7865
    %v7908 = vpack.c.b16 %v7868, %v7867
    %v7909 = vpack.c.b16 %v7870, %v7869
    %v7910 = vpack.c.b16 %v7872, %v7871
    %v7911 = vpack.c.b16 %v7874, %v7873
    %v7912 = vpack.c.b16 %v7876, %v7875
    %v7913 = vpack.c.b16 %v7878, %v7877
    %v7914 = vpack.c.b16 %v7880, %v7879
    %v7915 = vpack.c.b16 %v7882, %v7881
    %v7916 = vpack.c.b16 %v7884, %v7883
    %7949 = vmatprep.subr.bf16.mxu0 0
    %7950 = vmatpush1.bf16.msra.mxu0 %v7885
    %7951 = vmatprep.subr.bf16.mxu0 0
    %7952 = vmatpush1.bf16.msra.mxu0 %v7886
    %7953 = vmatprep.subr.bf16.mxu0 0
    %7954 = vmatpush1.bf16.msra.mxu0 %v7887
    %7955 = vmatprep.subr.bf16.mxu0 0
    %7956 = vmatpush1.bf16.msra.mxu0 %v7888
    %7957 = vmatprep.subr.bf16.mxu0 0
    %7958 = vmatpush1.bf16.msra.mxu0 %v7889
    %7959 = vmatprep.subr.bf16.mxu0 0
    %7960 = vmatpush1.bf16.msra.mxu0 %v7890
    %7961 = vmatprep.subr.bf16.mxu0 0
    %7962 = vmatpush1.bf16.msra.mxu0 %v7891
    %7963 = vmatprep.subr.bf16.mxu0 0
    %7964 = vmatpush1.bf16.msra.mxu0 %v7892
    %7965 = vmatprep.subr.bf16.mxu0 0
    %7966 = vmatpush1.bf16.msra.mxu0 %v7893
    %7967 = vmatprep.subr.bf16.mxu0 0
    %7968 = vmatpush1.bf16.msra.mxu0 %v7894
    %7969 = vmatprep.subr.bf16.mxu0 0
    %7970 = vmatpush1.bf16.msra.mxu0 %v7895
    %7971 = vmatprep.subr.bf16.mxu0 0
    %7972 = vmatpush1.bf16.msra.mxu0 %v7896
    %7973 = vmatprep.subr.bf16.mxu0 0
    %7974 = vmatpush1.bf16.msra.mxu0 %v7897
    %7975 = vmatprep.subr.bf16.mxu0 0
    %7976 = vmatpush1.bf16.msra.mxu0 %v7898
    %7977 = vmatprep.subr.bf16.mxu0 0
    %7978 = vmatpush1.bf16.msra.mxu0 %v7899
    %7979 = vmatprep.subr.bf16.mxu0 0
    %7980 = vmatpush1.bf16.msra.mxu0 %v7900
    %7981 = vmatprep.mubr.bf16.mxu0 %v7683
    %7982 = vmatmul.mubr.bf16.gmra.mrb[0].mxu0 %v7682
    %v7983 = vpop.f32.mrb[0].mxu0
    %v7984 = vadd.f32 %v7755, %v7983
    %v7985 = vpop.f32.mrb[0].mxu0
    %v7986 = vpop.f32.mrb[0].mxu0
    %v7987 = vpop.f32.mrb[0].mxu0
    %7988 = vdwg.mxu0
    %7989 = vmatprep.subr.bf16.mxu0 0
    %7990 = vmatpush1.bf16.msra.mxu0 %v7901
    %7991 = vmatprep.subr.bf16.mxu0 0
    %7992 = vmatpush1.bf16.msra.mxu0 %v7902
    %7993 = vmatprep.subr.bf16.mxu0 0
    %7994 = vmatpush1.bf16.msra.mxu0 %v7903
    %7995 = vmatprep.subr.bf16.mxu0 0
    %7996 = vmatpush1.bf16.msra.mxu0 %v7904
    %7997 = vmatprep.subr.bf16.mxu0 0
    %7998 = vmatpush1.bf16.msra.mxu0 %v7905
    %7999 = vmatprep.subr.bf16.mxu0 0
    %8000 = vmatpush1.bf16.msra.mxu0 %v7906
    %8001 = vmatprep.subr.bf16.mxu0 0
    %8002 = vmatpush1.bf16.msra.mxu0 %v7907
    %8003 = vmatprep.subr.bf16.mxu0 0
    %8004 = vmatpush1.bf16.msra.mxu0 %v7908
    %8005 = vmatprep.subr.bf16.mxu0 0
    %8006 = vmatpush1.bf16.msra.mxu0 %v7909
    %8007 = vmatprep.subr.bf16.mxu0 0
    %8008 = vmatpush1.bf16.msra.mxu0 %v7910
    %8009 = vmatprep.subr.bf16.mxu0 0
    %8010 = vmatpush1.bf16.msra.mxu0 %v7911
    %8011 = vmatprep.subr.bf16.mxu0 0
    %8012 = vmatpush1.bf16.msra.mxu0 %v7912
    %8013 = vmatprep.subr.bf16.mxu0 0
    %8014 = vmatpush1.bf16.msra.mxu0 %v7913
    %8015 = vmatprep.subr.bf16.mxu0 0
    %8016 = vmatpush1.bf16.msra.mxu0 %v7914
    %8017 = vmatprep.subr.bf16.mxu0 0
    %8018 = vmatpush1.bf16.msra.mxu0 %v7915
    %8019 = vmatprep.subr.bf16.mxu0 0
    %8020 = vmatpush1.bf16.msra.mxu0 %v7916
    %8021 = vmatprep.mubr.bf16.mxu0 %v7685
    %8022 = vmatmul.mubr.bf16.gmra.mrb[0].mxu0 %v7684
    %v8023 = vpop.f32.mrb[0].mxu0
    %v8024 = vadd.f32 %v7984, %v8023
    %v8025 = vpop.f32.mrb[0].mxu0
    %v8026 = vpop.f32.mrb[0].mxu0
    %v8027 = vpop.f32.mrb[0].mxu0
    %8028 = vdwg.mxu0
    %8029 = vst [vmem:[%s5] sm:$0xff] %v8024
    // Predicated region
    $region38: #{ffnet_forward.1} parent=1 // pred_check
      _
    $region39: #{ffnet_forward.1} parent=1 // pred_check_branch
      %8031 = sbr.rel (0) target = $region41
    $region40: #{ffnet_forward.1} parent=1 // pred_region
      _
    $region41: #{ffnet_forward.1} parent=1 // pred_fallthru
      _
    // Predicated region
    $region42: #{ffnet_forward.1} parent=1 // pred_check
      _
    $region43: #{ffnet_forward.1} parent=1 // pred_check_branch
      %8033 = sbr.rel (0) target = $region45
    $region44: #{ffnet_forward.1} parent=1 // pred_region
      _
    $region45: #{ffnet_forward.1} parent=1 // pred_fallthru
      _
    %8034 = vsyncpa [#allocation3], 1
    %8035 = vsyncpa [#allocation5], 1
    %8036 = vsyncpa [#allocation8], 1

</llo_original>
